<compile_context>
chip_gen: v7x
topology: tpu7x:2x2x1
jax: 0.10.0
libtpu: 0.0.40
codegen_flags: <defaults>
</compile_context>

<pallas_src>
import functools
import math

import jax
import jax.numpy as jnp
from jax import lax
from jax.experimental import pallas as pl
from jax.experimental.pallas import tpu as pltpu

_LN_EPS = 1e-6                         # torchvision ViT LayerNorm eps
_VMEM_FULL = pl.BlockSpec(memory_space=pltpu.MemorySpace.VMEM)


def _pick_vmem_limit():
    """Generation-aware VMEM budget: ~100 MiB on v5e/v6e (128 MiB physical),
    48 MiB on v7x (64 MiB physical) or when the capacity cannot be queried."""
    try:
        cap = getattr(pltpu.get_tpu_info(), "vmem_capacity_bytes", None)
    except Exception:
        cap = None
    if cap is not None and cap >= 128 * 1024 * 1024:
        return 100 * 1024 * 1024
    return 48 * 1024 * 1024


_VMEM_LIMIT = _pick_vmem_limit()


# ------------------------------ Pallas kernels ------------------------------

def _embed_kernel(p_ref, w_ref, add_ref, o_ref):
    """Patch-embedding matmul + fused additive term, one image per grid step.

    p_ref rows are [zero row reserved for cls | flattened patches | zero pad],
    add_ref rows are [cls + pos0 | conv_bias + pos1.. | zeros], so one matmul,
    one add and one full-tile store produce the padded (S, D) token sequence.
    """
    tok = jnp.dot(p_ref[...], w_ref[...], preferred_element_type=jnp.float32)
    o_ref[...] = (tok + add_ref[...]).astype(o_ref.dtype)


def _encoder_stack_kernel(x_ref,
                          ln1_g_ref, ln1_b_ref,
                          q_w_ref, q_b_ref, k_w_ref, k_b_ref, v_w_ref, v_b_ref,
                          out_w_ref, out_b_ref,
                          ln2_g_ref, ln2_b_ref,
                          fc1_w_ref, fc1_b_ref, fc2_w_ref, fc2_b_ref,
                          o_ref, x_scr, *, heads, n_valid, eps):
    """One pre-LN transformer encoder layer.

    The grid is (batch, layer) with layer as the inner "arbitrary" axis, so the
    f32 residual stays in the VMEM scratch across all layers of an image while
    the pipeline prefetches the next layer's (stacked) weights.
    """
    layer = pl.program_id(1)

    @pl.when(layer == 0)
    def _():
        x_scr[...] = x_ref[...].astype(jnp.float32)

    x = x_scr[...]                                      # (S, D) f32 residual
    S, D = x.shape
    dh = D // heads
    scale = 1.0 / math.sqrt(dh)

    def layernorm(z, g_ref, b_ref):
        mean = jnp.mean(z, axis=-1, keepdims=True)
        var = jnp.mean((z - mean) ** 2, axis=-1, keepdims=True)
        zn = (z - mean) * lax.rsqrt(var + eps)
        return zn * g_ref[...] + b_ref[...]

    # ---- multi-head self attention (pre-LN), head-batched ------------------
    y = layernorm(x, ln1_g_ref, ln1_b_ref).astype(jnp.bfloat16)        # (S, D)
    yb = jnp.broadcast_to(y, (heads, S, D))             # heads as leading batch
    # scale folded into q (cheaper: (H,S,dh) instead of (H,S,S) multiply)
    q = ((jnp.einsum('hsd,hdf->hsf', yb, q_w_ref[...],
                     preferred_element_type=jnp.float32)
          + q_b_ref[...]) * scale).astype(jnp.bfloat16)                # (H,S,dh)
    k = (jnp.einsum('hsd,hdf->hsf', yb, k_w_ref[...],
                    preferred_element_type=jnp.float32)
         + k_b_ref[...]).astype(jnp.bfloat16)
    v = (jnp.einsum('hsd,hdf->hsf', yb, v_w_ref[...],
                    preferred_element_type=jnp.float32)
         + v_b_ref[...]).astype(jnp.bfloat16)

    s = jnp.einsum('hqd,hkd->hqk', q, k,
                   preferred_element_type=jnp.float32)                 # (H,S,S)
    # mask padded key columns so sequence padding never leaks into real tokens
    key_ok = lax.broadcasted_iota(jnp.int32, (1, 1, S), 2) < n_valid
    s = jnp.where(key_ok, s, -1e30)
    s = s - jnp.max(s, axis=-1, keepdims=True)
    p = jnp.exp(s)
    p = p * pl.reciprocal(jnp.sum(p, axis=-1, keepdims=True), approx=True)
    o_h = jnp.einsum('hqk,hkd->hqd', p.astype(jnp.bfloat16), v,
                     preferred_element_type=jnp.float32)               # (H,S,dh)
    o_h = o_h.astype(jnp.bfloat16)
    # head merge: assemble (S, D) once, then a single K=D out-projection matmul
    merged = jnp.concatenate([o_h[h] for h in range(heads)], axis=-1)  # (S, D)
    attn = jnp.dot(merged, out_w_ref[...], preferred_element_type=jnp.float32)
    x = x + attn + out_b_ref[...]                                      # residual

    # ---- MLP (pre-LN): fc1 + exact-erf GELU + fc2 + residual ----------------
    # TODO(synk): erf GELU kept for torch nn.GELU parity; jax.nn.gelu
    # (approximate=True) routes through the EUP and is faster on v5e if the
    # accuracy budget allows.
    y2 = layernorm(x, ln2_g_ref, ln2_b_ref).astype(jnp.bfloat16)
    hdn = jnp.dot(y2, fc1_w_ref[...], preferred_element_type=jnp.float32)
    hdn = hdn + fc1_b_ref[...]
    hdn = 0.5 * hdn * (1.0 + lax.erf(hdn * (1.0 / math.sqrt(2.0))))
    mlp = jnp.dot(hdn.astype(jnp.bfloat16), fc2_w_ref[...],
                  preferred_element_type=jnp.float32)
    x = x + mlp + fc2_b_ref[...]                                       # residual

    x_scr[...] = x

    @pl.when(layer == pl.num_programs(1) - 1)
    def _():
        o_ref[...] = x.astype(o_ref.dtype)


def _head_kernel(x_ref, g_ref, b_ref, w_ref, hb_ref, o_ref, *, eps):
    """Final LayerNorm (class token only) + classifier head + ReLU."""
    x = x_ref[...].astype(jnp.float32)                                 # (B, D)
    mean = jnp.mean(x, axis=-1, keepdims=True)
    var = jnp.mean((x - mean) ** 2, axis=-1, keepdims=True)
    y = (x - mean) * lax.rsqrt(var + eps)
    y = y * g_ref[...] + b_ref[...]
    logits = jnp.dot(y.astype(jnp.bfloat16), w_ref[...],
                     preferred_element_type=jnp.float32)
    logits = logits + hb_ref[...]
    o_ref[...] = jnp.maximum(logits, 0.0).astype(o_ref.dtype)          # final ReLU


# ------------------------------ kernel wrappers ------------------------------

def pallas_patch_embed(p, conv_w, emb_add):
    B, S, K = p.shape
    D = conv_w.shape[1]
    return pl.pallas_call(
        _embed_kernel,
        out_shape=jax.ShapeDtypeStruct((B, S, D), jnp.bfloat16),
        grid=(B,),
        in_specs=[pl.BlockSpec((None, S, K), lambda b: (b, 0, 0)),
                  pl.BlockSpec(conv_w.shape, lambda b: (0, 0)),
                  pl.BlockSpec(emb_add.shape, lambda b: (0, 0))],
        out_specs=pl.BlockSpec((None, S, D), lambda b: (b, 0, 0)),
        compiler_params=pltpu.CompilerParams(
            dimension_semantics=("parallel",),
            vmem_limit_bytes=_VMEM_LIMIT),
    )(p, conv_w, emb_add)


_BLOCK_WEIGHT_NAMES = ('ln1_g', 'ln1_b',
                       'q_w', 'q_b', 'k_w', 'k_b', 'v_w', 'v_b',
                       'out_w', 'out_b',
                       'ln2_g', 'ln2_b',
                       'fc1_w', 'fc1_b', 'fc2_w', 'fc2_b')


def pallas_encoder_stack(xs, blocks, *, heads, n_valid):
    """All encoder layers in one pallas_call: grid=(batch, layer)."""
    B, S, D = xs.shape
    L = blocks['q_w'].shape[0]
    ws = [blocks[n] for n in _BLOCK_WEIGHT_NAMES]

    def wspec(a):
        zeros = (0,) * (a.ndim - 1)
        return pl.BlockSpec((None,) + a.shape[1:],
                            lambda b, l, _z=zeros: (l,) + _z)

    # TODO(synk): on v7x with batch==1 a second "parallel" axis (e.g. head or
    # row split) would be needed to occupy both TensorCores.
    return pl.pallas_call(
        functools.partial(_encoder_stack_kernel, heads=heads,
                          n_valid=n_valid, eps=_LN_EPS),
        out_shape=jax.ShapeDtypeStruct((B, S, D), xs.dtype),
        grid=(B, L),
        in_specs=[pl.BlockSpec((None, S, D), lambda b, l: (b, 0, 0))]
                 + [wspec(w) for w in ws],
        out_specs=pl.BlockSpec((None, S, D), lambda b, l: (b, 0, 0)),
        scratch_shapes=[pltpu.VMEM((S, D), jnp.float32)],
        compiler_params=pltpu.CompilerParams(
            dimension_semantics=("parallel", "arbitrary"),
            vmem_limit_bytes=_VMEM_LIMIT),
    )(xs, *ws)


def pallas_head(cls_tokens, ln_g, ln_b, head_w, head_b):
    B = cls_tokens.shape[0]
    N = head_w.shape[1]
    return pl.pallas_call(
        functools.partial(_head_kernel, eps=_LN_EPS),
        out_shape=jax.ShapeDtypeStruct((B, N), jnp.float32),
        in_specs=[_VMEM_FULL] * 5,
        out_specs=_VMEM_FULL,
        compiler_params=pltpu.CompilerParams(vmem_limit_bytes=_VMEM_LIMIT),
    )(cls_tokens, ln_g, ln_b, head_w, head_b)


# --------------------------------- model glue --------------------------------

def init_params(key, *, img, patch, in_ch, dim, heads, mlp_dim, layers,
                num_classes):
    n_patches = (img // patch) ** 2
    seq = n_patches + 1
    dh = dim // heads
    keys = iter(jax.random.split(key, 24))

    def nrm(shape, std=0.02):
        return jax.random.normal(next(keys), shape, jnp.float32) * std

    # torch Conv2d weight (O, I, kh, kw) -> matmul layout (I*kh*kw, O), bf16
    conv_w_torch = nrm((dim, in_ch, patch, patch))
    return dict(
        conv_w=conv_w_torch.reshape(dim, in_ch * patch * patch).T.astype(jnp.bfloat16),
        conv_b=nrm((1, dim)),
        cls=nrm((1, dim)),
        pos=nrm((seq, dim)),
        ln_f_g=jnp.ones((1, dim), jnp.float32),
        ln_f_b=jnp.zeros((1, dim), jnp.float32),
        head_w=nrm((dim, num_classes)).astype(jnp.bfloat16),
        head_b=nrm((1, num_classes)),
        # Per-layer weights stacked along a leading L axis so a single
        # pallas_call pipelines the whole encoder stack.  QKV weights are laid
        # out per head (heads, D, dh) so attention runs head-batched with no
        # in-kernel transposes (a real torch-weight port would permute the
        # in_proj columns into this layout once at load time).
        blocks=dict(
            ln1_g=jnp.ones((layers, 1, dim), jnp.float32),
            ln1_b=jnp.zeros((layers, 1, dim), jnp.float32),
            q_w=nrm((layers, heads, dim, dh)).astype(jnp.bfloat16),
            q_b=nrm((layers, heads, 1, dh)),
            k_w=nrm((layers, heads, dim, dh)).astype(jnp.bfloat16),
            k_b=nrm((layers, heads, 1, dh)),
            v_w=nrm((layers, heads, dim, dh)).astype(jnp.bfloat16),
            v_b=nrm((layers, heads, 1, dh)),
            out_w=nrm((layers, dim, dim)).astype(jnp.bfloat16),
            out_b=nrm((layers, 1, dim)),
            ln2_g=jnp.ones((layers, 1, dim), jnp.float32),
            ln2_b=jnp.zeros((layers, 1, dim), jnp.float32),
            fc1_w=nrm((layers, dim, mlp_dim)).astype(jnp.bfloat16),
            fc1_b=nrm((layers, 1, mlp_dim)),
            fc2_w=nrm((layers, mlp_dim, dim)).astype(jnp.bfloat16),
            fc2_b=nrm((layers, 1, dim)),
        ),
    )


def vit_relu_forward(params, x, *, patch, heads):
    """ViT encoder (torchvision vit_b_16 semantics) followed by the final ReLU."""
    B, C, H, W = x.shape
    gh, gw = H // patch, W // patch
    n_patches = gh * gw
    seq = n_patches + 1
    s_pad = ((seq + 7) // 8) * 8          # sublane-aligned padded sequence

    # Conv2d(kernel=stride=patch) == matmul over flattened (C, ph, pw) patches;
    # row 0 is reserved for the class token, tail rows are padding tokens.
    p = x.reshape(B, C, gh, patch, gw, patch)
    p = p.transpose(0, 2, 4, 1, 3, 5).reshape(B, n_patches, C * patch * patch)
    p = jnp.pad(p, ((0, 0), (1, s_pad - seq), (0, 0))).astype(jnp.bfloat16)

    # cls token, conv bias and positional embedding folded into one additive
    # (S_pad, D) term so the embed kernel is a single matmul + add + store.
    pos = params['pos']
    emb_add = jnp.concatenate(
        [params['cls'] + pos[0:1],
         params['conv_b'] + pos[1:seq],
         jnp.zeros((s_pad - seq, pos.shape[1]), jnp.float32)], axis=0)

    xs = pallas_patch_embed(p, params['conv_w'], emb_add)
    xs = pallas_encoder_stack(xs, params['blocks'], heads=heads, n_valid=seq)

    # Final LN is per-token and only the class token feeds the head, so only
    # the cls row is normalized (fused with head + ReLU in one tiny kernel).
    cls_tok = xs[:, 0, :]
    return pallas_head(cls_tok, params['ln_f_g'], params['ln_f_b'],
                       params['head_w'], params['head_b'])


# ------------------------------------ main ------------------------------------

if __name__ == "__main__":
    # small shapes consistent with the module's forward (ViT-style, scaled down)
    B, C, IMG, PATCH = 2, 3, 32, 16            # -> 2x2 = 4 patches, seq 5 (pad 8)
    DIM, HEADS, MLP, LAYERS = 128, 2, 256, 2   # head dim 64, as in ViT-B/16
    NUM_CLASSES = 8                            # cfg['model']['num_classes'] stand-in

    key = jax.random.PRNGKey(0)
    kp, kx = jax.random.split(key)
    params = init_params(kp, img=IMG, patch=PATCH, in_ch=C, dim=DIM,
                         heads=HEADS, mlp_dim=MLP, layers=LAYERS,
                         num_classes=NUM_CLASSES)
    x = jax.random.normal(kx, (B, C, IMG, IMG), jnp.float32)

    fwd = jax.jit(functools.partial(vit_relu_forward, patch=PATCH, heads=HEADS))
    out = fwd(params, x)
    jax.block_until_ready(out)
    assert out.shape == (B, NUM_CLASSES)
    assert bool(jnp.all(jnp.isfinite(out)))
    # TODO(synk): dropout layers in the reference are p=0 / eval-mode no-ops and
    # are omitted; the torch.hub resnet50 load in __init__ is dead code
    # (immediately overwritten by vit_b_16), so the effective forward is
    # ViT-B/16 + ReLU as implemented above.
    print("KERNEL_OK")
</pallas_src>

<mosaic_0001>
module attributes {stable_mosaic.version = 11 : i64} {
  func.func @_embed_kernel(%arg0: i32, %arg1: memref<1x8x768xbf16, #tpu.memory_space<vmem>>, %arg2: memref<768x128xbf16, #tpu.memory_space<vmem>>, %arg3: memref<8x128xf32, #tpu.memory_space<vmem>>, %arg4: memref<1x8x128xbf16, #tpu.memory_space<vmem>>) attributes {dimension_semantics = [#tpu.dimension_semantics<parallel>], iteration_bounds = array<i64: 2>, scalar_prefetch = 0 : i64, scratch_operands = 0 : i64, tpu.core_type = #tpu.core_type<tc>, window_params = [{transform_indices = @transform_0, window_bounds = array<i64: 1, 8, 768>}, {pipeline_mode = #tpu.pipeline_mode<synchronous>, transform_indices = @transform_1, window_bounds = array<i64: 768, 128>}, {pipeline_mode = #tpu.pipeline_mode<synchronous>, transform_indices = @transform_2, window_bounds = array<i64: 8, 128>}, {transform_indices = @transform_3, window_bounds = array<i64: 1, 8, 128>}]} {
    %c0 = arith.constant 0 : index
    %c0_0 = arith.constant 0 : index
    %c0_1 = arith.constant 0 : index
    %0 = vector.load %arg1[%c0, %c0_0, %c0_1] : memref<1x8x768xbf16, #tpu.memory_space<vmem>>, vector<1x8x768xbf16>
    %1 = vector.shape_cast %0 : vector<1x8x768xbf16> to vector<8x768xbf16>
    %c0_2 = arith.constant 0 : index
    %c0_3 = arith.constant 0 : index
    %2 = vector.load %arg2[%c0_2, %c0_3] : memref<768x128xbf16, #tpu.memory_space<vmem>>, vector<768x128xbf16>
    %cst = arith.constant dense<0.000000e+00> : vector<8x128xf32>
    %3 = tpu.matmul %1, %2, %cst {dimension_numbers = #tpu.dot_dimension_numbers<[1], [0], [0], [1], [0, 0, 1, 1], [], []>} : vector<8x768xbf16>, vector<768x128xbf16>, vector<8x128xf32> -> vector<8x128xf32>
    %c0_4 = arith.constant 0 : index
    %c0_5 = arith.constant 0 : index
    %4 = vector.load %arg3[%c0_4, %c0_5] : memref<8x128xf32, #tpu.memory_space<vmem>>, vector<8x128xf32>
    %5 = arith.addf %3, %4 : vector<8x128xf32>
    %6 = arith.truncf %5 : vector<8x128xf32> to vector<8x128xbf16>
    %c0_6 = arith.constant 0 : index
    %c0_7 = arith.constant 0 : index
    %c0_8 = arith.constant 0 : index
    %7 = vector.load %arg4[%c0_6, %c0_7, %c0_8] : memref<1x8x128xbf16, #tpu.memory_space<vmem>>, vector<1x8x128xbf16>
    %8 = vector.shape_cast %7 : vector<1x8x128xbf16> to vector<8x128xbf16>
    %9 = vector.shape_cast %6 : vector<8x128xbf16> to vector<1x8x128xbf16>
    tpu.vector_store %arg4[%c0_6, %c0_7, %c0_8], %9 {strides = array<i32>} : memref<1x8x128xbf16, #tpu.memory_space<vmem>>, vector<1x8x128xbf16>,
    return
  }
  func.func @transform_0(%arg0: i32) -> (i32, i32, i32) {
    %c0_i32 = arith.constant 0 : i32
    %c0_i32_0 = arith.constant 0 : i32
    %c0_i32_1 = arith.constant 0 : i32
    return %arg0, %c0_i32, %c0_i32_0 : i32, i32, i32
  }
  func.func @transform_1(%arg0: i32) -> (i32, i32) {
    %c0_i32 = arith.constant 0 : i32
    %c0_i32_0 = arith.constant 0 : i32
    %c0_i32_1 = arith.constant 0 : i32
    return %c0_i32, %c0_i32_0 : i32, i32
  }
  func.func @transform_2(%arg0: i32) -> (i32, i32) {
    %c0_i32 = arith.constant 0 : i32
    %c0_i32_0 = arith.constant 0 : i32
    %c0_i32_1 = arith.constant 0 : i32
    return %c0_i32, %c0_i32_0 : i32, i32
  }
  func.func @transform_3(%arg0: i32) -> (i32, i32, i32) {
    %c0_i32 = arith.constant 0 : i32
    %c0_i32_0 = arith.constant 0 : i32
    %c0_i32_1 = arith.constant 0 : i32
    return %arg0, %c0_i32, %c0_i32_0 : i32, i32, i32
  }
}

module attributes {stable_mosaic.version = 11 : i64} {
  func.func @_encoder_stack_kernel(%arg0: i32, %arg1: i32, %arg2: memref<1x8x128xbf16, #tpu.memory_space<vmem>>, %arg3: memref<1x1x128xf32, #tpu.memory_space<vmem>>, %arg4: memref<1x1x128xf32, #tpu.memory_space<vmem>>, %arg5: memref<1x2x128x64xbf16, #tpu.memory_space<vmem>>, %arg6: memref<1x2x1x64xf32, #tpu.memory_space<vmem>>, %arg7: memref<1x2x128x64xbf16, #tpu.memory_space<vmem>>, %arg8: memref<1x2x1x64xf32, #tpu.memory_space<vmem>>, %arg9: memref<1x2x128x64xbf16, #tpu.memory_space<vmem>>, %arg10: memref<1x2x1x64xf32, #tpu.memory_space<vmem>>, %arg11: memref<1x128x128xbf16, #tpu.memory_space<vmem>>, %arg12: memref<1x1x128xf32, #tpu.memory_space<vmem>>, %arg13: memref<1x1x128xf32, #tpu.memory_space<vmem>>, %arg14: memref<1x1x128xf32, #tpu.memory_space<vmem>>, %arg15: memref<1x128x256xbf16, #tpu.memory_space<vmem>>, %arg16: memref<1x1x256xf32, #tpu.memory_space<vmem>>, %arg17: memref<1x256x128xbf16, #tpu.memory_space<vmem>>, %arg18: memref<1x1x128xf32, #tpu.memory_space<vmem>>, %arg19: memref<1x8x128xbf16, #tpu.memory_space<vmem>>, %arg20: memref<8x128xf32, #tpu.memory_space<vmem>>) attributes {dimension_semantics = [#tpu.dimension_semantics<parallel>, #tpu.dimension_semantics<arbitrary>], iteration_bounds = array<i64: 2, 2>, scalar_prefetch = 0 : i64, scratch_operands = 1 : i64, tpu.core_type = #tpu.core_type<tc>, window_params = [{transform_indices = @transform_0, window_bounds = array<i64: 1, 8, 128>}, {transform_indices = @transform_1, window_bounds = array<i64: 1, 1, 128>}, {transform_indices = @transform_2, window_bounds = array<i64: 1, 1, 128>}, {transform_indices = @transform_3, window_bounds = array<i64: 1, 2, 128, 64>}, {transform_indices = @transform_4, window_bounds = array<i64: 1, 2, 1, 64>}, {transform_indices = @transform_5, window_bounds = array<i64: 1, 2, 128, 64>}, {transform_indices = @transform_6, window_bounds = array<i64: 1, 2, 1, 64>}, {transform_indices = @transform_7, window_bounds = array<i64: 1, 2, 128, 64>}, {transform_indices = @transform_8, window_bounds = array<i64: 1, 2, 1, 64>}, {transform_indices = @transform_9, window_bounds = array<i64: 1, 128, 128>}, {transform_indices = @transform_10, window_bounds = array<i64: 1, 1, 128>}, {transform_indices = @transform_11, window_bounds = array<i64: 1, 1, 128>}, {transform_indices = @transform_12, window_bounds = array<i64: 1, 1, 128>}, {transform_indices = @transform_13, window_bounds = array<i64: 1, 128, 256>}, {transform_indices = @transform_14, window_bounds = array<i64: 1, 1, 256>}, {transform_indices = @transform_15, window_bounds = array<i64: 1, 256, 128>}, {transform_indices = @transform_16, window_bounds = array<i64: 1, 1, 128>}, {transform_indices = @transform_17, window_bounds = array<i64: 1, 8, 128>}]} {
    %c0_i32 = arith.constant 0 : i32
    %0 = arith.cmpi eq, %arg1, %c0_i32 : i32
    %1 = arith.extui %0 : i1 to i32
    %c0_i32_0 = arith.constant 0 : i32
    %2 = arith.cmpi ne, %1, %c0_i32_0 : i32
    scf.if %2 {
      %c0_83 = arith.constant 0 : index
      %c0_84 = arith.constant 0 : index
      %c0_85 = arith.constant 0 : index
      %148 = vector.load %arg2[%c0_83, %c0_84, %c0_85] : memref<1x8x128xbf16, #tpu.memory_space<vmem>>, vector<1x8x128xbf16>
      %149 = vector.shape_cast %148 : vector<1x8x128xbf16> to vector<8x128xbf16>
      %150 = arith.extf %149 : vector<8x128xbf16> to vector<8x128xf32>
      %c0_86 = arith.constant 0 : index
      %c0_87 = arith.constant 0 : index
      %151 = vector.load %arg20[%c0_86, %c0_87] : memref<8x128xf32, #tpu.memory_space<vmem>>, vector<8x128xf32>
      tpu.vector_store %arg20[%c0_86, %c0_87], %150 {strides = array<i32>} : memref<8x128xf32, #tpu.memory_space<vmem>>, vector<8x128xf32>,
    } else {
    }
    %c0 = arith.constant 0 : index
    %c0_1 = arith.constant 0 : index
    %3 = vector.load %arg20[%c0, %c0_1] : memref<8x128xf32, #tpu.memory_space<vmem>>, vector<8x128xf32>
    %cst = arith.constant dense<0.000000e+00> : vector<8xf32>
    %4 = vector.multi_reduction <add>, %3, %cst [1] : vector<8x128xf32> to vector<8xf32>
    %5 = vector.shape_cast %4 : vector<8xf32> to vector<8x1xf32>
    %cst_2 = arith.constant 1.280000e+02 : f32
    %6 = vector.broadcast %cst_2 : f32 to vector<8x1xf32>
    %7 = arith.divf %5, %6 : vector<8x1xf32>
    %8 = vector.broadcast %7 : vector<8x1xf32> to vector<8x128xf32>
    %9 = arith.subf %3, %8 : vector<8x128xf32>
    %10 = arith.mulf %9, %9 : vector<8x128xf32>
    %cst_3 = arith.constant dense<0.000000e+00> : vector<8xf32>
    %11 = vector.multi_reduction <add>, %10, %cst_3 [1] : vector<8x128xf32> to vector<8xf32>
    %12 = vector.shape_cast %11 : vector<8xf32> to vector<8x1xf32>
    %cst_4 = arith.constant 1.280000e+02 : f32
    %13 = vector.broadcast %cst_4 : f32 to vector<8x1xf32>
    %14 = arith.divf %12, %13 : vector<8x1xf32>
    %15 = vector.broadcast %7 : vector<8x1xf32> to vector<8x128xf32>
    %16 = arith.subf %3, %15 : vector<8x128xf32>
    %cst_5 = arith.constant 9.99999997E-7 : f32
    %17 = vector.broadcast %cst_5 : f32 to vector<8x1xf32>
    %18 = arith.addf %14, %17 : vector<8x1xf32>
    %19 = math.rsqrt %18 : vector<8x1xf32>
    %20 = vector.broadcast %19 : vector<8x1xf32> to vector<8x128xf32>
    %21 = arith.mulf %16, %20 : vector<8x128xf32>
    %c0_6 = arith.constant 0 : index
    %c0_7 = arith.constant 0 : index
    %c0_8 = arith.constant 0 : index
    %22 = vector.load %arg3[%c0_6, %c0_7, %c0_8] : memref<1x1x128xf32, #tpu.memory_space<vmem>>, vector<1x1x128xf32>
    %23 = vector.shape_cast %22 : vector<1x1x128xf32> to vector<1x128xf32>
    %24 = vector.broadcast %23 : vector<1x128xf32> to vector<8x128xf32>
    %25 = arith.mulf %21, %24 : vector<8x128xf32>
    %c0_9 = arith.constant 0 : index
    %c0_10 = arith.constant 0 : index
    %c0_11 = arith.constant 0 : index
    %26 = vector.load %arg4[%c0_9, %c0_10, %c0_11] : memref<1x1x128xf32, #tpu.memory_space<vmem>>, vector<1x1x128xf32>
    %27 = vector.shape_cast %26 : vector<1x1x128xf32> to vector<1x128xf32>
    %28 = vector.broadcast %27 : vector<1x128xf32> to vector<8x128xf32>
    %29 = arith.addf %25, %28 : vector<8x128xf32>
    %30 = arith.truncf %29 : vector<8x128xf32> to vector<8x128xbf16>
    %31 = vector.shape_cast %30 : vector<8x128xbf16> to vector<1x8x128xbf16>
    %32 = vector.broadcast %31 : vector<1x8x128xbf16> to vector<2x8x128xbf16>
    %c0_12 = arith.constant 0 : index
    %c0_13 = arith.constant 0 : index
    %c0_14 = arith.constant 0 : index
    %c0_15 = arith.constant 0 : index
    %33 = vector.load %arg5[%c0_12, %c0_13, %c0_14, %c0_15] : memref<1x2x128x64xbf16, #tpu.memory_space<vmem>>, vector<1x2x128x64xbf16>
    %34 = vector.shape_cast %33 : vector<1x2x128x64xbf16> to vector<2x128x64xbf16>
    "tpu.trace_start"() <{level = 10 : i32, message = "hsd,hdf->hsf"}> : () -> ()
    %cst_16 = arith.constant dense<0.000000e+00> : vector<2x8x64xf32>
    %35 = tpu.matmul %32, %34, %cst_16 {dimension_numbers = #tpu.dot_dimension_numbers<[2], [1], [1], [2], [0, 0, 0, 1, 1, 2], [0], [0]>} : vector<2x8x128xbf16>, vector<2x128x64xbf16>, vector<2x8x64xf32> -> vector<2x8x64xf32>
    "tpu.trace_stop"() : () -> ()
    %c0_17 = arith.constant 0 : index
    %c0_18 = arith.constant 0 : index
    %c0_19 = arith.constant 0 : index
    %c0_20 = arith.constant 0 : index
    %36 = vector.load %arg6[%c0_17, %c0_18, %c0_19, %c0_20] : memref<1x2x1x64xf32, #tpu.memory_space<vmem>>, vector<1x2x1x64xf32>
    %37 = vector.shape_cast %36 : vector<1x2x1x64xf32> to vector<2x1x64xf32>
    %38 = vector.broadcast %37 : vector<2x1x64xf32> to vector<2x8x64xf32>
    %39 = arith.addf %35, %38 : vector<2x8x64xf32>
    %cst_21 = arith.constant 1.250000e-01 : f32
    %40 = vector.broadcast %cst_21 : f32 to vector<2x8x64xf32>
    %41 = arith.mulf %39, %40 : vector<2x8x64xf32>
    %42 = arith.truncf %41 : vector<2x8x64xf32> to vector<2x8x64xbf16>
    %c0_22 = arith.constant 0 : index
    %c0_23 = arith.constant 0 : index
    %c0_24 = arith.constant 0 : index
    %c0_25 = arith.constant 0 : index
    %43 = vector.load %arg7[%c0_22, %c0_23, %c0_24, %c0_25] : memref<1x2x128x64xbf16, #tpu.memory_space<vmem>>, vector<1x2x128x64xbf16>
    %44 = vector.shape_cast %43 : vector<1x2x128x64xbf16> to vector<2x128x64xbf16>
    "tpu.trace_start"() <{level = 10 : i32, message = "hsd,hdf->hsf"}> : () -> ()
    %cst_26 = arith.constant dense<0.000000e+00> : vector<2x8x64xf32>
    %45 = tpu.matmul %32, %44, %cst_26 {dimension_numbers = #tpu.dot_dimension_numbers<[2], [1], [1], [2], [0, 0, 0, 1, 1, 2], [0], [0]>} : vector<2x8x128xbf16>, vector<2x128x64xbf16>, vector<2x8x64xf32> -> vector<2x8x64xf32>
    "tpu.trace_stop"() : () -> ()
    %c0_27 = arith.constant 0 : index
    %c0_28 = arith.constant 0 : index
    %c0_29 = arith.constant 0 : index
    %c0_30 = arith.constant 0 : index
    %46 = vector.load %arg8[%c0_27, %c0_28, %c0_29, %c0_30] : memref<1x2x1x64xf32, #tpu.memory_space<vmem>>, vector<1x2x1x64xf32>
    %47 = vector.shape_cast %46 : vector<1x2x1x64xf32> to vector<2x1x64xf32>
    %48 = vector.broadcast %47 : vector<2x1x64xf32> to vector<2x8x64xf32>
    %49 = arith.addf %45, %48 : vector<2x8x64xf32>
    %50 = arith.truncf %49 : vector<2x8x64xf32> to vector<2x8x64xbf16>
    %c0_31 = arith.constant 0 : index
    %c0_32 = arith.constant 0 : index
    %c0_33 = arith.constant 0 : index
    %c0_34 = arith.constant 0 : index
    %51 = vector.load %arg9[%c0_31, %c0_32, %c0_33, %c0_34] : memref<1x2x128x64xbf16, #tpu.memory_space<vmem>>, vector<1x2x128x64xbf16>
    %52 = vector.shape_cast %51 : vector<1x2x128x64xbf16> to vector<2x128x64xbf16>
    "tpu.trace_start"() <{level = 10 : i32, message = "hsd,hdf->hsf"}> : () -> ()
    %cst_35 = arith.constant dense<0.000000e+00> : vector<2x8x64xf32>
    %53 = tpu.matmul %32, %52, %cst_35 {dimension_numbers = #tpu.dot_dimension_numbers<[2], [1], [1], [2], [0, 0, 0, 1, 1, 2], [0], [0]>} : vector<2x8x128xbf16>, vector<2x128x64xbf16>, vector<2x8x64xf32> -> vector<2x8x64xf32>
    "tpu.trace_stop"() : () -> ()
    %c0_36 = arith.constant 0 : index
    %c0_37 = arith.constant 0 : index
    %c0_38 = arith.constant 0 : index
    %c0_39 = arith.constant 0 : index
    %54 = vector.load %arg10[%c0_36, %c0_37, %c0_38, %c0_39] : memref<1x2x1x64xf32, #tpu.memory_space<vmem>>, vector<1x2x1x64xf32>
    %55 = vector.shape_cast %54 : vector<1x2x1x64xf32> to vector<2x1x64xf32>
    %56 = vector.broadcast %55 : vector<2x1x64xf32> to vector<2x8x64xf32>
    %57 = arith.addf %53, %56 : vector<2x8x64xf32>
    %58 = arith.truncf %57 : vector<2x8x64xf32> to vector<2x8x64xbf16>
    "tpu.trace_start"() <{level = 10 : i32, message = "hqd,hkd->hqk"}> : () -> ()
    %cst_40 = arith.constant dense<0.000000e+00> : vector<2x8x8xf32>
    %59 = tpu.matmul %42, %50, %cst_40 {dimension_numbers = #tpu.dot_dimension_numbers<[2], [2], [1], [1], [0, 0, 0, 1, 1, 1], [0], [0]>} : vector<2x8x64xbf16>, vector<2x8x64xbf16>, vector<2x8x8xf32> -> vector<2x8x8xf32>
    "tpu.trace_stop"() : () -> ()
    %60 = tpu.iota {dimensions = array<i32: 2>} : vector<1x1x8xi32>
    %c5_i32 = arith.constant 5 : i32
    %61 = vector.broadcast %c5_i32 : i32 to vector<1x1x8xi32>
    %62 = arith.cmpi slt, %60, %61 : vector<1x1x8xi32>
    %cst_41 = arith.constant -1.000000e+30 : f32
    %63 = vector.shape_cast %62 : vector<1x1x8xi1> to vector<1x1x8xi1>
    %64 = vector.broadcast %63 : vector<1x1x8xi1> to vector<2x8x8xi1>
    %65 = vector.broadcast %cst_41 : f32 to vector<2x8x8xf32>
    %66 = arith.select %64, %59, %65 : vector<2x8x8xi1>, vector<2x8x8xf32>
    %cst_42 = arith.constant dense<0xFF800000> : vector<2x8xf32>
    %67 = vector.multi_reduction <maximumf>, %66, %cst_42 [2] : vector<2x8x8xf32> to vector<2x8xf32>
    %68 = vector.shape_cast %67 : vector<2x8xf32> to vector<2x8x1xf32>
    %69 = vector.broadcast %68 : vector<2x8x1xf32> to vector<2x8x8xf32>
    %70 = arith.subf %66, %69 : vector<2x8x8xf32>
    %71 = math.exp %70 : vector<2x8x8xf32>
    %cst_43 = arith.constant dense<0.000000e+00> : vector<2x8xf32>
    %72 = vector.multi_reduction <add>, %71, %cst_43 [2] : vector<2x8x8xf32> to vector<2x8xf32>
    %73 = vector.shape_cast %72 : vector<2x8xf32> to vector<2x8x1xf32>
    %74 = tpu.reciprocal %73 {approx = true} : vector<2x8x1xf32> -> vector<2x8x1xf32>
    %75 = vector.broadcast %74 : vector<2x8x1xf32> to vector<2x8x8xf32>
    %76 = arith.mulf %71, %75 : vector<2x8x8xf32>
    %77 = arith.truncf %76 : vector<2x8x8xf32> to vector<2x8x8xbf16>
    "tpu.trace_start"() <{level = 10 : i32, message = "hqk,hkd->hqd"}> : () -> ()
    %cst_44 = arith.constant dense<0.000000e+00> : vector<2x8x64xf32>
    %78 = tpu.matmul %77, %58, %cst_44 {dimension_numbers = #tpu.dot_dimension_numbers<[2], [1], [1], [2], [0, 0, 0, 1, 1, 2], [0], [0]>} : vector<2x8x8xbf16>, vector<2x8x64xbf16>, vector<2x8x64xf32> -> vector<2x8x64xf32>
    "tpu.trace_stop"() : () -> ()
    %79 = arith.truncf %78 : vector<2x8x64xf32> to vector<2x8x64xbf16>
    %80 = vector.extract_strided_slice %79 {offsets = [0, 0, 0], sizes = [1, 8, 64], strides = [1, 1, 1]} : vector<2x8x64xbf16> to vector<1x8x64xbf16>
    %81 = vector.shape_cast %80 : vector<1x8x64xbf16> to vector<8x64xbf16>
    %82 = vector.extract_strided_slice %79 {offsets = [1, 0, 0], sizes = [1, 8, 64], strides = [1, 1, 1]} : vector<2x8x64xbf16> to vector<1x8x64xbf16>
    %83 = vector.shape_cast %82 : vector<1x8x64xbf16> to vector<8x64xbf16>
    %84 = tpu.concatenate %81, %83 in 1 : vector<8x64xbf16>, vector<8x64xbf16> -> vector<8x128xbf16>
    %c0_45 = arith.constant 0 : index
    %c0_46 = arith.constant 0 : index
    %c0_47 = arith.constant 0 : index
    %85 = vector.load %arg11[%c0_45, %c0_46, %c0_47] : memref<1x128x128xbf16, #tpu.memory_space<vmem>>, vector<1x128x128xbf16>
    %86 = vector.shape_cast %85 : vector<1x128x128xbf16> to vector<128x128xbf16>
    %cst_48 = arith.constant dense<0.000000e+00> : vector<8x128xf32>
    %87 = tpu.matmul %84, %86, %cst_48 {dimension_numbers = #tpu.dot_dimension_numbers<[1], [0], [0], [1], [0, 0, 1, 1], [], []>} : vector<8x128xbf16>, vector<128x128xbf16>, vector<8x128xf32> -> vector<8x128xf32>
    %88 = arith.addf %3, %87 : vector<8x128xf32>
    %c0_49 = arith.constant 0 : index
    %c0_50 = arith.constant 0 : index
    %c0_51 = arith.constant 0 : index
    %89 = vector.load %arg12[%c0_49, %c0_50, %c0_51] : memref<1x1x128xf32, #tpu.memory_space<vmem>>, vector<1x1x128xf32>
    %90 = vector.shape_cast %89 : vector<1x1x128xf32> to vector<1x128xf32>
    %91 = vector.broadcast %90 : vector<1x128xf32> to vector<8x128xf32>
    %92 = arith.addf %88, %91 : vector<8x128xf32>
    %cst_52 = arith.constant dense<0.000000e+00> : vector<8xf32>
    %93 = vector.multi_reduction <add>, %92, %cst_52 [1] : vector<8x128xf32> to vector<8xf32>
    %94 = vector.shape_cast %93 : vector<8xf32> to vector<8x1xf32>
    %cst_53 = arith.constant 1.280000e+02 : f32
    %95 = vector.broadcast %cst_53 : f32 to vector<8x1xf32>
    %96 = arith.divf %94, %95 : vector<8x1xf32>
    %97 = vector.broadcast %96 : vector<8x1xf32> to vector<8x128xf32>
    %98 = arith.subf %92, %97 : vector<8x128xf32>
    %99 = arith.mulf %98, %98 : vector<8x128xf32>
    %cst_54 = arith.constant dense<0.000000e+00> : vector<8xf32>
    %100 = vector.multi_reduction <add>, %99, %cst_54 [1] : vector<8x128xf32> to vector<8xf32>
    %101 = vector.shape_cast %100 : vector<8xf32> to vector<8x1xf32>
    %cst_55 = arith.constant 1.280000e+02 : f32
    %102 = vector.broadcast %cst_55 : f32 to vector<8x1xf32>
    %103 = arith.divf %101, %102 : vector<8x1xf32>
    %104 = vector.broadcast %96 : vector<8x1xf32> to vector<8x128xf32>
    %105 = arith.subf %92, %104 : vector<8x128xf32>
    %cst_56 = arith.constant 9.99999997E-7 : f32
    %106 = vector.broadcast %cst_56 : f32 to vector<8x1xf32>
    %107 = arith.addf %103, %106 : vector<8x1xf32>
    %108 = math.rsqrt %107 : vector<8x1xf32>
    %109 = vector.broadcast %108 : vector<8x1xf32> to vector<8x128xf32>
    %110 = arith.mulf %105, %109 : vector<8x128xf32>
    %c0_57 = arith.constant 0 : index
    %c0_58 = arith.constant 0 : index
    %c0_59 = arith.constant 0 : index
    %111 = vector.load %arg13[%c0_57, %c0_58, %c0_59] : memref<1x1x128xf32, #tpu.memory_space<vmem>>, vector<1x1x128xf32>
    %112 = vector.shape_cast %111 : vector<1x1x128xf32> to vector<1x128xf32>
    %113 = vector.broadcast %112 : vector<1x128xf32> to vector<8x128xf32>
    %114 = arith.mulf %110, %113 : vector<8x128xf32>
    %c0_60 = arith.constant 0 : index
    %c0_61 = arith.constant 0 : index
    %c0_62 = arith.constant 0 : index
    %115 = vector.load %arg14[%c0_60, %c0_61, %c0_62] : memref<1x1x128xf32, #tpu.memory_space<vmem>>, vector<1x1x128xf32>
    %116 = vector.shape_cast %115 : vector<1x1x128xf32> to vector<1x128xf32>
    %117 = vector.broadcast %116 : vector<1x128xf32> to vector<8x128xf32>
    %118 = arith.addf %114, %117 : vector<8x128xf32>
    %119 = arith.truncf %118 : vector<8x128xf32> to vector<8x128xbf16>
    %c0_63 = arith.constant 0 : index
    %c0_64 = arith.constant 0 : index
    %c0_65 = arith.constant 0 : index
    %120 = vector.load %arg15[%c0_63, %c0_64, %c0_65] : memref<1x128x256xbf16, #tpu.memory_space<vmem>>, vector<1x128x256xbf16>
    %121 = vector.shape_cast %120 : vector<1x128x256xbf16> to vector<128x256xbf16>
    %cst_66 = arith.constant dense<0.000000e+00> : vector<8x256xf32>
    %122 = tpu.matmul %119, %121, %cst_66 {dimension_numbers = #tpu.dot_dimension_numbers<[1], [0], [0], [1], [0, 0, 1, 1], [], []>} : vector<8x128xbf16>, vector<128x256xbf16>, vector<8x256xf32> -> vector<8x256xf32>
    %c0_67 = arith.constant 0 : index
    %c0_68 = arith.constant 0 : index
    %c0_69 = arith.constant 0 : index
    %123 = vector.load %arg16[%c0_67, %c0_68, %c0_69] : memref<1x1x256xf32, #tpu.memory_space<vmem>>, vector<1x1x256xf32>
    %124 = vector.shape_cast %123 : vector<1x1x256xf32> to vector<1x256xf32>
    %125 = vector.broadcast %124 : vector<1x256xf32> to vector<8x256xf32>
    %126 = arith.addf %122, %125 : vector<8x256xf32>
    %cst_70 = arith.constant 5.000000e-01 : f32
    %127 = vector.broadcast %cst_70 : f32 to vector<8x256xf32>
    %128 = arith.mulf %127, %126 : vector<8x256xf32>
    %cst_71 = arith.constant 0.707106769 : f32
    %129 = vector.broadcast %cst_71 : f32 to vector<8x256xf32>
    %130 = arith.mulf %126, %129 : vector<8x256xf32>
    %131 = math.erf %130 : vector<8x256xf32>
    %cst_72 = arith.constant 1.000000e+00 : f32
    %132 = vector.broadcast %cst_72 : f32 to vector<8x256xf32>
    %133 = arith.addf %132, %131 : vector<8x256xf32>
    %134 = arith.mulf %128, %133 : vector<8x256xf32>
    %135 = arith.truncf %134 : vector<8x256xf32> to vector<8x256xbf16>
    %c0_73 = arith.constant 0 : index
    %c0_74 = arith.constant 0 : index
    %c0_75 = arith.constant 0 : index
    %136 = vector.load %arg17[%c0_73, %c0_74, %c0_75] : memref<1x256x128xbf16, #tpu.memory_space<vmem>>, vector<1x256x128xbf16>
    %137 = vector.shape_cast %136 : vector<1x256x128xbf16> to vector<256x128xbf16>
    %cst_76 = arith.constant dense<0.000000e+00> : vector<8x128xf32>
    %138 = tpu.matmul %135, %137, %cst_76 {dimension_numbers = #tpu.dot_dimension_numbers<[1], [0], [0], [1], [0, 0, 1, 1], [], []>} : vector<8x256xbf16>, vector<256x128xbf16>, vector<8x128xf32> -> vector<8x128xf32>
    %139 = arith.addf %92, %138 : vector<8x128xf32>
    %c0_77 = arith.constant 0 : index
    %c0_78 = arith.constant 0 : index
    %c0_79 = arith.constant 0 : index
    %140 = vector.load %arg18[%c0_77, %c0_78, %c0_79] : memref<1x1x128xf32, #tpu.memory_space<vmem>>, vector<1x1x128xf32>
    %141 = vector.shape_cast %140 : vector<1x1x128xf32> to vector<1x128xf32>
    %142 = vector.broadcast %141 : vector<1x128xf32> to vector<8x128xf32>
    %143 = arith.addf %139, %142 : vector<8x128xf32>
    %c0_80 = arith.constant 0 : index
    %c0_81 = arith.constant 0 : index
    %144 = vector.load %arg20[%c0_80, %c0_81] : memref<8x128xf32, #tpu.memory_space<vmem>>, vector<8x128xf32>
    tpu.vector_store %arg20[%c0_80, %c0_81], %143 {strides = array<i32>} : memref<8x128xf32, #tpu.memory_space<vmem>>, vector<8x128xf32>,
    %c1_i32 = arith.constant 1 : i32
    %145 = arith.cmpi eq, %arg1, %c1_i32 : i32
    %146 = arith.extui %145 : i1 to i32
    %c0_i32_82 = arith.constant 0 : i32
    %147 = arith.cmpi ne, %146, %c0_i32_82 : i32
    scf.if %147 {
      %148 = arith.truncf %143 : vector<8x128xf32> to vector<8x128xbf16>
      %c0_83 = arith.constant 0 : index
      %c0_84 = arith.constant 0 : index
      %c0_85 = arith.constant 0 : index
      %149 = vector.load %arg19[%c0_83, %c0_84, %c0_85] : memref<1x8x128xbf16, #tpu.memory_space<vmem>>, vector<1x8x128xbf16>
      %150 = vector.shape_cast %149 : vector<1x8x128xbf16> to vector<8x128xbf16>
      %151 = vector.shape_cast %148 : vector<8x128xbf16> to vector<1x8x128xbf16>
      tpu.vector_store %arg19[%c0_83, %c0_84, %c0_85], %151 {strides = array<i32>} : memref<1x8x128xbf16, #tpu.memory_space<vmem>>, vector<1x8x128xbf16>,
    } else {
    }
    return
  }
  func.func @transform_0(%arg0: i32, %arg1: i32) -> (i32, i32, i32) {
    %c0_i32 = arith.constant 0 : i32
    %c0_i32_0 = arith.constant 0 : i32
    %c0_i32_1 = arith.constant 0 : i32
    return %arg0, %c0_i32, %c0_i32_0 : i32, i32, i32
  }
  func.func @transform_1(%arg0: i32, %arg1: i32) -> (i32, i32, i32) {
    %c0_i32 = arith.constant 0 : i32
    %c0_i32_0 = arith.constant 0 : i32
    %c0_i32_1 = arith.constant 0 : i32
    return %arg1, %c0_i32, %c0_i32_0 : i32, i32, i32
  }
  func.func @transform_2(%arg0: i32, %arg1: i32) -> (i32, i32, i32) {
    %c0_i32 = arith.constant 0 : i32
    %c0_i32_0 = arith.constant 0 : i32
    %c0_i32_1 = arith.constant 0 : i32
    return %arg1, %c0_i32, %c0_i32_0 : i32, i32, i32
  }
  func.func @transform_3(%arg0: i32, %arg1: i32) -> (i32, i32, i32, i32) {
    %c0_i32 = arith.constant 0 : i32
    %c0_i32_0 = arith.constant 0 : i32
    %c0_i32_1 = arith.constant 0 : i32
    %c0_i32_2 = arith.constant 0 : i32
    return %arg1, %c0_i32, %c0_i32_0, %c0_i32_1 : i32, i32, i32, i32
  }
  func.func @transform_4(%arg0: i32, %arg1: i32) -> (i32, i32, i32, i32) {
    %c0_i32 = arith.constant 0 : i32
    %c0_i32_0 = arith.constant 0 : i32
    %c0_i32_1 = arith.constant 0 : i32
    %c0_i32_2 = arith.constant 0 : i32
    return %arg1, %c0_i32, %c0_i32_0, %c0_i32_1 : i32, i32, i32, i32
  }
  func.func @transform_5(%arg0: i32, %arg1: i32) -> (i32, i32, i32, i32) {
    %c0_i32 = arith.constant 0 : i32
    %c0_i32_0 = arith.constant 0 : i32
    %c0_i32_1 = arith.constant 0 : i32
    %c0_i32_2 = arith.constant 0 : i32
    return %arg1, %c0_i32, %c0_i32_0, %c0_i32_1 : i32, i32, i32, i32
  }
  func.func @transform_6(%arg0: i32, %arg1: i32) -> (i32, i32, i32, i32) {
    %c0_i32 = arith.constant 0 : i32
    %c0_i32_0 = arith.constant 0 : i32
    %c0_i32_1 = arith.constant 0 : i32
    %c0_i32_2 = arith.constant 0 : i32
    return %arg1, %c0_i32, %c0_i32_0, %c0_i32_1 : i32, i32, i32, i32
  }
  func.func @transform_7(%arg0: i32, %arg1: i32) -> (i32, i32, i32, i32) {
    %c0_i32 = arith.constant 0 : i32
    %c0_i32_0 = arith.constant 0 : i32
    %c0_i32_1 = arith.constant 0 : i32
    %c0_i32_2 = arith.constant 0 : i32
    return %arg1, %c0_i32, %c0_i32_0, %c0_i32_1 : i32, i32, i32, i32
  }
  func.func @transform_8(%arg0: i32, %arg1: i32) -> (i32, i32, i32, i32) {
    %c0_i32 = arith.constant 0 : i32
    %c0_i32_0 = arith.constant 0 : i32
    %c0_i32_1 = arith.constant 0 : i32
    %c0_i32_2 = arith.constant 0 : i32
    return %arg1, %c0_i32, %c0_i32_0, %c0_i32_1 : i32, i32, i32, i32
  }
  func.func @transform_9(%arg0: i32, %arg1: i32) -> (i32, i32, i32) {
    %c0_i32 = arith.constant 0 : i32
    %c0_i32_0 = arith.constant 0 : i32
    %c0_i32_1 = arith.constant 0 : i32
    return %arg1, %c0_i32, %c0_i32_0 : i32, i32, i32
  }
  func.func @transform_10(%arg0: i32, %arg1: i32) -> (i32, i32, i32) {
    %c0_i32 = arith.constant 0 : i32
    %c0_i32_0 = arith.constant 0 : i32
    %c0_i32_1 = arith.constant 0 : i32
    return %arg1, %c0_i32, %c0_i32_0 : i32, i32, i32
  }
  func.func @transform_11(%arg0: i32, %arg1: i32) -> (i32, i32, i32) {
    %c0_i32 = arith.constant 0 : i32
    %c0_i32_0 = arith.constant 0 : i32
    %c0_i32_1 = arith.constant 0 : i32
    return %arg1, %c0_i32, %c0_i32_0 : i32, i32, i32
  }
  func.func @transform_12(%arg0: i32, %arg1: i32) -> (i32, i32, i32) {
    %c0_i32 = arith.constant 0 : i32
    %c0_i32_0 = arith.constant 0 : i32
    %c0_i32_1 = arith.constant 0 : i32
    return %arg1, %c0_i32, %c0_i32_0 : i32, i32, i32
  }
  func.func @transform_13(%arg0: i32, %arg1: i32) -> (i32, i32, i32) {
    %c0_i32 = arith.constant 0 : i32
    %c0_i32_0 = arith.constant 0 : i32
    %c0_i32_1 = arith.constant 0 : i32
    return %arg1, %c0_i32, %c0_i32_0 : i32, i32, i32
  }
  func.func @transform_14(%arg0: i32, %arg1: i32) -> (i32, i32, i32) {
    %c0_i32 = arith.constant 0 : i32
    %c0_i32_0 = arith.constant 0 : i32
    %c0_i32_1 = arith.constant 0 : i32
    return %arg1, %c0_i32, %c0_i32_0 : i32, i32, i32
  }
  func.func @transform_15(%arg0: i32, %arg1: i32) -> (i32, i32, i32) {
    %c0_i32 = arith.constant 0 : i32
    %c0_i32_0 = arith.constant 0 : i32
    %c0_i32_1 = arith.constant 0 : i32
    return %arg1, %c0_i32, %c0_i32_0 : i32, i32, i32
  }
  func.func @transform_16(%arg0: i32, %arg1: i32) -> (i32, i32, i32) {
    %c0_i32 = arith.constant 0 : i32
    %c0_i32_0 = arith.constant 0 : i32
    %c0_i32_1 = arith.constant 0 : i32
    return %arg1, %c0_i32, %c0_i32_0 : i32, i32, i32
  }
  func.func @transform_17(%arg0: i32, %arg1: i32) -> (i32, i32, i32) {
    %c0_i32 = arith.constant 0 : i32
    %c0_i32_0 = arith.constant 0 : i32
    %c0_i32_1 = arith.constant 0 : i32
    return %arg0, %c0_i32, %c0_i32_0 : i32, i32, i32
  }
}

module attributes {stable_mosaic.version = 11 : i64} {
  func.func @_head_kernel(%arg0: memref<2x128xbf16, #tpu.memory_space<vmem>>, %arg1: memref<1x128xf32, #tpu.memory_space<vmem>>, %arg2: memref<1x128xf32, #tpu.memory_space<vmem>>, %arg3: memref<128x8xbf16, #tpu.memory_space<vmem>>, %arg4: memref<1x8xf32, #tpu.memory_space<vmem>>, %arg5: memref<2x8xf32, #tpu.memory_space<vmem>>) attributes {dimension_semantics = [], scalar_prefetch = 0 : i64, scratch_operands = 0 : i64, tpu.core_type = #tpu.core_type<tc>} {
    %c0 = arith.constant 0 : index
    %c0_0 = arith.constant 0 : index
    %0 = vector.load %arg0[%c0, %c0_0] : memref<2x128xbf16, #tpu.memory_space<vmem>>, vector<2x128xbf16>
    %1 = arith.extf %0 : vector<2x128xbf16> to vector<2x128xf32>
    %cst = arith.constant dense<0.000000e+00> : vector<2xf32>
    %2 = vector.multi_reduction <add>, %1, %cst [1] : vector<2x128xf32> to vector<2xf32>
    %3 = vector.shape_cast %2 : vector<2xf32> to vector<2x1xf32>
    %cst_1 = arith.constant 1.280000e+02 : f32
    %4 = vector.broadcast %cst_1 : f32 to vector<2x1xf32>
    %5 = arith.divf %3, %4 : vector<2x1xf32>
    %6 = vector.broadcast %5 : vector<2x1xf32> to vector<2x128xf32>
    %7 = arith.subf %1, %6 : vector<2x128xf32>
    %8 = arith.mulf %7, %7 : vector<2x128xf32>
    %cst_2 = arith.constant dense<0.000000e+00> : vector<2xf32>
    %9 = vector.multi_reduction <add>, %8, %cst_2 [1] : vector<2x128xf32> to vector<2xf32>
    %10 = vector.shape_cast %9 : vector<2xf32> to vector<2x1xf32>
    %cst_3 = arith.constant 1.280000e+02 : f32
    %11 = vector.broadcast %cst_3 : f32 to vector<2x1xf32>
    %12 = arith.divf %10, %11 : vector<2x1xf32>
    %13 = vector.broadcast %5 : vector<2x1xf32> to vector<2x128xf32>
    %14 = arith.subf %1, %13 : vector<2x128xf32>
    %cst_4 = arith.constant 9.99999997E-7 : f32
    %15 = vector.broadcast %cst_4 : f32 to vector<2x1xf32>
    %16 = arith.addf %12, %15 : vector<2x1xf32>
    %17 = math.rsqrt %16 : vector<2x1xf32>
    %18 = vector.broadcast %17 : vector<2x1xf32> to vector<2x128xf32>
    %19 = arith.mulf %14, %18 : vector<2x128xf32>
    %c0_5 = arith.constant 0 : index
    %c0_6 = arith.constant 0 : index
    %20 = vector.load %arg1[%c0_5, %c0_6] : memref<1x128xf32, #tpu.memory_space<vmem>>, vector<1x128xf32>
    %21 = vector.broadcast %20 : vector<1x128xf32> to vector<2x128xf32>
    %22 = arith.mulf %19, %21 : vector<2x128xf32>
    %c0_7 = arith.constant 0 : index
    %c0_8 = arith.constant 0 : index
    %23 = vector.load %arg2[%c0_7, %c0_8] : memref<1x128xf32, #tpu.memory_space<vmem>>, vector<1x128xf32>
    %24 = vector.broadcast %23 : vector<1x128xf32> to vector<2x128xf32>
    %25 = arith.addf %22, %24 : vector<2x128xf32>
    %26 = arith.truncf %25 : vector<2x128xf32> to vector<2x128xbf16>
    %c0_9 = arith.constant 0 : index
    %c0_10 = arith.constant 0 : index
    %27 = vector.load %arg3[%c0_9, %c0_10] : memref<128x8xbf16, #tpu.memory_space<vmem>>, vector<128x8xbf16>
    %cst_11 = arith.constant dense<0.000000e+00> : vector<2x8xf32>
    %28 = tpu.matmul %26, %27, %cst_11 {dimension_numbers = #tpu.dot_dimension_numbers<[1], [0], [0], [1], [0, 0, 1, 1], [], []>} : vector<2x128xbf16>, vector<128x8xbf16>, vector<2x8xf32> -> vector<2x8xf32>
    %c0_12 = arith.constant 0 : index
    %c0_13 = arith.constant 0 : index
    %29 = vector.load %arg4[%c0_12, %c0_13] : memref<1x8xf32, #tpu.memory_space<vmem>>, vector<1x8xf32>
    %30 = vector.broadcast %29 : vector<1x8xf32> to vector<2x8xf32>
    %31 = arith.addf %28, %30 : vector<2x8xf32>
    %cst_14 = arith.constant 0.000000e+00 : f32
    %32 = vector.broadcast %cst_14 : f32 to vector<2x8xf32>
    %33 = arith.maximumf %31, %32 : vector<2x8xf32>
    %c0_15 = arith.constant 0 : index
    %c0_16 = arith.constant 0 : index
    %34 = vector.load %arg5[%c0_15, %c0_16] : memref<2x8xf32, #tpu.memory_space<vmem>>, vector<2x8xf32>
    tpu.vector_store %arg5[%c0_15, %c0_16], %33 {strides = array<i32>} : memref<2x8xf32, #tpu.memory_space<vmem>>, vector<2x8xf32>,
    return
  }
}

</mosaic_0001>

<llo_original>
// kernel: vit_relu_forward.5
$region0: #{vit_relu_forward.5}
  #allocation0 [shape = 'u32[]', space=smem, size = 0x4, offset = 0x4, fixed_abs, tag = 'smem constant byte address 0x4 - core index']
  #allocation1 [shape = 'u32[144,128]{1,0:T(1,128)}', space=vmem, size = 0x12000, scoped, tag = 'internal scratch']
  %s0 = inlined_call_operand.vmem [shape: bf16[2,128], index: 0, kind: input, shape index: {}]
  %s1 = inlined_call_operand.vmem [shape: f32[1,128], index: 1, kind: input, shape index: {}]
  %s2 = inlined_call_operand.vmem [shape: f32[1,128], index: 2, kind: input, shape index: {}]
  %s3 = inlined_call_operand.vmem [shape: bf16[128,8], index: 3, kind: input, shape index: {}]
  %s4 = inlined_call_operand.vmem [shape: f32[1,8], index: 4, kind: input, shape index: {}]
  %s5 = inlined_call_operand.hbm [shape: f32[2,8], index: 5, kind: output, shape index: {}]
  %s6 = sld [smem:[#allocation0]]
  $region30: #{vit_relu_forward.5} parent=0
    _
  %s8 = ssub.s32 1, %s6
  %s9 = scalar_select 0, %s8, %s6
  $region1: #{vit_relu_forward.5} parent=0
    #allocation2 [shape = 'u8[1024]{0}', space=vmem, size = 0x400, scoped, tag = 'output window, operand 0, single buffered']
    #allocation3 [shape = 's32[1]{0}', space=sflag, size = 0x4, scoped, tag = 'scoped memory for vit_relu_forward.5']
    %10 = vsyncpa [#allocation3], 0
    // Predicated region
    $region2: #{vit_relu_forward.5} parent=1 // pred_check
      _
    $region3: #{vit_relu_forward.5} parent=1 // pred_check_branch
      %12 = sbr.rel (0) target = $region5
    $region4: #{vit_relu_forward.5} parent=1 // pred_region
      _
    $region5: #{vit_relu_forward.5} parent=1 // pred_fallthru
      _
    // Predicated region
    $region6: #{vit_relu_forward.5} parent=1 // pred_check
      _
    $region7: #{vit_relu_forward.5} parent=1 // pred_check_branch
      %14 = sbr.rel (0) target = $region9
    $region8: #{vit_relu_forward.5} parent=1 // pred_region
      _
    $region9: #{vit_relu_forward.5} parent=1 // pred_fallthru
      _
    // Predicated region
    $region10: #{vit_relu_forward.5} parent=1 // pred_check
      _
    $region11: #{vit_relu_forward.5} parent=1 // pred_check_branch
      %16 = sbr.rel (0) target = $region13
    $region12: #{vit_relu_forward.5} parent=1 // pred_region
      _
    $region13: #{vit_relu_forward.5} parent=1 // pred_fallthru
      _
    // Predicated region
    $region14: #{vit_relu_forward.5} parent=1 // pred_check
      _
    $region15: #{vit_relu_forward.5} parent=1 // pred_check_branch
      %18 = sbr.rel (0) target = $region17
    $region16: #{vit_relu_forward.5} parent=1 // pred_region
      _
    $region17: #{vit_relu_forward.5} parent=1 // pred_fallthru
      _
    // Predicated region
    $region18: #{vit_relu_forward.5} parent=1 // pred_check
      _
    $region19: #{vit_relu_forward.5} parent=1 // pred_check_branch
      %20 = sbr.rel (0) target = $region21
    $region20: #{vit_relu_forward.5} parent=1 // pred_region
      _
    $region21: #{vit_relu_forward.5} parent=1 // pred_fallthru
      _
    %v22 = vld [vmem:[%s0] sm:$0x1]
    %v23 = vunpack.c.l.bf16 %v22
    %vm24 = vcmask 1041408
    %v25 = vsel %vm24, %v23, 0.0
    %26 = vadd.xlane.f32.xlu0 %v25
    %v27 = vpop.xlane.xlu0 %26
    %v28 = vrcp.pop 128.0
    %v29 = vmul.f32 %v27, %v28
    %v30 = vsub.f32 %v23, %v29
    %v31 = vmul.f32 %v30, %v30
    %v32 = vsel %vm24, %v31, 0.0
    %33 = vadd.xlane.f32.xlu0 %v32
    %v34 = vpop.xlane.xlu0 %33
    %v35 = vmul.f32 %v34, %v28
    %v36 = vadd.f32 %v35, 1e-06
    %v37 = vrsqrt.pop %v36
    %v38 = vmul.f32 %v30, %v37
    %v39 = vld [vmem:[%s1] sm:$0x1]
    %v41 = vlaneseq
    %v42 = vshrl.u32 %v41, 7
    %v43 = vsub.s32 0, %v42
    %v44 = vrot.slane %v39, %v43
    %v46 = vmul.f32 %v38, %v44
    %v47 = vld [vmem:[%s2] sm:$0x1]
    %v49 = vlaneseq
    %v50 = vshrl.u32 %v49, 7
    %v51 = vsub.s32 0, %v50
    %v52 = vrot.slane %v47, %v51
    %v54 = vadd.f32 %v46, %v52
    %v55 = vpack.c.bf16 %v54, %v54
    %v56 = vld [vmem:[%s3] sm:$0xf]
    %v57 = vld [vmem:[%s3 + $0x4] sm:$0xf]
    %v58 = vld [vmem:[%s3 + $0x8] sm:$0xf]
    %v59 = vld [vmem:[%s3 + $0xc] sm:$0xf]
    %v60 = vld [vmem:[%s3 + $0x10] sm:$0xf]
    %v61 = vld [vmem:[%s3 + $0x14] sm:$0xf]
    %v62 = vld [vmem:[%s3 + $0x18] sm:$0xf]
    %v63 = vld [vmem:[%s3 + $0x1c] sm:$0xf]
    %v64 = vld [vmem:[%s3 + $0x20] sm:$0xf]
    %v65 = vld [vmem:[%s3 + $0x24] sm:$0xf]
    %v66 = vld [vmem:[%s3 + $0x28] sm:$0xf]
    %v67 = vld [vmem:[%s3 + $0x2c] sm:$0xf]
    %v68 = vld [vmem:[%s3 + $0x30] sm:$0xf]
    %v69 = vld [vmem:[%s3 + $0x34] sm:$0xf]
    %v70 = vld [vmem:[%s3 + $0x38] sm:$0xf]
    %v71 = vld [vmem:[%s3 + $0x3c] sm:$0xf]
    %v72 = vld [vmem:[%s4] sm:$0x1]
    %v74 = vlaneseq
    %v75 = vshrl.u32 %v74, 7
    %v76 = vsub.s32 0, %v75
    %v77 = vrot.slane %v72, %v76
    %v95 = vunpack.c.l.b16 %v56
    %v96 = vunpack.c.l.b16 %v57
    %v97 = vunpack.c.l.b16 %v58
    %v98 = vunpack.c.l.b16 %v59
    %v99 = vunpack.c.l.b16 %v60
    %v100 = vunpack.c.l.b16 %v61
    %v101 = vunpack.c.l.b16 %v62
    %v102 = vunpack.c.l.b16 %v63
    %v103 = vunpack.c.l.b16 %v64
    %v104 = vunpack.c.l.b16 %v65
    %v105 = vunpack.c.l.b16 %v66
    %v106 = vunpack.c.l.b16 %v67
    %v107 = vunpack.c.l.b16 %v68
    %v108 = vunpack.c.l.b16 %v69
    %v109 = vunpack.c.l.b16 %v70
    %v110 = vunpack.c.l.b16 %v71
    %v111 = vpack.c.b16 %v96, %v95
    %v112 = vpack.c.b16 %v98, %v97
    %v113 = vpack.c.b16 %v100, %v99
    %v114 = vpack.c.b16 %v102, %v101
    %v115 = vpack.c.b16 %v104, %v103
    %v116 = vpack.c.b16 %v106, %v105
    %v117 = vpack.c.b16 %v108, %v107
    %v118 = vpack.c.b16 %v110, %v109
    %127 = vmatprep.subr.bf16.mxu0 0
    %128 = vmatpush1.bf16.msra.mxu0 %v111
    %129 = vmatprep.subr.bf16.mxu0 0
    %130 = vmatpush1.bf16.msra.mxu0 %v112
    %131 = vmatprep.subr.bf16.mxu0 0
    %132 = vmatpush1.bf16.msra.mxu0 %v113
    %133 = vmatprep.subr.bf16.mxu0 0
    %134 = vmatpush1.bf16.msra.mxu0 %v114
    %135 = vmatprep.subr.bf16.mxu0 0
    %136 = vmatpush1.bf16.msra.mxu0 %v115
    %137 = vmatprep.subr.bf16.mxu0 0
    %138 = vmatpush1.bf16.msra.mxu0 %v116
    %139 = vmatprep.subr.bf16.mxu0 0
    %140 = vmatpush1.bf16.msra.mxu0 %v117
    %141 = vmatprep.subr.bf16.mxu0 0
    %142 = vmatpush1.bf16.msra.mxu0 %v118
    %143 = vmatprep.subr.bf16.mxu0 0
    %144 = vmatpush1.bf16.msra.mxu0 0
    %145 = vmatprep.subr.bf16.mxu0 0
    %146 = vmatpush1.bf16.msra.mxu0 0
    %147 = vmatprep.subr.bf16.mxu0 0
    %148 = vmatpush1.bf16.msra.mxu0 0
    %149 = vmatprep.subr.bf16.mxu0 0
    %150 = vmatpush1.bf16.msra.mxu0 0
    %151 = vmatprep.subr.bf16.mxu0 0
    %152 = vmatpush1.bf16.msra.mxu0 0
    %153 = vmatprep.subr.bf16.mxu0 0
    %154 = vmatpush1.bf16.msra.mxu0 0
    %155 = vmatprep.subr.bf16.mxu0 0
    %156 = vmatpush1.bf16.msra.mxu0 0
    %157 = vmatprep.subr.bf16.mxu0 0
    %158 = vmatpush1.bf16.msra.mxu0 0
    %159 = vmatprep.mubr.bf16.mxu0 0
    %160 = vmatmul.mubr.bf16.gmra.mrb[0].mxu0 %v55
    %v161 = vpop.f32.mrb[0].mxu0
    %v162 = vadd.f32 %v77, %v161
    %v163 = vpop.f32.mrb[0].mxu0
    %v164 = vpop.f32.mrb[0].mxu0
    %v165 = vpop.f32.mrb[0].mxu0
    %166 = vdwg.mxu0
    %v167 = vmax.f32 %v162, 0.0
    %vm168 = vcmask 58368
    %169 = vst.msk [vmem:[#allocation2] sm:$0x3] %vm168, %v167
    // Predicated region
    $region22: #{vit_relu_forward.5} parent=1 // pred_check
      _
    $region23: #{vit_relu_forward.5} parent=1 // pred_check_branch
      %171 = sbr.rel (0) target = $region25
    $region24: #{vit_relu_forward.5} parent=1 // pred_region
      %s173 = ssub.s32 32, 32
      %174 = vsyncadd [#allocation3], %s173
      %s176 = sshll.u32 [#allocation2], 4
      %s177 = int_to_ptr.vmem [resolvable:$true] %s176
      %179 = dma.vmem_to_hbm [thread:$0]  %s177, 32, %s5, [#allocation3]
    $region25: #{vit_relu_forward.5} parent=1 // pred_fallthru
      _
    // Predicated region
    $region26: #{vit_relu_forward.5} parent=1 // pred_check
      _
    $region27: #{vit_relu_forward.5} parent=1 // pred_check_branch
      %181 = sbr.rel (0) target = $region29
    $region28: #{vit_relu_forward.5} parent=1 // pred_region
      %182 = dma.done [#allocation3], 32
    $region29: #{vit_relu_forward.5} parent=1 // pred_fallthru
      _
    %183 = vsyncpa [#allocation3], 1

// kernel: vit_relu_forward.3
$region0: #{vit_relu_forward.3}
  #allocation0 [shape = 'u32[]', space=smem, size = 0x4, offset = 0x4, fixed_abs, tag = 'smem constant byte address 0x4 - core index']
  #allocation1 [shape = 'u32[144,128]{1,0:T(1,128)}', space=vmem, size = 0x12000, scoped, tag = 'internal scratch']
  %s0 = inlined_call_operand.vmem [shape: bf16[2,8,768], index: 0, kind: input, shape index: {}]
  %s1 = inlined_call_operand.vmem [shape: bf16[768,128], index: 1, kind: input, shape index: {}]
  %s2 = inlined_call_operand.vmem [shape: f32[8,128], index: 2, kind: input, shape index: {}]
  %s3 = inlined_call_operand.vmem [shape: bf16[2,8,128], index: 3, kind: output, shape index: {}]
  %s4 = sld [smem:[#allocation0]]
  $region45: #{vit_relu_forward.3} parent=0
    _
  %s6 = ssub.s32 1, %s4
  %s7 = scalar_select 0, %s6, %s4
  loop: start=0, step=1, limit=4
  $region2: #{vit_relu_forward.3} parent=0 // loop_pre_header
    _
  $region3: #{vit_relu_forward.3} parent=0 // loop_header
    %s9 = sphi 0, %s13
    %p10 = scmp.ge.s32.totalorder %s9, 4
    %s19 = sphi 0, %s21
    %s22 = sphi 0, %s19
    %s23 = sphi 0, %s22
    %s39 = sphi 0, %s23
    %s43 = sphi 0, %s43
    %s45 = sphi 0, %s43
    %s46 = sphi 0, %s45
    %s60 = sphi 0, %s46
    %s64 = sphi 0, %s64
    %s66 = sphi 0, %s64
    %s67 = sphi 0, %s66
    %s81 = sphi 0, %s67
    %s87 = sphi 0, %s89
    %s90 = sphi 0, %s87
    %s91 = sphi 0, %s90
    %s107 = sphi 0, %s91
  $region4: #{vit_relu_forward.3} parent=0 // loop_header_branch
    %12 = sbr.rel (%p10) target = $region8
  $region5: #{vit_relu_forward.3} parent=0 // loop_body
    %s14 = ssub.s32 %s9, 1
    %s15 = ssub.s32 %s9, 2
    %s16 = sadd.s32 %s9, 1
    %s17 = ssub.s32 %s9, %s16
    %p18 = scmp.eq.s32.totalorder %s17, 0
    %s20 = sadd.s32 %s19, 1
    %s21 = scalar_select %p18, %s19, %s20
    %p24 = pneg %p18
    %p25 = scmp.eq.s32.totalorder %s9, 1
    %p26 = por %p24, %p25
    %p27 = scmp.ne.s32.totalorder %s19, %s22
    %p28 = scmp.eq.s32.totalorder %s9, 0
    %p29 = por %p27, %p28
    %p30 = scmp.ne.s32.totalorder %s19, %s22
    %p31 = scmp.eq.s32.totalorder %s14, 1
    %p32 = por %p30, %p31
    %p33 = scmp.ne.s32.totalorder %s22, %s23
    %p34 = scmp.eq.s32.totalorder %s14, 0
    %p35 = por %p33, %p34
    %p36 = scmp.ne.s32.totalorder %s22, %s23
    %p37 = scmp.eq.s32.totalorder %s15, 1
    %p38 = por %p36, %p37
    %p40 = scmp.ne.s32.totalorder %s23, %s39
    %p41 = scmp.eq.s32.totalorder %s15, 0
    %p42 = por %p40, %p41
    %s44 = sadd.s32 %s43, 1
    %p47 = scmp.eq.s32.totalorder %s9, 1
    %p48 = scmp.ne.s32.totalorder %s43, %s45
    %p49 = scmp.eq.s32.totalorder %s9, 0
    %p50 = por %p48, %p49
    %p51 = scmp.ne.s32.totalorder %s43, %s45
    %p52 = scmp.eq.s32.totalorder %s14, 1
    %p53 = por %p51, %p52
    %p54 = scmp.ne.s32.totalorder %s45, %s46
    %p55 = scmp.eq.s32.totalorder %s14, 0
    %p56 = por %p54, %p55
    %p57 = scmp.ne.s32.totalorder %s45, %s46
    %p58 = scmp.eq.s32.totalorder %s15, 1
    %p59 = por %p57, %p58
    %p61 = scmp.ne.s32.totalorder %s46, %s60
    %p62 = scmp.eq.s32.totalorder %s15, 0
    %p63 = por %p61, %p62
    %s65 = sadd.s32 %s64, 1
    %p68 = scmp.eq.s32.totalorder %s9, 1
    %p69 = scmp.ne.s32.totalorder %s64, %s66
    %p70 = scmp.eq.s32.totalorder %s9, 0
    %p71 = por %p69, %p70
    %p72 = scmp.ne.s32.totalorder %s64, %s66
    %p73 = scmp.eq.s32.totalorder %s14, 1
    %p74 = por %p72, %p73
    %p75 = scmp.ne.s32.totalorder %s66, %s67
    %p76 = scmp.eq.s32.totalorder %s14, 0
    %p77 = por %p75, %p76
    %p78 = scmp.ne.s32.totalorder %s66, %s67
    %p79 = scmp.eq.s32.totalorder %s15, 1
    %p80 = por %p78, %p79
    %p82 = scmp.ne.s32.totalorder %s67, %s81
    %p83 = scmp.eq.s32.totalorder %s15, 0
    %p84 = por %p82, %p83
    %s85 = ssub.s32 %s9, %s16
    %p86 = scmp.eq.s32.totalorder %s85, 0
    %s88 = sadd.s32 %s87, 1
    %s89 = scalar_select %p86, %s87, %s88
    %p92 = pneg %p86
    %p93 = scmp.eq.s32.totalorder %s9, 1
    %p94 = por %p92, %p93
    %p95 = scmp.ne.s32.totalorder %s87, %s90
    %p96 = scmp.eq.s32.totalorder %s9, 0
    %p97 = por %p95, %p96
    %p98 = scmp.ne.s32.totalorder %s87, %s90
    %p99 = scmp.eq.s32.totalorder %s14, 1
    %p100 = por %p98, %p99
    %p101 = scmp.ne.s32.totalorder %s90, %s91
    %p102 = scmp.eq.s32.totalorder %s14, 0
    %p103 = por %p101, %p102
    %p104 = scmp.ne.s32.totalorder %s90, %s91
    %p105 = scmp.eq.s32.totalorder %s15, 1
    %p106 = por %p104, %p105
    %p108 = scmp.ne.s32.totalorder %s91, %s107
    %p109 = scmp.eq.s32.totalorder %s15, 0
    %p110 = por %p108, %p109
    %p111 = scmp.le.s32.totalorder 1, %s9
    %p112 = scmp.lt.s32.totalorder %s9, 3
    %p113 = pnand %p111, %p112
    %p114 = pneg %p113
    // Predicated region
    $region9: #{vit_relu_forward.3} parent=5 // pred_check
      _
    $region10: #{vit_relu_forward.3} parent=5 // pred_check_branch
      %116 = sbr.rel (%p113) target = $region12
    $region11: #{vit_relu_forward.3} parent=5 // pred_region
      %s117 = ssub.s32 %s9, 1
      // Predicated region
      $region13: #{vit_relu_forward.3} parent=11 // pred_check
        %p118 = pneg %p56
      $region14: #{vit_relu_forward.3} parent=11 // pred_check_branch
        %120 = sbr.rel (%p118) target = $region16
      $region15: #{vit_relu_forward.3} parent=11 // pred_region
        _
      $region16: #{vit_relu_forward.3} parent=11 // pred_fallthru
        _
      // Predicated region
      $region17: #{vit_relu_forward.3} parent=11 // pred_check
        %p121 = pneg %p77
      $region18: #{vit_relu_forward.3} parent=11 // pred_check_branch
        %123 = sbr.rel (%p121) target = $region20
      $region19: #{vit_relu_forward.3} parent=11 // pred_region
        _
      $region20: #{vit_relu_forward.3} parent=11 // pred_fallthru
        _
    $region12: #{vit_relu_forward.3} parent=5 // pred_fallthru
      _
    %p124 = scmp.lt.s32.totalorder %s9, 2
    // Predicated region
    $region21: #{vit_relu_forward.3} parent=5 // pred_check
      %p125 = pneg %p124
    $region22: #{vit_relu_forward.3} parent=5 // pred_check_branch
      %127 = sbr.rel (%p125) target = $region24
    $region23: #{vit_relu_forward.3} parent=5 // pred_region
      // Predicated region
      $region25: #{vit_relu_forward.3} parent=23 // pred_check
        %p128 = pneg %p29
      $region26: #{vit_relu_forward.3} parent=23 // pred_check_branch
        %130 = sbr.rel (%p128) target = $region28
      $region27: #{vit_relu_forward.3} parent=23 // pred_region
        %p131 = scmp.lt.s32.totalorder %s9, 1
        %s132 = scalar_select %p131, %s9, 1
        %s133 = smul.addr %s132, 6
        %s134 = smul.addr %s133, 4
        %s135 = scalar_lea.vmem %s0, %s134
      $region28: #{vit_relu_forward.3} parent=23 // pred_fallthru
        _
    $region24: #{vit_relu_forward.3} parent=5 // pred_fallthru
      _
    %p136 = scmp.le.s32.totalorder 1, %s9
    %p137 = scmp.lt.s32.totalorder %s9, 3
    %p138 = pnand %p136, %p137
    %p139 = pneg %p138
    // Predicated region
    $region29: #{vit_relu_forward.3} parent=5 // pred_check
      _
    $region30: #{vit_relu_forward.3} parent=5 // pred_check_branch
      %141 = sbr.rel (%p138) target = $region32
    $region31: #{vit_relu_forward.3} parent=5 // pred_region
      %s142 = ssub.s32 %s9, 1
      %p143 = scmp.lt.s32.totalorder %s14, 1
      %s144 = scalar_select %p143, %s14, 1
      %s145 = smul.addr %s144, 6
      %s146 = smul.addr %s145, 4
      %s147 = scalar_lea.vmem %s0, %s146
      %p148 = pneg %p35
      %p149 = pneg %p32
      %p150 = pneg %p56
      %p151 = pneg %p53
      %p152 = pneg %p77
      %p153 = pneg %p74
      %p154 = pneg %p103
      %p155 = pneg %p100
      %p156 = scmp.lt.s32.totalorder %s14, 1
      %s157 = scalar_select %p156, %s14, 1
      %s158 = smul.addr %s157, 4
      %s159 = scalar_lea.vmem %s3, %s158
      %p160 = scmp.lt.s32.totalorder %s14, 1
      %s161 = scalar_select %p160, %s14, 1
      %s162 = smul.addr %s161, 6
      %s163 = smul.addr %s162, 4
      %s164 = scalar_lea.vmem %s0, %s163
      %p165 = scmp.lt.s32.totalorder %s14, 1
      %s166 = scalar_select %p165, %s14, 1
      %s167 = smul.addr %s166, 4
      %s168 = scalar_lea.vmem %s3, %s167
      %v170 = vld [vmem:[%s164] sm:$0xff]
      %v171 = vld [vmem:[%s164 + $0x8] sm:$0xff]
      %v172 = vld [vmem:[%s164 + $0x10] sm:$0xff]
      %v173 = vld [vmem:[%s1] sm:$0xf]
      %v174 = vld [vmem:[%s1 + $0x4] sm:$0xf]
      %v175 = vld [vmem:[%s1 + $0x8] sm:$0xf]
      %v176 = vld [vmem:[%s1 + $0xc] sm:$0xf]
      %v177 = vld [vmem:[%s1 + $0x10] sm:$0xf]
      %v178 = vld [vmem:[%s1 + $0x14] sm:$0xf]
      %v179 = vld [vmem:[%s1 + $0x18] sm:$0xf]
      %v180 = vld [vmem:[%s1 + $0x1c] sm:$0xf]
      %v181 = vld [vmem:[%s1 + $0x20] sm:$0xf]
      %v182 = vld [vmem:[%s1 + $0x24] sm:$0xf]
      %v183 = vld [vmem:[%s1 + $0x28] sm:$0xf]
      %v184 = vld [vmem:[%s1 + $0x2c] sm:$0xf]
      %v185 = vld [vmem:[%s1 + $0x30] sm:$0xf]
      %v186 = vld [vmem:[%s1 + $0x34] sm:$0xf]
      %v187 = vld [vmem:[%s1 + $0x38] sm:$0xf]
      %v188 = vld [vmem:[%s1 + $0x3c] sm:$0xf]
      %v189 = vld [vmem:[%s1 + $0x40] sm:$0xf]
      %v190 = vld [vmem:[%s1 + $0x44] sm:$0xf]
      %v191 = vld [vmem:[%s1 + $0x48] sm:$0xf]
      %v192 = vld [vmem:[%s1 + $0x4c] sm:$0xf]
      %v193 = vld [vmem:[%s1 + $0x50] sm:$0xf]
      %v194 = vld [vmem:[%s1 + $0x54] sm:$0xf]
      %v195 = vld [vmem:[%s1 + $0x58] sm:$0xf]
      %v196 = vld [vmem:[%s1 + $0x5c] sm:$0xf]
      %v197 = vld [vmem:[%s1 + $0x60] sm:$0xf]
      %v198 = vld [vmem:[%s1 + $0x64] sm:$0xf]
      %v199 = vld [vmem:[%s1 + $0x68] sm:$0xf]
      %v200 = vld [vmem:[%s1 + $0x6c] sm:$0xf]
      %v201 = vld [vmem:[%s1 + $0x70] sm:$0xf]
      %v202 = vld [vmem:[%s1 + $0x74] sm:$0xf]
      %v203 = vld [vmem:[%s1 + $0x78] sm:$0xf]
      %v204 = vld [vmem:[%s1 + $0x7c] sm:$0xf]
      %v205 = vld [vmem:[%s1 + $0x80] sm:$0xf]
      %v206 = vld [vmem:[%s1 + $0x84] sm:$0xf]
      %v207 = vld [vmem:[%s1 + $0x88] sm:$0xf]
      %v208 = vld [vmem:[%s1 + $0x8c] sm:$0xf]
      %v209 = vld [vmem:[%s1 + $0x90] sm:$0xf]
      %v210 = vld [vmem:[%s1 + $0x94] sm:$0xf]
      %v211 = vld [vmem:[%s1 + $0x98] sm:$0xf]
      %v212 = vld [vmem:[%s1 + $0x9c] sm:$0xf]
      %v213 = vld [vmem:[%s1 + $0xa0] sm:$0xf]
      %v214 = vld [vmem:[%s1 + $0xa4] sm:$0xf]
      %v215 = vld [vmem:[%s1 + $0xa8] sm:$0xf]
      %v216 = vld [vmem:[%s1 + $0xac] sm:$0xf]
      %v217 = vld [vmem:[%s1 + $0xb0] sm:$0xf]
      %v218 = vld [vmem:[%s1 + $0xb4] sm:$0xf]
      %v219 = vld [vmem:[%s1 + $0xb8] sm:$0xf]
      %v220 = vld [vmem:[%s1 + $0xbc] sm:$0xf]
      %v221 = vld [vmem:[%s1 + $0xc0] sm:$0xf]
      %v222 = vld [vmem:[%s1 + $0xc4] sm:$0xf]
      %v223 = vld [vmem:[%s1 + $0xc8] sm:$0xf]
      %v224 = vld [vmem:[%s1 + $0xcc] sm:$0xf]
      %v225 = vld [vmem:[%s1 + $0xd0] sm:$0xf]
      %v226 = vld [vmem:[%s1 + $0xd4] sm:$0xf]
      %v227 = vld [vmem:[%s1 + $0xd8] sm:$0xf]
      %v228 = vld [vmem:[%s1 + $0xdc] sm:$0xf]
      %v229 = vld [vmem:[%s1 + $0xe0] sm:$0xf]
      %v230 = vld [vmem:[%s1 + $0xe4] sm:$0xf]
      %v231 = vld [vmem:[%s1 + $0xe8] sm:$0xf]
      %v232 = vld [vmem:[%s1 + $0xec] sm:$0xf]
      %v233 = vld [vmem:[%s1 + $0xf0] sm:$0xf]
      %v234 = vld [vmem:[%s1 + $0xf4] sm:$0xf]
      %v235 = vld [vmem:[%s1 + $0xf8] sm:$0xf]
      %v236 = vld [vmem:[%s1 + $0xfc] sm:$0xf]
      %v237 = vld [vmem:[%s1 + $0x100] sm:$0xf]
      %v238 = vld [vmem:[%s1 + $0x104] sm:$0xf]
      %v239 = vld [vmem:[%s1 + $0x108] sm:$0xf]
      %v240 = vld [vmem:[%s1 + $0x10c] sm:$0xf]
      %v241 = vld [vmem:[%s1 + $0x110] sm:$0xf]
      %v242 = vld [vmem:[%s1 + $0x114] sm:$0xf]
      %v243 = vld [vmem:[%s1 + $0x118] sm:$0xf]
      %v244 = vld [vmem:[%s1 + $0x11c] sm:$0xf]
      %v245 = vld [vmem:[%s1 + $0x120] sm:$0xf]
      %v246 = vld [vmem:[%s1 + $0x124] sm:$0xf]
      %v247 = vld [vmem:[%s1 + $0x128] sm:$0xf]
      %v248 = vld [vmem:[%s1 + $0x12c] sm:$0xf]
      %v249 = vld [vmem:[%s1 + $0x130] sm:$0xf]
      %v250 = vld [vmem:[%s1 + $0x134] sm:$0xf]
      %v251 = vld [vmem:[%s1 + $0x138] sm:$0xf]
      %v252 = vld [vmem:[%s1 + $0x13c] sm:$0xf]
      %v253 = vld [vmem:[%s1 + $0x140] sm:$0xf]
      %v254 = vld [vmem:[%s1 + $0x144] sm:$0xf]
      %v255 = vld [vmem:[%s1 + $0x148] sm:$0xf]
      %v256 = vld [vmem:[%s1 + $0x14c] sm:$0xf]
      %v257 = vld [vmem:[%s1 + $0x150] sm:$0xf]
      %v258 = vld [vmem:[%s1 + $0x154] sm:$0xf]
      %v259 = vld [vmem:[%s1 + $0x158] sm:$0xf]
      %v260 = vld [vmem:[%s1 + $0x15c] sm:$0xf]
      %v261 = vld [vmem:[%s1 + $0x160] sm:$0xf]
      %v262 = vld [vmem:[%s1 + $0x164] sm:$0xf]
      %v263 = vld [vmem:[%s1 + $0x168] sm:$0xf]
      %v264 = vld [vmem:[%s1 + $0x16c] sm:$0xf]
      %v265 = vld [vmem:[%s1 + $0x170] sm:$0xf]
      %v266 = vld [vmem:[%s1 + $0x174] sm:$0xf]
      %v267 = vld [vmem:[%s1 + $0x178] sm:$0xf]
      %v268 = vld [vmem:[%s1 + $0x17c] sm:$0xf]
      %v269 = vld [vmem:[%s2] sm:$0xff]
      %v273 = vunpack.c.l.b16 %v170
      %v274 = vunpack.c.h.b16 %v170
      %v275 = vunpack.c.l.b16 %v171
      %v276 = vunpack.c.h.b16 %v171
      %v277 = vunpack.c.l.b16 %v172
      %v278 = vunpack.c.h.b16 %v172
      %v279 = vpack.c.b16 %v273, %v273
      %v280 = vpack.c.b16 %v274, %v274
      %v281 = vpack.c.b16 %v275, %v275
      %v282 = vpack.c.b16 %v276, %v276
      %v283 = vpack.c.b16 %v277, %v277
      %v284 = vpack.c.b16 %v278, %v278
      %v387 = vunpack.c.l.b16 %v173
      %v388 = vunpack.c.l.b16 %v174
      %v389 = vunpack.c.l.b16 %v175
      %v390 = vunpack.c.l.b16 %v176
      %v391 = vunpack.c.l.b16 %v177
      %v392 = vunpack.c.l.b16 %v178
      %v393 = vunpack.c.l.b16 %v179
      %v394 = vunpack.c.l.b16 %v180
      %v395 = vunpack.c.l.b16 %v181
      %v396 = vunpack.c.l.b16 %v182
      %v397 = vunpack.c.l.b16 %v183
      %v398 = vunpack.c.l.b16 %v184
      %v399 = vunpack.c.l.b16 %v185
      %v400 = vunpack.c.l.b16 %v186
      %v401 = vunpack.c.l.b16 %v187
      %v402 = vunpack.c.l.b16 %v188
      %v403 = vunpack.c.l.b16 %v189
      %v404 = vunpack.c.l.b16 %v190
      %v405 = vunpack.c.l.b16 %v191
      %v406 = vunpack.c.l.b16 %v192
      %v407 = vunpack.c.l.b16 %v193
      %v408 = vunpack.c.l.b16 %v194
      %v409 = vunpack.c.l.b16 %v195
      %v410 = vunpack.c.l.b16 %v196
      %v411 = vunpack.c.l.b16 %v197
      %v412 = vunpack.c.l.b16 %v198
      %v413 = vunpack.c.l.b16 %v199
      %v414 = vunpack.c.l.b16 %v200
      %v415 = vunpack.c.l.b16 %v201
      %v416 = vunpack.c.l.b16 %v202
      %v417 = vunpack.c.l.b16 %v203
      %v418 = vunpack.c.l.b16 %v204
      %v419 = vunpack.c.l.b16 %v205
      %v420 = vunpack.c.l.b16 %v206
      %v421 = vunpack.c.l.b16 %v207
      %v422 = vunpack.c.l.b16 %v208
      %v423 = vunpack.c.l.b16 %v209
      %v424 = vunpack.c.l.b16 %v210
      %v425 = vunpack.c.l.b16 %v211
      %v426 = vunpack.c.l.b16 %v212
      %v427 = vunpack.c.l.b16 %v213
      %v428 = vunpack.c.l.b16 %v214
      %v429 = vunpack.c.l.b16 %v215
      %v430 = vunpack.c.l.b16 %v216
      %v431 = vunpack.c.l.b16 %v217
      %v432 = vunpack.c.l.b16 %v218
      %v433 = vunpack.c.l.b16 %v219
      %v434 = vunpack.c.l.b16 %v220
      %v435 = vunpack.c.l.b16 %v221
      %v436 = vunpack.c.l.b16 %v222
      %v437 = vunpack.c.l.b16 %v223
      %v438 = vunpack.c.l.b16 %v224
      %v439 = vunpack.c.l.b16 %v225
      %v440 = vunpack.c.l.b16 %v226
      %v441 = vunpack.c.l.b16 %v227
      %v442 = vunpack.c.l.b16 %v228
      %v443 = vunpack.c.l.b16 %v229
      %v444 = vunpack.c.l.b16 %v230
      %v445 = vunpack.c.l.b16 %v231
      %v446 = vunpack.c.l.b16 %v232
      %v447 = vunpack.c.l.b16 %v233
      %v448 = vunpack.c.l.b16 %v234
      %v449 = vunpack.c.l.b16 %v235
      %v450 = vunpack.c.l.b16 %v236
      %v451 = vunpack.c.l.b16 %v237
      %v452 = vunpack.c.l.b16 %v238
      %v453 = vunpack.c.l.b16 %v239
      %v454 = vunpack.c.l.b16 %v240
      %v455 = vunpack.c.l.b16 %v241
      %v456 = vunpack.c.l.b16 %v242
      %v457 = vunpack.c.l.b16 %v243
      %v458 = vunpack.c.l.b16 %v244
      %v459 = vunpack.c.l.b16 %v245
      %v460 = vunpack.c.l.b16 %v246
      %v461 = vunpack.c.l.b16 %v247
      %v462 = vunpack.c.l.b16 %v248
      %v463 = vunpack.c.l.b16 %v249
      %v464 = vunpack.c.l.b16 %v250
      %v465 = vunpack.c.l.b16 %v251
      %v466 = vunpack.c.l.b16 %v252
      %v467 = vunpack.c.l.b16 %v253
      %v468 = vunpack.c.l.b16 %v254
      %v469 = vunpack.c.l.b16 %v255
      %v470 = vunpack.c.l.b16 %v256
      %v471 = vunpack.c.l.b16 %v257
      %v472 = vunpack.c.l.b16 %v258
      %v473 = vunpack.c.l.b16 %v259
      %v474 = vunpack.c.l.b16 %v260
      %v475 = vunpack.c.l.b16 %v261
      %v476 = vunpack.c.l.b16 %v262
      %v477 = vunpack.c.l.b16 %v263
      %v478 = vunpack.c.l.b16 %v264
      %v479 = vunpack.c.l.b16 %v265
      %v480 = vunpack.c.l.b16 %v266
      %v481 = vunpack.c.l.b16 %v267
      %v482 = vunpack.c.l.b16 %v268
      %v483 = vpack.c.b16 %v388, %v387
      %v484 = vpack.c.b16 %v390, %v389
      %v485 = vpack.c.b16 %v392, %v391
      %v486 = vpack.c.b16 %v394, %v393
      %v487 = vpack.c.b16 %v396, %v395
      %v488 = vpack.c.b16 %v398, %v397
      %v489 = vpack.c.b16 %v400, %v399
      %v490 = vpack.c.b16 %v402, %v401
      %v491 = vpack.c.b16 %v404, %v403
      %v492 = vpack.c.b16 %v406, %v405
      %v493 = vpack.c.b16 %v408, %v407
      %v494 = vpack.c.b16 %v410, %v409
      %v495 = vpack.c.b16 %v412, %v411
      %v496 = vpack.c.b16 %v414, %v413
      %v497 = vpack.c.b16 %v416, %v415
      %v498 = vpack.c.b16 %v418, %v417
      %v499 = vpack.c.b16 %v420, %v419
      %v500 = vpack.c.b16 %v422, %v421
      %v501 = vpack.c.b16 %v424, %v423
      %v502 = vpack.c.b16 %v426, %v425
      %v503 = vpack.c.b16 %v428, %v427
      %v504 = vpack.c.b16 %v430, %v429
      %v505 = vpack.c.b16 %v432, %v431
      %v506 = vpack.c.b16 %v434, %v433
      %v507 = vpack.c.b16 %v436, %v435
      %v508 = vpack.c.b16 %v438, %v437
      %v509 = vpack.c.b16 %v440, %v439
      %v510 = vpack.c.b16 %v442, %v441
      %v511 = vpack.c.b16 %v444, %v443
      %v512 = vpack.c.b16 %v446, %v445
      %v513 = vpack.c.b16 %v448, %v447
      %v514 = vpack.c.b16 %v450, %v449
      %v515 = vpack.c.b16 %v452, %v451
      %v516 = vpack.c.b16 %v454, %v453
      %v517 = vpack.c.b16 %v456, %v455
      %v518 = vpack.c.b16 %v458, %v457
      %v519 = vpack.c.b16 %v460, %v459
      %v520 = vpack.c.b16 %v462, %v461
      %v521 = vpack.c.b16 %v464, %v463
      %v522 = vpack.c.b16 %v466, %v465
      %v523 = vpack.c.b16 %v468, %v467
      %v524 = vpack.c.b16 %v470, %v469
      %v525 = vpack.c.b16 %v472, %v471
      %v526 = vpack.c.b16 %v474, %v473
      %v527 = vpack.c.b16 %v476, %v475
      %v528 = vpack.c.b16 %v478, %v477
      %v529 = vpack.c.b16 %v480, %v479
      %v530 = vpack.c.b16 %v482, %v481
      %579 = vmatprep.subr.bf16.mxu0 0
      %580 = vmatpush1.bf16.msra.mxu0 %v483
      %581 = vmatprep.subr.bf16.mxu0 0
      %582 = vmatpush1.bf16.msra.mxu0 %v484
      %583 = vmatprep.subr.bf16.mxu0 0
      %584 = vmatpush1.bf16.msra.mxu0 %v485
      %585 = vmatprep.subr.bf16.mxu0 0
      %586 = vmatpush1.bf16.msra.mxu0 %v486
      %587 = vmatprep.subr.bf16.mxu0 0
      %588 = vmatpush1.bf16.msra.mxu0 %v487
      %589 = vmatprep.subr.bf16.mxu0 0
      %590 = vmatpush1.bf16.msra.mxu0 %v488
      %591 = vmatprep.subr.bf16.mxu0 0
      %592 = vmatpush1.bf16.msra.mxu0 %v489
      %593 = vmatprep.subr.bf16.mxu0 0
      %594 = vmatpush1.bf16.msra.mxu0 %v490
      %595 = vmatprep.subr.bf16.mxu0 0
      %596 = vmatpush1.bf16.msra.mxu0 %v491
      %597 = vmatprep.subr.bf16.mxu0 0
      %598 = vmatpush1.bf16.msra.mxu0 %v492
      %599 = vmatprep.subr.bf16.mxu0 0
      %600 = vmatpush1.bf16.msra.mxu0 %v493
      %601 = vmatprep.subr.bf16.mxu0 0
      %602 = vmatpush1.bf16.msra.mxu0 %v494
      %603 = vmatprep.subr.bf16.mxu0 0
      %604 = vmatpush1.bf16.msra.mxu0 %v495
      %605 = vmatprep.subr.bf16.mxu0 0
      %606 = vmatpush1.bf16.msra.mxu0 %v496
      %607 = vmatprep.subr.bf16.mxu0 0
      %608 = vmatpush1.bf16.msra.mxu0 %v497
      %609 = vmatprep.subr.bf16.mxu0 0
      %610 = vmatpush1.bf16.msra.mxu0 %v498
      %611 = vmatprep.mubr.bf16.mxu0 %v280
      %612 = vmatmul.mubr.bf16.gmra.mrb[0].mxu0 %v279
      %v613 = vpop.f32.mrb[0].mxu0
      %v614 = vadd.f32 %v269, %v613
      %v615 = vpop.f32.mrb[0].mxu0
      %v616 = vpop.f32.mrb[0].mxu0
      %v617 = vpop.f32.mrb[0].mxu0
      %618 = vdwg.mxu0
      %619 = vmatprep.subr.bf16.mxu0 0
      %620 = vmatpush1.bf16.msra.mxu0 %v499
      %621 = vmatprep.subr.bf16.mxu0 0
      %622 = vmatpush1.bf16.msra.mxu0 %v500
      %623 = vmatprep.subr.bf16.mxu0 0
      %624 = vmatpush1.bf16.msra.mxu0 %v501
      %625 = vmatprep.subr.bf16.mxu0 0
      %626 = vmatpush1.bf16.msra.mxu0 %v502
      %627 = vmatprep.subr.bf16.mxu0 0
      %628 = vmatpush1.bf16.msra.mxu0 %v503
      %629 = vmatprep.subr.bf16.mxu0 0
      %630 = vmatpush1.bf16.msra.mxu0 %v504
      %631 = vmatprep.subr.bf16.mxu0 0
      %632 = vmatpush1.bf16.msra.mxu0 %v505
      %633 = vmatprep.subr.bf16.mxu0 0
      %634 = vmatpush1.bf16.msra.mxu0 %v506
      %635 = vmatprep.subr.bf16.mxu0 0
      %636 = vmatpush1.bf16.msra.mxu0 %v507
      %637 = vmatprep.subr.bf16.mxu0 0
      %638 = vmatpush1.bf16.msra.mxu0 %v508
      %639 = vmatprep.subr.bf16.mxu0 0
      %640 = vmatpush1.bf16.msra.mxu0 %v509
      %641 = vmatprep.subr.bf16.mxu0 0
      %642 = vmatpush1.bf16.msra.mxu0 %v510
      %643 = vmatprep.subr.bf16.mxu0 0
      %644 = vmatpush1.bf16.msra.mxu0 %v511
      %645 = vmatprep.subr.bf16.mxu0 0
      %646 = vmatpush1.bf16.msra.mxu0 %v512
      %647 = vmatprep.subr.bf16.mxu0 0
      %648 = vmatpush1.bf16.msra.mxu0 %v513
      %649 = vmatprep.subr.bf16.mxu0 0
      %650 = vmatpush1.bf16.msra.mxu0 %v514
      %651 = vmatprep.mubr.bf16.mxu0 %v282
      %652 = vmatmul.mubr.bf16.gmra.mrb[0].mxu0 %v281
      %v653 = vpop.f32.mrb[0].mxu0
      %v654 = vadd.f32 %v614, %v653
      %v655 = vpop.f32.mrb[0].mxu0
      %v656 = vpop.f32.mrb[0].mxu0
      %v657 = vpop.f32.mrb[0].mxu0
      %658 = vdwg.mxu0
      %659 = vmatprep.subr.bf16.mxu0 0
      %660 = vmatpush1.bf16.msra.mxu0 %v515
      %661 = vmatprep.subr.bf16.mxu0 0
      %662 = vmatpush1.bf16.msra.mxu0 %v516
      %663 = vmatprep.subr.bf16.mxu0 0
      %664 = vmatpush1.bf16.msra.mxu0 %v517
      %665 = vmatprep.subr.bf16.mxu0 0
      %666 = vmatpush1.bf16.msra.mxu0 %v518
      %667 = vmatprep.subr.bf16.mxu0 0
      %668 = vmatpush1.bf16.msra.mxu0 %v519
      %669 = vmatprep.subr.bf16.mxu0 0
      %670 = vmatpush1.bf16.msra.mxu0 %v520
      %671 = vmatprep.subr.bf16.mxu0 0
      %672 = vmatpush1.bf16.msra.mxu0 %v521
      %673 = vmatprep.subr.bf16.mxu0 0
      %674 = vmatpush1.bf16.msra.mxu0 %v522
      %675 = vmatprep.subr.bf16.mxu0 0
      %676 = vmatpush1.bf16.msra.mxu0 %v523
      %677 = vmatprep.subr.bf16.mxu0 0
      %678 = vmatpush1.bf16.msra.mxu0 %v524
      %679 = vmatprep.subr.bf16.mxu0 0
      %680 = vmatpush1.bf16.msra.mxu0 %v525
      %681 = vmatprep.subr.bf16.mxu0 0
      %682 = vmatpush1.bf16.msra.mxu0 %v526
      %683 = vmatprep.subr.bf16.mxu0 0
      %684 = vmatpush1.bf16.msra.mxu0 %v527
      %685 = vmatprep.subr.bf16.mxu0 0
      %686 = vmatpush1.bf16.msra.mxu0 %v528
      %687 = vmatprep.subr.bf16.mxu0 0
      %688 = vmatpush1.bf16.msra.mxu0 %v529
      %689 = vmatprep.subr.bf16.mxu0 0
      %690 = vmatpush1.bf16.msra.mxu0 %v530
      %691 = vmatprep.mubr.bf16.mxu0 %v284
      %692 = vmatmul.mubr.bf16.gmra.mrb[0].mxu0 %v283
      %v693 = vpop.f32.mrb[0].mxu0
      %v694 = vadd.f32 %v654, %v693
      %v695 = vpop.f32.mrb[0].mxu0
      %v696 = vpop.f32.mrb[0].mxu0
      %v697 = vpop.f32.mrb[0].mxu0
      %698 = vdwg.mxu0
      %v699 = vpack.c.bf16 %v694, %v694
      %700 = vst [vmem:[%s168] sm:$0xf] %v699
      %p701 = scmp.lt.s32.totalorder %s14, 1
      %s702 = scalar_select %p701, %s14, 1
      %s703 = smul.addr %s702, 4
      %s704 = scalar_lea.vmem %s3, %s703
      // Predicated region
      $region33: #{vit_relu_forward.3} parent=31 // pred_check
        %p705 = pneg %p100
      $region34: #{vit_relu_forward.3} parent=31 // pred_check_branch
        %707 = sbr.rel (%p705) target = $region36
      $region35: #{vit_relu_forward.3} parent=31 // pred_region
        _
      $region36: #{vit_relu_forward.3} parent=31 // pred_fallthru
        _
    $region32: #{vit_relu_forward.3} parent=5 // pred_fallthru
      _
    %p708 = scmp.le.s32.totalorder 2, %s9
    // Predicated region
    $region37: #{vit_relu_forward.3} parent=5 // pred_check
      %p709 = pneg %p708
    $region38: #{vit_relu_forward.3} parent=5 // pred_check_branch
      %711 = sbr.rel (%p709) target = $region40
    $region39: #{vit_relu_forward.3} parent=5 // pred_region
      %s712 = ssub.s32 %s9, 2
      // Predicated region
      $region41: #{vit_relu_forward.3} parent=39 // pred_check
        %p713 = pneg %p106
      $region42: #{vit_relu_forward.3} parent=39 // pred_check_branch
        %715 = sbr.rel (%p713) target = $region44
      $region43: #{vit_relu_forward.3} parent=39 // pred_region
        %p716 = scmp.lt.s32.totalorder %s15, 1
        %s717 = scalar_select %p716, %s15, 1
        %s718 = smul.addr %s717, 4
        %s719 = scalar_lea.vmem %s3, %s718
      $region44: #{vit_relu_forward.3} parent=39 // pred_fallthru
        _
    $region40: #{vit_relu_forward.3} parent=5 // pred_fallthru
      _
  $region6: #{vit_relu_forward.3} parent=0 // loop_footer
    %s13 = sadd.s32 1, %s9
  $region7: #{vit_relu_forward.3} parent=0 // loop_footer_branch
    %8 = sbr.rel target = $region3
  $region8: #{vit_relu_forward.3} parent=0 // loop_exit
    _

// kernel: vit_relu_forward.4
$region0: #{vit_relu_forward.4}
  #allocation0 [shape = 'u32[]', space=smem, size = 0x4, offset = 0x4, fixed_abs, tag = 'smem constant byte address 0x4 - core index']
  #allocation1 [shape = 'u32[144,128]{1,0:T(1,128)}', space=vmem, size = 0x12000, scoped, tag = 'internal scratch']
  #allocation2 [shape = 'f32[8,128]{1,0:T(8,128)}', space=vmem, size = 0x1000, scoped, tag = 'scratch operand']
  %s0 = inlined_call_operand.vmem [shape: bf16[2,8,128], index: 0, kind: input, shape index: {}]
  %s1 = inlined_call_operand.vmem [shape: f32[2,1,128], index: 1, kind: input, shape index: {}]
  %s2 = inlined_call_operand.vmem [shape: f32[2,1,128], index: 2, kind: input, shape index: {}]
  %s3 = inlined_call_operand.vmem [shape: bf16[2,2,128,64], index: 3, kind: input, shape index: {}]
  %s4 = inlined_call_operand.vmem [shape: f32[2,2,1,64], index: 4, kind: input, shape index: {}]
  %s5 = inlined_call_operand.vmem [shape: bf16[2,2,128,64], index: 5, kind: input, shape index: {}]
  %s6 = inlined_call_operand.vmem [shape: f32[2,2,1,64], index: 6, kind: input, shape index: {}]
  %s7 = inlined_call_operand.vmem [shape: bf16[2,2,128,64], index: 7, kind: input, shape index: {}]
  %s8 = inlined_call_operand.vmem [shape: f32[2,2,1,64], index: 8, kind: input, shape index: {}]
  %s9 = inlined_call_operand.vmem [shape: bf16[2,128,128], index: 9, kind: input, shape index: {}]
  %s10 = inlined_call_operand.vmem [shape: f32[2,1,128], index: 10, kind: input, shape index: {}]
  %s11 = inlined_call_operand.vmem [shape: f32[2,1,128], index: 11, kind: input, shape index: {}]
  %s12 = inlined_call_operand.vmem [shape: f32[2,1,128], index: 12, kind: input, shape index: {}]
  %s13 = inlined_call_operand.vmem [shape: bf16[2,128,256], index: 13, kind: input, shape index: {}]
  %s14 = inlined_call_operand.vmem [shape: f32[2,1,256], index: 14, kind: input, shape index: {}]
  %s15 = inlined_call_operand.vmem [shape: bf16[2,256,128], index: 15, kind: input, shape index: {}]
  %s16 = inlined_call_operand.vmem [shape: f32[2,1,128], index: 16, kind: input, shape index: {}]
  %s17 = inlined_call_operand.vmem [shape: bf16[2,8,128], index: 17, kind: output, shape index: {}]
  %s18 = sld [smem:[#allocation0]]
  $region109: #{vit_relu_forward.4} parent=0
    _
  %s20 = ssub.s32 1, %s18
  %s21 = scalar_select 0, %s20, %s18
  loop: start=0, step=1, limit=6
  $region2: #{vit_relu_forward.4} parent=0 // loop_pre_header
    _
  $region3: #{vit_relu_forward.4} parent=0 // loop_header
    %s23 = sphi 0, %s27
    %p24 = scmp.ge.s32.totalorder %s23, 6
    %s30 = sphi 0, %s42
    %s31 = sphi 0, %s38
    %s32 = sphi 0, %s30
    %s33 = sphi 0, %s31
    %s34 = sphi 0, %s32
    %s35 = sphi 0, %s33
    %s45 = sphi 0, %s47
    %s48 = sphi 0, %s45
    %s49 = sphi 0, %s48
    %s65 = sphi 0, %s49
    %s71 = sphi 0, %s73
    %s74 = sphi 0, %s71
    %s75 = sphi 0, %s74
    %s91 = sphi 0, %s75
    %s97 = sphi 0, %s99
    %s100 = sphi 0, %s97
    %s101 = sphi 0, %s100
    %s117 = sphi 0, %s101
    %s123 = sphi 0, %s125
    %s126 = sphi 0, %s123
    %s127 = sphi 0, %s126
    %s143 = sphi 0, %s127
    %s149 = sphi 0, %s151
    %s152 = sphi 0, %s149
    %s153 = sphi 0, %s152
    %s169 = sphi 0, %s153
    %s175 = sphi 0, %s177
    %s178 = sphi 0, %s175
    %s179 = sphi 0, %s178
    %s195 = sphi 0, %s179
    %s201 = sphi 0, %s203
    %s204 = sphi 0, %s201
    %s205 = sphi 0, %s204
    %s221 = sphi 0, %s205
    %s227 = sphi 0, %s229
    %s230 = sphi 0, %s227
    %s231 = sphi 0, %s230
    %s247 = sphi 0, %s231
    %s253 = sphi 0, %s255
    %s256 = sphi 0, %s253
    %s257 = sphi 0, %s256
    %s273 = sphi 0, %s257
    %s279 = sphi 0, %s281
    %s282 = sphi 0, %s279
    %s283 = sphi 0, %s282
    %s299 = sphi 0, %s283
    %s305 = sphi 0, %s307
    %s308 = sphi 0, %s305
    %s309 = sphi 0, %s308
    %s325 = sphi 0, %s309
    %s331 = sphi 0, %s333
    %s334 = sphi 0, %s331
    %s335 = sphi 0, %s334
    %s351 = sphi 0, %s335
    %s357 = sphi 0, %s359
    %s360 = sphi 0, %s357
    %s361 = sphi 0, %s360
    %s377 = sphi 0, %s361
    %s383 = sphi 0, %s385
    %s386 = sphi 0, %s383
    %s387 = sphi 0, %s386
    %s403 = sphi 0, %s387
    %s409 = sphi 0, %s411
    %s412 = sphi 0, %s409
    %s413 = sphi 0, %s412
    %s429 = sphi 0, %s413
    %s435 = sphi 0, %s437
    %s438 = sphi 0, %s435
    %s439 = sphi 0, %s438
    %s455 = sphi 0, %s439
    %s461 = sphi 0, %s463
    %s464 = sphi 0, %s461
    %s465 = sphi 0, %s464
    %s481 = sphi 0, %s465
    %s487 = sphi 0, %s489
    %s490 = sphi 0, %s487
    %s491 = sphi 0, %s490
    %s507 = sphi 0, %s491
  $region4: #{vit_relu_forward.4} parent=0 // loop_header_branch
    %26 = sbr.rel (%p24) target = $region8
  $region5: #{vit_relu_forward.4} parent=0 // loop_body
    %s28 = ssub.s32 %s23, 1
    %s29 = ssub.s32 %s23, 2
    %s36 = sadd.s32 1, %s31
    %p37 = scmp.ge.s32.totalorder %s36, 2
    %s38 = scalar_select %p37, 0, %s36
    %s39 = sadd.s32 1, %s30
    %s40 = scalar_select %p37, %s39, %s30
    %p41 = scmp.ge.s32.totalorder %s40, 2
    %s42 = scalar_select %p41, 0, %s40
    %s43 = ssub.s32 %s30, %s42
    %p44 = scmp.eq.s32.totalorder %s43, 0
    %s46 = sadd.s32 %s45, 1
    %s47 = scalar_select %p44, %s45, %s46
    %p50 = pneg %p44
    %p51 = scmp.eq.s32.totalorder %s23, 3
    %p52 = por %p50, %p51
    %p53 = scmp.ne.s32.totalorder %s45, %s48
    %p54 = scmp.eq.s32.totalorder %s23, 0
    %p55 = por %p53, %p54
    %p56 = scmp.ne.s32.totalorder %s45, %s48
    %p57 = scmp.eq.s32.totalorder %s28, 3
    %p58 = por %p56, %p57
    %p59 = scmp.ne.s32.totalorder %s48, %s49
    %p60 = scmp.eq.s32.totalorder %s28, 0
    %p61 = por %p59, %p60
    %p62 = scmp.ne.s32.totalorder %s48, %s49
    %p63 = scmp.eq.s32.totalorder %s29, 3
    %p64 = por %p62, %p63
    %p66 = scmp.ne.s32.totalorder %s49, %s65
    %p67 = scmp.eq.s32.totalorder %s29, 0
    %p68 = por %p66, %p67
    %s69 = ssub.s32 %s31, %s38
    %p70 = scmp.eq.s32.totalorder %s69, 0
    %s72 = sadd.s32 %s71, 1
    %s73 = scalar_select %p70, %s71, %s72
    %p76 = pneg %p70
    %p77 = scmp.eq.s32.totalorder %s23, 3
    %p78 = por %p76, %p77
    %p79 = scmp.ne.s32.totalorder %s71, %s74
    %p80 = scmp.eq.s32.totalorder %s23, 0
    %p81 = por %p79, %p80
    %p82 = scmp.ne.s32.totalorder %s71, %s74
    %p83 = scmp.eq.s32.totalorder %s28, 3
    %p84 = por %p82, %p83
    %p85 = scmp.ne.s32.totalorder %s74, %s75
    %p86 = scmp.eq.s32.totalorder %s28, 0
    %p87 = por %p85, %p86
    %p88 = scmp.ne.s32.totalorder %s74, %s75
    %p89 = scmp.eq.s32.totalorder %s29, 3
    %p90 = por %p88, %p89
    %p92 = scmp.ne.s32.totalorder %s75, %s91
    %p93 = scmp.eq.s32.totalorder %s29, 0
    %p94 = por %p92, %p93
    %s95 = ssub.s32 %s31, %s38
    %p96 = scmp.eq.s32.totalorder %s95, 0
    %s98 = sadd.s32 %s97, 1
    %s99 = scalar_select %p96, %s97, %s98
    %p102 = pneg %p96
    %p103 = scmp.eq.s32.totalorder %s23, 3
    %p104 = por %p102, %p103
    %p105 = scmp.ne.s32.totalorder %s97, %s100
    %p106 = scmp.eq.s32.totalorder %s23, 0
    %p107 = por %p105, %p106
    %p108 = scmp.ne.s32.totalorder %s97, %s100
    %p109 = scmp.eq.s32.totalorder %s28, 3
    %p110 = por %p108, %p109
    %p111 = scmp.ne.s32.totalorder %s100, %s101
    %p112 = scmp.eq.s32.totalorder %s28, 0
    %p113 = por %p111, %p112
    %p114 = scmp.ne.s32.totalorder %s100, %s101
    %p115 = scmp.eq.s32.totalorder %s29, 3
    %p116 = por %p114, %p115
    %p118 = scmp.ne.s32.totalorder %s101, %s117
    %p119 = scmp.eq.s32.totalorder %s29, 0
    %p120 = por %p118, %p119
    %s121 = ssub.s32 %s31, %s38
    %p122 = scmp.eq.s32.totalorder %s121, 0
    %s124 = sadd.s32 %s123, 1
    %s125 = scalar_select %p122, %s123, %s124
    %p128 = pneg %p122
    %p129 = scmp.eq.s32.totalorder %s23, 3
    %p130 = por %p128, %p129
    %p131 = scmp.ne.s32.totalorder %s123, %s126
    %p132 = scmp.eq.s32.totalorder %s23, 0
    %p133 = por %p131, %p132
    %p134 = scmp.ne.s32.totalorder %s123, %s126
    %p135 = scmp.eq.s32.totalorder %s28, 3
    %p136 = por %p134, %p135
    %p137 = scmp.ne.s32.totalorder %s126, %s127
    %p138 = scmp.eq.s32.totalorder %s28, 0
    %p139 = por %p137, %p138
    %p140 = scmp.ne.s32.totalorder %s126, %s127
    %p141 = scmp.eq.s32.totalorder %s29, 3
    %p142 = por %p140, %p141
    %p144 = scmp.ne.s32.totalorder %s127, %s143
    %p145 = scmp.eq.s32.totalorder %s29, 0
    %p146 = por %p144, %p145
    %s147 = ssub.s32 %s31, %s38
    %p148 = scmp.eq.s32.totalorder %s147, 0
    %s150 = sadd.s32 %s149, 1
    %s151 = scalar_select %p148, %s149, %s150
    %p154 = pneg %p148
    %p155 = scmp.eq.s32.totalorder %s23, 3
    %p156 = por %p154, %p155
    %p157 = scmp.ne.s32.totalorder %s149, %s152
    %p158 = scmp.eq.s32.totalorder %s23, 0
    %p159 = por %p157, %p158
    %p160 = scmp.ne.s32.totalorder %s149, %s152
    %p161 = scmp.eq.s32.totalorder %s28, 3
    %p162 = por %p160, %p161
    %p163 = scmp.ne.s32.totalorder %s152, %s153
    %p164 = scmp.eq.s32.totalorder %s28, 0
    %p165 = por %p163, %p164
    %p166 = scmp.ne.s32.totalorder %s152, %s153
    %p167 = scmp.eq.s32.totalorder %s29, 3
    %p168 = por %p166, %p167
    %p170 = scmp.ne.s32.totalorder %s153, %s169
    %p171 = scmp.eq.s32.totalorder %s29, 0
    %p172 = por %p170, %p171
    %s173 = ssub.s32 %s31, %s38
    %p174 = scmp.eq.s32.totalorder %s173, 0
    %s176 = sadd.s32 %s175, 1
    %s177 = scalar_select %p174, %s175, %s176
    %p180 = pneg %p174
    %p181 = scmp.eq.s32.totalorder %s23, 3
    %p182 = por %p180, %p181
    %p183 = scmp.ne.s32.totalorder %s175, %s178
    %p184 = scmp.eq.s32.totalorder %s23, 0
    %p185 = por %p183, %p184
    %p186 = scmp.ne.s32.totalorder %s175, %s178
    %p187 = scmp.eq.s32.totalorder %s28, 3
    %p188 = por %p186, %p187
    %p189 = scmp.ne.s32.totalorder %s178, %s179
    %p190 = scmp.eq.s32.totalorder %s28, 0
    %p191 = por %p189, %p190
    %p192 = scmp.ne.s32.totalorder %s178, %s179
    %p193 = scmp.eq.s32.totalorder %s29, 3
    %p194 = por %p192, %p193
    %p196 = scmp.ne.s32.totalorder %s179, %s195
    %p197 = scmp.eq.s32.totalorder %s29, 0
    %p198 = por %p196, %p197
    %s199 = ssub.s32 %s31, %s38
    %p200 = scmp.eq.s32.totalorder %s199, 0
    %s202 = sadd.s32 %s201, 1
    %s203 = scalar_select %p200, %s201, %s202
    %p206 = pneg %p200
    %p207 = scmp.eq.s32.totalorder %s23, 3
    %p208 = por %p206, %p207
    %p209 = scmp.ne.s32.totalorder %s201, %s204
    %p210 = scmp.eq.s32.totalorder %s23, 0
    %p211 = por %p209, %p210
    %p212 = scmp.ne.s32.totalorder %s201, %s204
    %p213 = scmp.eq.s32.totalorder %s28, 3
    %p214 = por %p212, %p213
    %p215 = scmp.ne.s32.totalorder %s204, %s205
    %p216 = scmp.eq.s32.totalorder %s28, 0
    %p217 = por %p215, %p216
    %p218 = scmp.ne.s32.totalorder %s204, %s205
    %p219 = scmp.eq.s32.totalorder %s29, 3
    %p220 = por %p218, %p219
    %p222 = scmp.ne.s32.totalorder %s205, %s221
    %p223 = scmp.eq.s32.totalorder %s29, 0
    %p224 = por %p222, %p223
    %s225 = ssub.s32 %s31, %s38
    %p226 = scmp.eq.s32.totalorder %s225, 0
    %s228 = sadd.s32 %s227, 1
    %s229 = scalar_select %p226, %s227, %s228
    %p232 = pneg %p226
    %p233 = scmp.eq.s32.totalorder %s23, 3
    %p234 = por %p232, %p233
    %p235 = scmp.ne.s32.totalorder %s227, %s230
    %p236 = scmp.eq.s32.totalorder %s23, 0
    %p237 = por %p235, %p236
    %p238 = scmp.ne.s32.totalorder %s227, %s230
    %p239 = scmp.eq.s32.totalorder %s28, 3
    %p240 = por %p238, %p239
    %p241 = scmp.ne.s32.totalorder %s230, %s231
    %p242 = scmp.eq.s32.totalorder %s28, 0
    %p243 = por %p241, %p242
    %p244 = scmp.ne.s32.totalorder %s230, %s231
    %p245 = scmp.eq.s32.totalorder %s29, 3
    %p246 = por %p244, %p245
    %p248 = scmp.ne.s32.totalorder %s231, %s247
    %p249 = scmp.eq.s32.totalorder %s29, 0
    %p250 = por %p248, %p249
    %s251 = ssub.s32 %s31, %s38
    %p252 = scmp.eq.s32.totalorder %s251, 0
    %s254 = sadd.s32 %s253, 1
    %s255 = scalar_select %p252, %s253, %s254
    %p258 = pneg %p252
    %p259 = scmp.eq.s32.totalorder %s23, 3
    %p260 = por %p258, %p259
    %p261 = scmp.ne.s32.totalorder %s253, %s256
    %p262 = scmp.eq.s32.totalorder %s23, 0
    %p263 = por %p261, %p262
    %p264 = scmp.ne.s32.totalorder %s253, %s256
    %p265 = scmp.eq.s32.totalorder %s28, 3
    %p266 = por %p264, %p265
    %p267 = scmp.ne.s32.totalorder %s256, %s257
    %p268 = scmp.eq.s32.totalorder %s28, 0
    %p269 = por %p267, %p268
    %p270 = scmp.ne.s32.totalorder %s256, %s257
    %p271 = scmp.eq.s32.totalorder %s29, 3
    %p272 = por %p270, %p271
    %p274 = scmp.ne.s32.totalorder %s257, %s273
    %p275 = scmp.eq.s32.totalorder %s29, 0
    %p276 = por %p274, %p275
    %s277 = ssub.s32 %s31, %s38
    %p278 = scmp.eq.s32.totalorder %s277, 0
    %s280 = sadd.s32 %s279, 1
    %s281 = scalar_select %p278, %s279, %s280
    %p284 = pneg %p278
    %p285 = scmp.eq.s32.totalorder %s23, 3
    %p286 = por %p284, %p285
    %p287 = scmp.ne.s32.totalorder %s279, %s282
    %p288 = scmp.eq.s32.totalorder %s23, 0
    %p289 = por %p287, %p288
    %p290 = scmp.ne.s32.totalorder %s279, %s282
    %p291 = scmp.eq.s32.totalorder %s28, 3
    %p292 = por %p290, %p291
    %p293 = scmp.ne.s32.totalorder %s282, %s283
    %p294 = scmp.eq.s32.totalorder %s28, 0
    %p295 = por %p293, %p294
    %p296 = scmp.ne.s32.totalorder %s282, %s283
    %p297 = scmp.eq.s32.totalorder %s29, 3
    %p298 = por %p296, %p297
    %p300 = scmp.ne.s32.totalorder %s283, %s299
    %p301 = scmp.eq.s32.totalorder %s29, 0
    %p302 = por %p300, %p301
    %s303 = ssub.s32 %s31, %s38
    %p304 = scmp.eq.s32.totalorder %s303, 0
    %s306 = sadd.s32 %s305, 1
    %s307 = scalar_select %p304, %s305, %s306
    %p310 = pneg %p304
    %p311 = scmp.eq.s32.totalorder %s23, 3
    %p312 = por %p310, %p311
    %p313 = scmp.ne.s32.totalorder %s305, %s308
    %p314 = scmp.eq.s32.totalorder %s23, 0
    %p315 = por %p313, %p314
    %p316 = scmp.ne.s32.totalorder %s305, %s308
    %p317 = scmp.eq.s32.totalorder %s28, 3
    %p318 = por %p316, %p317
    %p319 = scmp.ne.s32.totalorder %s308, %s309
    %p320 = scmp.eq.s32.totalorder %s28, 0
    %p321 = por %p319, %p320
    %p322 = scmp.ne.s32.totalorder %s308, %s309
    %p323 = scmp.eq.s32.totalorder %s29, 3
    %p324 = por %p322, %p323
    %p326 = scmp.ne.s32.totalorder %s309, %s325
    %p327 = scmp.eq.s32.totalorder %s29, 0
    %p328 = por %p326, %p327
    %s329 = ssub.s32 %s31, %s38
    %p330 = scmp.eq.s32.totalorder %s329, 0
    %s332 = sadd.s32 %s331, 1
    %s333 = scalar_select %p330, %s331, %s332
    %p336 = pneg %p330
    %p337 = scmp.eq.s32.totalorder %s23, 3
    %p338 = por %p336, %p337
    %p339 = scmp.ne.s32.totalorder %s331, %s334
    %p340 = scmp.eq.s32.totalorder %s23, 0
    %p341 = por %p339, %p340
    %p342 = scmp.ne.s32.totalorder %s331, %s334
    %p343 = scmp.eq.s32.totalorder %s28, 3
    %p344 = por %p342, %p343
    %p345 = scmp.ne.s32.totalorder %s334, %s335
    %p346 = scmp.eq.s32.totalorder %s28, 0
    %p347 = por %p345, %p346
    %p348 = scmp.ne.s32.totalorder %s334, %s335
    %p349 = scmp.eq.s32.totalorder %s29, 3
    %p350 = por %p348, %p349
    %p352 = scmp.ne.s32.totalorder %s335, %s351
    %p353 = scmp.eq.s32.totalorder %s29, 0
    %p354 = por %p352, %p353
    %s355 = ssub.s32 %s31, %s38
    %p356 = scmp.eq.s32.totalorder %s355, 0
    %s358 = sadd.s32 %s357, 1
    %s359 = scalar_select %p356, %s357, %s358
    %p362 = pneg %p356
    %p363 = scmp.eq.s32.totalorder %s23, 3
    %p364 = por %p362, %p363
    %p365 = scmp.ne.s32.totalorder %s357, %s360
    %p366 = scmp.eq.s32.totalorder %s23, 0
    %p367 = por %p365, %p366
    %p368 = scmp.ne.s32.totalorder %s357, %s360
    %p369 = scmp.eq.s32.totalorder %s28, 3
    %p370 = por %p368, %p369
    %p371 = scmp.ne.s32.totalorder %s360, %s361
    %p372 = scmp.eq.s32.totalorder %s28, 0
    %p373 = por %p371, %p372
    %p374 = scmp.ne.s32.totalorder %s360, %s361
    %p375 = scmp.eq.s32.totalorder %s29, 3
    %p376 = por %p374, %p375
    %p378 = scmp.ne.s32.totalorder %s361, %s377
    %p379 = scmp.eq.s32.totalorder %s29, 0
    %p380 = por %p378, %p379
    %s381 = ssub.s32 %s31, %s38
    %p382 = scmp.eq.s32.totalorder %s381, 0
    %s384 = sadd.s32 %s383, 1
    %s385 = scalar_select %p382, %s383, %s384
    %p388 = pneg %p382
    %p389 = scmp.eq.s32.totalorder %s23, 3
    %p390 = por %p388, %p389
    %p391 = scmp.ne.s32.totalorder %s383, %s386
    %p392 = scmp.eq.s32.totalorder %s23, 0
    %p393 = por %p391, %p392
    %p394 = scmp.ne.s32.totalorder %s383, %s386
    %p395 = scmp.eq.s32.totalorder %s28, 3
    %p396 = por %p394, %p395
    %p397 = scmp.ne.s32.totalorder %s386, %s387
    %p398 = scmp.eq.s32.totalorder %s28, 0
    %p399 = por %p397, %p398
    %p400 = scmp.ne.s32.totalorder %s386, %s387
    %p401 = scmp.eq.s32.totalorder %s29, 3
    %p402 = por %p400, %p401
    %p404 = scmp.ne.s32.totalorder %s387, %s403
    %p405 = scmp.eq.s32.totalorder %s29, 0
    %p406 = por %p404, %p405
    %s407 = ssub.s32 %s31, %s38
    %p408 = scmp.eq.s32.totalorder %s407, 0
    %s410 = sadd.s32 %s409, 1
    %s411 = scalar_select %p408, %s409, %s410
    %p414 = pneg %p408
    %p415 = scmp.eq.s32.totalorder %s23, 3
    %p416 = por %p414, %p415
    %p417 = scmp.ne.s32.totalorder %s409, %s412
    %p418 = scmp.eq.s32.totalorder %s23, 0
    %p419 = por %p417, %p418
    %p420 = scmp.ne.s32.totalorder %s409, %s412
    %p421 = scmp.eq.s32.totalorder %s28, 3
    %p422 = por %p420, %p421
    %p423 = scmp.ne.s32.totalorder %s412, %s413
    %p424 = scmp.eq.s32.totalorder %s28, 0
    %p425 = por %p423, %p424
    %p426 = scmp.ne.s32.totalorder %s412, %s413
    %p427 = scmp.eq.s32.totalorder %s29, 3
    %p428 = por %p426, %p427
    %p430 = scmp.ne.s32.totalorder %s413, %s429
    %p431 = scmp.eq.s32.totalorder %s29, 0
    %p432 = por %p430, %p431
    %s433 = ssub.s32 %s31, %s38
    %p434 = scmp.eq.s32.totalorder %s433, 0
    %s436 = sadd.s32 %s435, 1
    %s437 = scalar_select %p434, %s435, %s436
    %p440 = pneg %p434
    %p441 = scmp.eq.s32.totalorder %s23, 3
    %p442 = por %p440, %p441
    %p443 = scmp.ne.s32.totalorder %s435, %s438
    %p444 = scmp.eq.s32.totalorder %s23, 0
    %p445 = por %p443, %p444
    %p446 = scmp.ne.s32.totalorder %s435, %s438
    %p447 = scmp.eq.s32.totalorder %s28, 3
    %p448 = por %p446, %p447
    %p449 = scmp.ne.s32.totalorder %s438, %s439
    %p450 = scmp.eq.s32.totalorder %s28, 0
    %p451 = por %p449, %p450
    %p452 = scmp.ne.s32.totalorder %s438, %s439
    %p453 = scmp.eq.s32.totalorder %s29, 3
    %p454 = por %p452, %p453
    %p456 = scmp.ne.s32.totalorder %s439, %s455
    %p457 = scmp.eq.s32.totalorder %s29, 0
    %p458 = por %p456, %p457
    %s459 = ssub.s32 %s31, %s38
    %p460 = scmp.eq.s32.totalorder %s459, 0
    %s462 = sadd.s32 %s461, 1
    %s463 = scalar_select %p460, %s461, %s462
    %p466 = pneg %p460
    %p467 = scmp.eq.s32.totalorder %s23, 3
    %p468 = por %p466, %p467
    %p469 = scmp.ne.s32.totalorder %s461, %s464
    %p470 = scmp.eq.s32.totalorder %s23, 0
    %p471 = por %p469, %p470
    %p472 = scmp.ne.s32.totalorder %s461, %s464
    %p473 = scmp.eq.s32.totalorder %s28, 3
    %p474 = por %p472, %p473
    %p475 = scmp.ne.s32.totalorder %s464, %s465
    %p476 = scmp.eq.s32.totalorder %s28, 0
    %p477 = por %p475, %p476
    %p478 = scmp.ne.s32.totalorder %s464, %s465
    %p479 = scmp.eq.s32.totalorder %s29, 3
    %p480 = por %p478, %p479
    %p482 = scmp.ne.s32.totalorder %s465, %s481
    %p483 = scmp.eq.s32.totalorder %s29, 0
    %p484 = por %p482, %p483
    %s485 = ssub.s32 %s30, %s42
    %p486 = scmp.eq.s32.totalorder %s485, 0
    %s488 = sadd.s32 %s487, 1
    %s489 = scalar_select %p486, %s487, %s488
    %p492 = pneg %p486
    %p493 = scmp.eq.s32.totalorder %s23, 3
    %p494 = por %p492, %p493
    %p495 = scmp.ne.s32.totalorder %s487, %s490
    %p496 = scmp.eq.s32.totalorder %s23, 0
    %p497 = por %p495, %p496
    %p498 = scmp.ne.s32.totalorder %s487, %s490
    %p499 = scmp.eq.s32.totalorder %s28, 3
    %p500 = por %p498, %p499
    %p501 = scmp.ne.s32.totalorder %s490, %s491
    %p502 = scmp.eq.s32.totalorder %s28, 0
    %p503 = por %p501, %p502
    %p504 = scmp.ne.s32.totalorder %s490, %s491
    %p505 = scmp.eq.s32.totalorder %s29, 3
    %p506 = por %p504, %p505
    %p508 = scmp.ne.s32.totalorder %s491, %s507
    %p509 = scmp.eq.s32.totalorder %s29, 0
    %p510 = por %p508, %p509
    %p511 = scmp.le.s32.totalorder 1, %s23
    %p512 = scmp.lt.s32.totalorder %s23, 5
    %p513 = pnand %p511, %p512
    %p514 = pneg %p513
    // Predicated region
    $region9: #{vit_relu_forward.4} parent=5 // pred_check
      _
    $region10: #{vit_relu_forward.4} parent=5 // pred_check_branch
      %516 = sbr.rel (%p513) target = $region12
    $region11: #{vit_relu_forward.4} parent=5 // pred_region
      %s517 = ssub.s32 %s23, 1
    $region12: #{vit_relu_forward.4} parent=5 // pred_fallthru
      _
    %p518 = scmp.lt.s32.totalorder %s23, 4
    // Predicated region
    $region13: #{vit_relu_forward.4} parent=5 // pred_check
      %p519 = pneg %p518
    $region14: #{vit_relu_forward.4} parent=5 // pred_check_branch
      %521 = sbr.rel (%p519) target = $region16
    $region15: #{vit_relu_forward.4} parent=5 // pred_region
      // Predicated region
      $region17: #{vit_relu_forward.4} parent=15 // pred_check
        %p522 = pneg %p55
      $region18: #{vit_relu_forward.4} parent=15 // pred_check_branch
        %524 = sbr.rel (%p522) target = $region20
      $region19: #{vit_relu_forward.4} parent=15 // pred_region
        %p525 = scmp.lt.s32.totalorder %s30, 1
        %s526 = scalar_select %p525, %s30, 1
        %s527 = smul.addr %s526, 4
        %s528 = scalar_lea.vmem %s0, %s527
      $region20: #{vit_relu_forward.4} parent=15 // pred_fallthru
        _
      // Predicated region
      $region21: #{vit_relu_forward.4} parent=15 // pred_check
        %p529 = pneg %p81
      $region22: #{vit_relu_forward.4} parent=15 // pred_check_branch
        %531 = sbr.rel (%p529) target = $region24
      $region23: #{vit_relu_forward.4} parent=15 // pred_region
        %p532 = scmp.lt.s32.totalorder %s31, 1
        %s533 = scalar_select %p532, %s31, 1
        %s534 = scalar_lea.vmem %s1, %s533
      $region24: #{vit_relu_forward.4} parent=15 // pred_fallthru
        _
      // Predicated region
      $region25: #{vit_relu_forward.4} parent=15 // pred_check
        %p535 = pneg %p107
      $region26: #{vit_relu_forward.4} parent=15 // pred_check_branch
        %537 = sbr.rel (%p535) target = $region28
      $region27: #{vit_relu_forward.4} parent=15 // pred_region
        %p538 = scmp.lt.s32.totalorder %s31, 1
        %s539 = scalar_select %p538, %s31, 1
        %s540 = scalar_lea.vmem %s2, %s539
      $region28: #{vit_relu_forward.4} parent=15 // pred_fallthru
        _
      // Predicated region
      $region29: #{vit_relu_forward.4} parent=15 // pred_check
        %p541 = pneg %p133
      $region30: #{vit_relu_forward.4} parent=15 // pred_check_branch
        %543 = sbr.rel (%p541) target = $region32
      $region31: #{vit_relu_forward.4} parent=15 // pred_region
        %p544 = scmp.lt.s32.totalorder %s31, 1
        %s545 = scalar_select %p544, %s31, 1
        %s546 = smul.addr %s545, 32
        %s547 = smul.addr %s546, 4
        %s548 = scalar_lea.vmem %s3, %s547
      $region32: #{vit_relu_forward.4} parent=15 // pred_fallthru
        _
      // Predicated region
      $region33: #{vit_relu_forward.4} parent=15 // pred_check
        %p549 = pneg %p159
      $region34: #{vit_relu_forward.4} parent=15 // pred_check_branch
        %551 = sbr.rel (%p549) target = $region36
      $region35: #{vit_relu_forward.4} parent=15 // pred_region
        %p552 = scmp.lt.s32.totalorder %s31, 1
        %s553 = scalar_select %p552, %s31, 1
        %s554 = smul.addr %s553, 2
        %s555 = scalar_lea.vmem %s4, %s554
      $region36: #{vit_relu_forward.4} parent=15 // pred_fallthru
        _
      // Predicated region
      $region37: #{vit_relu_forward.4} parent=15 // pred_check
        %p556 = pneg %p185
      $region38: #{vit_relu_forward.4} parent=15 // pred_check_branch
        %558 = sbr.rel (%p556) target = $region40
      $region39: #{vit_relu_forward.4} parent=15 // pred_region
        %p559 = scmp.lt.s32.totalorder %s31, 1
        %s560 = scalar_select %p559, %s31, 1
        %s561 = smul.addr %s560, 32
        %s562 = smul.addr %s561, 4
        %s563 = scalar_lea.vmem %s5, %s562
      $region40: #{vit_relu_forward.4} parent=15 // pred_fallthru
        _
      // Predicated region
      $region41: #{vit_relu_forward.4} parent=15 // pred_check
        %p564 = pneg %p211
      $region42: #{vit_relu_forward.4} parent=15 // pred_check_branch
        %566 = sbr.rel (%p564) target = $region44
      $region43: #{vit_relu_forward.4} parent=15 // pred_region
        %p567 = scmp.lt.s32.totalorder %s31, 1
        %s568 = scalar_select %p567, %s31, 1
        %s569 = smul.addr %s568, 2
        %s570 = scalar_lea.vmem %s6, %s569
      $region44: #{vit_relu_forward.4} parent=15 // pred_fallthru
        _
      // Predicated region
      $region45: #{vit_relu_forward.4} parent=15 // pred_check
        %p571 = pneg %p237
      $region46: #{vit_relu_forward.4} parent=15 // pred_check_branch
        %573 = sbr.rel (%p571) target = $region48
      $region47: #{vit_relu_forward.4} parent=15 // pred_region
        %p574 = scmp.lt.s32.totalorder %s31, 1
        %s575 = scalar_select %p574, %s31, 1
        %s576 = smul.addr %s575, 32
        %s577 = smul.addr %s576, 4
        %s578 = scalar_lea.vmem %s7, %s577
      $region48: #{vit_relu_forward.4} parent=15 // pred_fallthru
        _
      // Predicated region
      $region49: #{vit_relu_forward.4} parent=15 // pred_check
        %p579 = pneg %p263
      $region50: #{vit_relu_forward.4} parent=15 // pred_check_branch
        %581 = sbr.rel (%p579) target = $region52
      $region51: #{vit_relu_forward.4} parent=15 // pred_region
        %p582 = scmp.lt.s32.totalorder %s31, 1
        %s583 = scalar_select %p582, %s31, 1
        %s584 = smul.addr %s583, 2
        %s585 = scalar_lea.vmem %s8, %s584
      $region52: #{vit_relu_forward.4} parent=15 // pred_fallthru
        _
      // Predicated region
      $region53: #{vit_relu_forward.4} parent=15 // pred_check
        %p586 = pneg %p289
      $region54: #{vit_relu_forward.4} parent=15 // pred_check_branch
        %588 = sbr.rel (%p586) target = $region56
      $region55: #{vit_relu_forward.4} parent=15 // pred_region
        %p589 = scmp.lt.s32.totalorder %s31, 1
        %s590 = scalar_select %p589, %s31, 1
        %s591 = smul.addr %s590, 16
        %s592 = smul.addr %s591, 4
        %s593 = scalar_lea.vmem %s9, %s592
      $region56: #{vit_relu_forward.4} parent=15 // pred_fallthru
        _
      // Predicated region
      $region57: #{vit_relu_forward.4} parent=15 // pred_check
        %p594 = pneg %p315
      $region58: #{vit_relu_forward.4} parent=15 // pred_check_branch
        %596 = sbr.rel (%p594) target = $region60
      $region59: #{vit_relu_forward.4} parent=15 // pred_region
        %p597 = scmp.lt.s32.totalorder %s31, 1
        %s598 = scalar_select %p597, %s31, 1
        %s599 = scalar_lea.vmem %s10, %s598
      $region60: #{vit_relu_forward.4} parent=15 // pred_fallthru
        _
      // Predicated region
      $region61: #{vit_relu_forward.4} parent=15 // pred_check
        %p600 = pneg %p341
      $region62: #{vit_relu_forward.4} parent=15 // pred_check_branch
        %602 = sbr.rel (%p600) target = $region64
      $region63: #{vit_relu_forward.4} parent=15 // pred_region
        %p603 = scmp.lt.s32.totalorder %s31, 1
        %s604 = scalar_select %p603, %s31, 1
        %s605 = scalar_lea.vmem %s11, %s604
      $region64: #{vit_relu_forward.4} parent=15 // pred_fallthru
        _
      // Predicated region
      $region65: #{vit_relu_forward.4} parent=15 // pred_check
        %p606 = pneg %p367
      $region66: #{vit_relu_forward.4} parent=15 // pred_check_branch
        %608 = sbr.rel (%p606) target = $region68
      $region67: #{vit_relu_forward.4} parent=15 // pred_region
        %p609 = scmp.lt.s32.totalorder %s31, 1
        %s610 = scalar_select %p609, %s31, 1
        %s611 = scalar_lea.vmem %s12, %s610
      $region68: #{vit_relu_forward.4} parent=15 // pred_fallthru
        _
      // Predicated region
      $region69: #{vit_relu_forward.4} parent=15 // pred_check
        %p612 = pneg %p393
      $region70: #{vit_relu_forward.4} parent=15 // pred_check_branch
        %614 = sbr.rel (%p612) target = $region72
      $region71: #{vit_relu_forward.4} parent=15 // pred_region
        %p615 = scmp.lt.s32.totalorder %s31, 1
        %s616 = scalar_select %p615, %s31, 1
        %s617 = smul.addr %s616, 32
        %s618 = smul.addr %s617, 4
        %s619 = scalar_lea.vmem %s13, %s618
      $region72: #{vit_relu_forward.4} parent=15 // pred_fallthru
        _
      // Predicated region
      $region73: #{vit_relu_forward.4} parent=15 // pred_check
        %p620 = pneg %p419
      $region74: #{vit_relu_forward.4} parent=15 // pred_check_branch
        %622 = sbr.rel (%p620) target = $region76
      $region75: #{vit_relu_forward.4} parent=15 // pred_region
        %p623 = scmp.lt.s32.totalorder %s31, 1
        %s624 = scalar_select %p623, %s31, 1
        %s625 = smul.addr %s624, 2
        %s626 = scalar_lea.vmem %s14, %s625
      $region76: #{vit_relu_forward.4} parent=15 // pred_fallthru
        _
      // Predicated region
      $region77: #{vit_relu_forward.4} parent=15 // pred_check
        %p627 = pneg %p445
      $region78: #{vit_relu_forward.4} parent=15 // pred_check_branch
        %629 = sbr.rel (%p627) target = $region80
      $region79: #{vit_relu_forward.4} parent=15 // pred_region
        %p630 = scmp.lt.s32.totalorder %s31, 1
        %s631 = scalar_select %p630, %s31, 1
        %s632 = smul.addr %s631, 32
        %s633 = smul.addr %s632, 4
        %s634 = scalar_lea.vmem %s15, %s633
      $region80: #{vit_relu_forward.4} parent=15 // pred_fallthru
        _
      // Predicated region
      $region81: #{vit_relu_forward.4} parent=15 // pred_check
        %p635 = pneg %p471
      $region82: #{vit_relu_forward.4} parent=15 // pred_check_branch
        %637 = sbr.rel (%p635) target = $region84
      $region83: #{vit_relu_forward.4} parent=15 // pred_region
        %p638 = scmp.lt.s32.totalorder %s31, 1
        %s639 = scalar_select %p638, %s31, 1
        %s640 = scalar_lea.vmem %s16, %s639
      $region84: #{vit_relu_forward.4} parent=15 // pred_fallthru
        _
    $region16: #{vit_relu_forward.4} parent=5 // pred_fallthru
      _
    %p641 = scmp.le.s32.totalorder 1, %s23
    %p642 = scmp.lt.s32.totalorder %s23, 5
    %p643 = pnand %p641, %p642
    %p644 = pneg %p643
    // Predicated region
    $region85: #{vit_relu_forward.4} parent=5 // pred_check
      _
    $region86: #{vit_relu_forward.4} parent=5 // pred_check_branch
      %646 = sbr.rel (%p643) target = $region88
    $region87: #{vit_relu_forward.4} parent=5 // pred_region
      %s647 = ssub.s32 %s23, 1
      %p648 = scmp.lt.s32.totalorder %s32, 1
      %s649 = scalar_select %p648, %s32, 1
      %s650 = smul.addr %s649, 4
      %s651 = scalar_lea.vmem %s0, %s650
      %p652 = pneg %p61
      %p653 = pneg %p58
      %p654 = scmp.lt.s32.totalorder %s33, 1
      %s655 = scalar_select %p654, %s33, 1
      %s656 = scalar_lea.vmem %s1, %s655
      %p657 = pneg %p87
      %p658 = pneg %p84
      %p659 = scmp.lt.s32.totalorder %s33, 1
      %s660 = scalar_select %p659, %s33, 1
      %s661 = scalar_lea.vmem %s2, %s660
      %p662 = pneg %p113
      %p663 = pneg %p110
      %p664 = scmp.lt.s32.totalorder %s33, 1
      %s665 = scalar_select %p664, %s33, 1
      %s666 = smul.addr %s665, 32
      %s667 = smul.addr %s666, 4
      %s668 = scalar_lea.vmem %s3, %s667
      %p669 = pneg %p139
      %p670 = pneg %p136
      %p671 = scmp.lt.s32.totalorder %s33, 1
      %s672 = scalar_select %p671, %s33, 1
      %s673 = smul.addr %s672, 2
      %s674 = scalar_lea.vmem %s4, %s673
      %p675 = pneg %p165
      %p676 = pneg %p162
      %p677 = scmp.lt.s32.totalorder %s33, 1
      %s678 = scalar_select %p677, %s33, 1
      %s679 = smul.addr %s678, 32
      %s680 = smul.addr %s679, 4
      %s681 = scalar_lea.vmem %s5, %s680
      %p682 = pneg %p191
      %p683 = pneg %p188
      %p684 = scmp.lt.s32.totalorder %s33, 1
      %s685 = scalar_select %p684, %s33, 1
      %s686 = smul.addr %s685, 2
      %s687 = scalar_lea.vmem %s6, %s686
      %p688 = pneg %p217
      %p689 = pneg %p214
      %p690 = scmp.lt.s32.totalorder %s33, 1
      %s691 = scalar_select %p690, %s33, 1
      %s692 = smul.addr %s691, 32
      %s693 = smul.addr %s692, 4
      %s694 = scalar_lea.vmem %s7, %s693
      %p695 = pneg %p243
      %p696 = pneg %p240
      %p697 = scmp.lt.s32.totalorder %s33, 1
      %s698 = scalar_select %p697, %s33, 1
      %s699 = smul.addr %s698, 2
      %s700 = scalar_lea.vmem %s8, %s699
      %p701 = pneg %p269
      %p702 = pneg %p266
      %p703 = scmp.lt.s32.totalorder %s33, 1
      %s704 = scalar_select %p703, %s33, 1
      %s705 = smul.addr %s704, 16
      %s706 = smul.addr %s705, 4
      %s707 = scalar_lea.vmem %s9, %s706
      %p708 = pneg %p295
      %p709 = pneg %p292
      %p710 = scmp.lt.s32.totalorder %s33, 1
      %s711 = scalar_select %p710, %s33, 1
      %s712 = scalar_lea.vmem %s10, %s711
      %p713 = pneg %p321
      %p714 = pneg %p318
      %p715 = scmp.lt.s32.totalorder %s33, 1
      %s716 = scalar_select %p715, %s33, 1
      %s717 = scalar_lea.vmem %s11, %s716
      %p718 = pneg %p347
      %p719 = pneg %p344
      %p720 = scmp.lt.s32.totalorder %s33, 1
      %s721 = scalar_select %p720, %s33, 1
      %s722 = scalar_lea.vmem %s12, %s721
      %p723 = pneg %p373
      %p724 = pneg %p370
      %p725 = scmp.lt.s32.totalorder %s33, 1
      %s726 = scalar_select %p725, %s33, 1
      %s727 = smul.addr %s726, 32
      %s728 = smul.addr %s727, 4
      %s729 = scalar_lea.vmem %s13, %s728
      %p730 = pneg %p399
      %p731 = pneg %p396
      %p732 = scmp.lt.s32.totalorder %s33, 1
      %s733 = scalar_select %p732, %s33, 1
      %s734 = smul.addr %s733, 2
      %s735 = scalar_lea.vmem %s14, %s734
      %p736 = pneg %p425
      %p737 = pneg %p422
      %p738 = scmp.lt.s32.totalorder %s33, 1
      %s739 = scalar_select %p738, %s33, 1
      %s740 = smul.addr %s739, 32
      %s741 = smul.addr %s740, 4
      %s742 = scalar_lea.vmem %s15, %s741
      %p743 = pneg %p451
      %p744 = pneg %p448
      %p745 = scmp.lt.s32.totalorder %s33, 1
      %s746 = scalar_select %p745, %s33, 1
      %s747 = scalar_lea.vmem %s16, %s746
      %p748 = pneg %p477
      %p749 = pneg %p474
      %p750 = pneg %p503
      %p751 = pneg %p500
      %p752 = scmp.lt.s32.totalorder %s32, 1
      %s753 = scalar_select %p752, %s32, 1
      %s754 = smul.addr %s753, 4
      %s755 = scalar_lea.vmem %s17, %s754
      %p756 = scmp.lt.s32.totalorder %s32, 1
      %s757 = scalar_select %p756, %s32, 1
      %s758 = smul.addr %s757, 4
      %s759 = scalar_lea.vmem %s0, %s758
      %p760 = scmp.lt.s32.totalorder %s33, 1
      %s761 = scalar_select %p760, %s33, 1
      %s762 = scalar_lea.vmem %s1, %s761
      %p763 = scmp.lt.s32.totalorder %s33, 1
      %s764 = scalar_select %p763, %s33, 1
      %s765 = scalar_lea.vmem %s2, %s764
      %p766 = scmp.lt.s32.totalorder %s33, 1
      %s767 = scalar_select %p766, %s33, 1
      %s768 = smul.addr %s767, 32
      %s769 = smul.addr %s768, 4
      %s770 = scalar_lea.vmem %s3, %s769
      %p771 = scmp.lt.s32.totalorder %s33, 1
      %s772 = scalar_select %p771, %s33, 1
      %s773 = smul.addr %s772, 2
      %s774 = scalar_lea.vmem %s4, %s773
      %p775 = scmp.lt.s32.totalorder %s33, 1
      %s776 = scalar_select %p775, %s33, 1
      %s777 = smul.addr %s776, 32
      %s778 = smul.addr %s777, 4
      %s779 = scalar_lea.vmem %s5, %s778
      %p780 = scmp.lt.s32.totalorder %s33, 1
      %s781 = scalar_select %p780, %s33, 1
      %s782 = smul.addr %s781, 2
      %s783 = scalar_lea.vmem %s6, %s782
      %p784 = scmp.lt.s32.totalorder %s33, 1
      %s785 = scalar_select %p784, %s33, 1
      %s786 = smul.addr %s785, 32
      %s787 = smul.addr %s786, 4
      %s788 = scalar_lea.vmem %s7, %s787
      %p789 = scmp.lt.s32.totalorder %s33, 1
      %s790 = scalar_select %p789, %s33, 1
      %s791 = smul.addr %s790, 2
      %s792 = scalar_lea.vmem %s8, %s791
      %p793 = scmp.lt.s32.totalorder %s33, 1
      %s794 = scalar_select %p793, %s33, 1
      %s795 = smul.addr %s794, 16
      %s796 = smul.addr %s795, 4
      %s797 = scalar_lea.vmem %s9, %s796
      %p798 = scmp.lt.s32.totalorder %s33, 1
      %s799 = scalar_select %p798, %s33, 1
      %s800 = scalar_lea.vmem %s10, %s799
      %p801 = scmp.lt.s32.totalorder %s33, 1
      %s802 = scalar_select %p801, %s33, 1
      %s803 = scalar_lea.vmem %s11, %s802
      %p804 = scmp.lt.s32.totalorder %s33, 1
      %s805 = scalar_select %p804, %s33, 1
      %s806 = scalar_lea.vmem %s12, %s805
      %p807 = scmp.lt.s32.totalorder %s33, 1
      %s808 = scalar_select %p807, %s33, 1
      %s809 = smul.addr %s808, 32
      %s810 = smul.addr %s809, 4
      %s811 = scalar_lea.vmem %s13, %s810
      %p812 = scmp.lt.s32.totalorder %s33, 1
      %s813 = scalar_select %p812, %s33, 1
      %s814 = smul.addr %s813, 2
      %s815 = scalar_lea.vmem %s14, %s814
      %p816 = scmp.lt.s32.totalorder %s33, 1
      %s817 = scalar_select %p816, %s33, 1
      %s818 = smul.addr %s817, 32
      %s819 = smul.addr %s818, 4
      %s820 = scalar_lea.vmem %s15, %s819
      %p821 = scmp.lt.s32.totalorder %s33, 1
      %s822 = scalar_select %p821, %s33, 1
      %s823 = scalar_lea.vmem %s16, %s822
      %p824 = scmp.lt.s32.totalorder %s32, 1
      %s825 = scalar_select %p824, %s32, 1
      %s826 = smul.addr %s825, 4
      %s827 = scalar_lea.vmem %s17, %s826
      %p829 = scmp.eq.s32.totalorder %s33, 0
      // Predicated region
      $region89: #{vit_relu_forward.4} parent=87 // pred_check
        %p830 = pneg %p829
      $region90: #{vit_relu_forward.4} parent=87 // pred_check_branch
        %832 = sbr.rel (%p830) target = $region92
      $region91: #{vit_relu_forward.4} parent=87 // pred_region
        %v833 = vld [vmem:[%s759] sm:$0xf]
        %v834 = vunpack.c.l.bf16 %v833
        %835 = vst [vmem:[#allocation2] sm:$0xff] %v834
      $region92: #{vit_relu_forward.4} parent=87 // pred_fallthru
        _
      %v836 = vld [vmem:[#allocation2] sm:$0xff]
      %837 = vadd.xlane.f32.xlu0 %v836
      %v838 = vpop.xlane.xlu0 %837
      %v839 = vrcp.pop 128.0
      %v840 = vmul.f32 %v838, %v839
      %v841 = vsub.f32 %v836, %v840
      %v842 = vmul.f32 %v841, %v841
      %843 = vadd.xlane.f32.xlu0 %v842
      %v844 = vpop.xlane.xlu0 %843
      %v845 = vmul.f32 %v844, %v839
      %v846 = vadd.f32 %v845, 1e-06
      %v847 = vrsqrt.pop %v846
      %v848 = vmul.f32 %v841, %v847
      %v849 = vld [vmem:[%s762] sm:$0x1]
      %v851 = vlaneseq
      %v852 = vshrl.u32 %v851, 7
      %v853 = vsub.s32 0, %v852
      %v854 = vrot.slane %v849, %v853
      %v856 = vmul.f32 %v848, %v854
      %v857 = vld [vmem:[%s765] sm:$0x1]
      %v859 = vlaneseq
      %v860 = vshrl.u32 %v859, 7
      %v861 = vsub.s32 0, %v860
      %v862 = vrot.slane %v857, %v861
      %v864 = vadd.f32 %v856, %v862
      %v865 = vpack.c.bf16 %v864, %v864
      %v866 = vld [vmem:[%s770] sm:$0xf]
      %v867 = vld [vmem:[%s770 + $0x4] sm:$0xf]
      %v868 = vld [vmem:[%s770 + $0x8] sm:$0xf]
      %v869 = vld [vmem:[%s770 + $0xc] sm:$0xf]
      %v870 = vld [vmem:[%s770 + $0x10] sm:$0xf]
      %v871 = vld [vmem:[%s770 + $0x14] sm:$0xf]
      %v872 = vld [vmem:[%s770 + $0x18] sm:$0xf]
      %v873 = vld [vmem:[%s770 + $0x1c] sm:$0xf]
      %v874 = vld [vmem:[%s770 + $0x20] sm:$0xf]
      %v875 = vld [vmem:[%s770 + $0x24] sm:$0xf]
      %v876 = vld [vmem:[%s770 + $0x28] sm:$0xf]
      %v877 = vld [vmem:[%s770 + $0x2c] sm:$0xf]
      %v878 = vld [vmem:[%s770 + $0x30] sm:$0xf]
      %v879 = vld [vmem:[%s770 + $0x34] sm:$0xf]
      %v880 = vld [vmem:[%s770 + $0x38] sm:$0xf]
      %v881 = vld [vmem:[%s770 + $0x3c] sm:$0xf]
      %v882 = vld [vmem:[%s770 + $0x40] sm:$0xf]
      %v883 = vld [vmem:[%s770 + $0x44] sm:$0xf]
      %v884 = vld [vmem:[%s770 + $0x48] sm:$0xf]
      %v885 = vld [vmem:[%s770 + $0x4c] sm:$0xf]
      %v886 = vld [vmem:[%s770 + $0x50] sm:$0xf]
      %v887 = vld [vmem:[%s770 + $0x54] sm:$0xf]
      %v888 = vld [vmem:[%s770 + $0x58] sm:$0xf]
      %v889 = vld [vmem:[%s770 + $0x5c] sm:$0xf]
      %v890 = vld [vmem:[%s770 + $0x60] sm:$0xf]
      %v891 = vld [vmem:[%s770 + $0x64] sm:$0xf]
      %v892 = vld [vmem:[%s770 + $0x68] sm:$0xf]
      %v893 = vld [vmem:[%s770 + $0x6c] sm:$0xf]
      %v894 = vld [vmem:[%s770 + $0x70] sm:$0xf]
      %v895 = vld [vmem:[%s770 + $0x74] sm:$0xf]
      %v896 = vld [vmem:[%s770 + $0x78] sm:$0xf]
      %v897 = vld [vmem:[%s770 + $0x7c] sm:$0xf]
      %v898 = vld [vmem:[%s774] sm:$0x1]
      %v899 = vld [vmem:[%s774 + $0x1] sm:$0x1]
      %v902 = vlaneseq
      %v903 = vshrl.u32 %v902, 7
      %v904 = vsub.s32 0, %v903
      %v905 = vrot.slane %v898, %v904
      %v906 = vlaneseq
      %v907 = vshrl.u32 %v906, 7
      %v908 = vsub.s32 0, %v907
      %v909 = vrot.slane %v899, %v908
      %v928 = vunpack.c.l.b16 %v866
      %v929 = vunpack.c.l.b16 %v867
      %v930 = vunpack.c.l.b16 %v868
      %v931 = vunpack.c.l.b16 %v869
      %v932 = vunpack.c.l.b16 %v870
      %v933 = vunpack.c.l.b16 %v871
      %v934 = vunpack.c.l.b16 %v872
      %v935 = vunpack.c.l.b16 %v873
      %v936 = vunpack.c.l.b16 %v874
      %v937 = vunpack.c.l.b16 %v875
      %v938 = vunpack.c.l.b16 %v876
      %v939 = vunpack.c.l.b16 %v877
      %v940 = vunpack.c.l.b16 %v878
      %v941 = vunpack.c.l.b16 %v879
      %v942 = vunpack.c.l.b16 %v880
      %v943 = vunpack.c.l.b16 %v881
      %v944 = vpack.c.b16 %v929, %v928
      %v945 = vpack.c.b16 %v931, %v930
      %v946 = vpack.c.b16 %v933, %v932
      %v947 = vpack.c.b16 %v935, %v934
      %v948 = vpack.c.b16 %v937, %v936
      %v949 = vpack.c.b16 %v939, %v938
      %v950 = vpack.c.b16 %v941, %v940
      %v951 = vpack.c.b16 %v943, %v942
      %960 = vmatprep.subr.bf16.mxu0 0
      %961 = vmatpush1.bf16.msra.mxu0 %v944
      %962 = vmatprep.subr.bf16.mxu0 0
      %963 = vmatpush1.bf16.msra.mxu0 %v945
      %964 = vmatprep.subr.bf16.mxu0 0
      %965 = vmatpush1.bf16.msra.mxu0 %v946
      %966 = vmatprep.subr.bf16.mxu0 0
      %967 = vmatpush1.bf16.msra.mxu0 %v947
      %968 = vmatprep.subr.bf16.mxu0 0
      %969 = vmatpush1.bf16.msra.mxu0 %v948
      %970 = vmatprep.subr.bf16.mxu0 0
      %971 = vmatpush1.bf16.msra.mxu0 %v949
      %972 = vmatprep.subr.bf16.mxu0 0
      %973 = vmatpush1.bf16.msra.mxu0 %v950
      %974 = vmatprep.subr.bf16.mxu0 0
      %975 = vmatpush1.bf16.msra.mxu0 %v951
      %976 = vmatprep.subr.bf16.mxu0 0
      %977 = vmatpush1.bf16.msra.mxu0 0
      %978 = vmatprep.subr.bf16.mxu0 0
      %979 = vmatpush1.bf16.msra.mxu0 0
      %980 = vmatprep.subr.bf16.mxu0 0
      %981 = vmatpush1.bf16.msra.mxu0 0
      %982 = vmatprep.subr.bf16.mxu0 0
      %983 = vmatpush1.bf16.msra.mxu0 0
      %984 = vmatprep.subr.bf16.mxu0 0
      %985 = vmatpush1.bf16.msra.mxu0 0
      %986 = vmatprep.subr.bf16.mxu0 0
      %987 = vmatpush1.bf16.msra.mxu0 0
      %988 = vmatprep.subr.bf16.mxu0 0
      %989 = vmatpush1.bf16.msra.mxu0 0
      %990 = vmatprep.subr.bf16.mxu0 0
      %991 = vmatpush1.bf16.msra.mxu0 0
      %992 = vmatprep.mubr.bf16.mxu0 0
      %993 = vmatmul.mubr.bf16.gmra.mrb[0].mxu0 %v865
      %v994 = vpop.f32.mrb[0].mxu0
      %v995 = vadd.f32 %v905, %v994
      %v996 = vpop.f32.mrb[0].mxu0
      %v997 = vpop.f32.mrb[0].mxu0
      %v998 = vpop.f32.mrb[0].mxu0
      %999 = vdwg.mxu0
      %v1016 = vunpack.c.l.b16 %v882
      %v1017 = vunpack.c.l.b16 %v883
      %v1018 = vunpack.c.l.b16 %v884
      %v1019 = vunpack.c.l.b16 %v885
      %v1020 = vunpack.c.l.b16 %v886
      %v1021 = vunpack.c.l.b16 %v887
      %v1022 = vunpack.c.l.b16 %v888
      %v1023 = vunpack.c.l.b16 %v889
      %v1024 = vunpack.c.l.b16 %v890
      %v1025 = vunpack.c.l.b16 %v891
      %v1026 = vunpack.c.l.b16 %v892
      %v1027 = vunpack.c.l.b16 %v893
      %v1028 = vunpack.c.l.b16 %v894
      %v1029 = vunpack.c.l.b16 %v895
      %v1030 = vunpack.c.l.b16 %v896
      %v1031 = vunpack.c.l.b16 %v897
      %v1032 = vpack.c.b16 %v1017, %v1016
      %v1033 = vpack.c.b16 %v1019, %v1018
      %v1034 = vpack.c.b16 %v1021, %v1020
      %v1035 = vpack.c.b16 %v1023, %v1022
      %v1036 = vpack.c.b16 %v1025, %v1024
      %v1037 = vpack.c.b16 %v1027, %v1026
      %v1038 = vpack.c.b16 %v1029, %v1028
      %v1039 = vpack.c.b16 %v1031, %v1030
      %1048 = vmatprep.subr.bf16.mxu0 0
      %1049 = vmatpush1.bf16.msra.mxu0 %v1032
      %1050 = vmatprep.subr.bf16.mxu0 0
      %1051 = vmatpush1.bf16.msra.mxu0 %v1033
      %1052 = vmatprep.subr.bf16.mxu0 0
      %1053 = vmatpush1.bf16.msra.mxu0 %v1034
      %1054 = vmatprep.subr.bf16.mxu0 0
      %1055 = vmatpush1.bf16.msra.mxu0 %v1035
      %1056 = vmatprep.subr.bf16.mxu0 0
      %1057 = vmatpush1.bf16.msra.mxu0 %v1036
      %1058 = vmatprep.subr.bf16.mxu0 0
      %1059 = vmatpush1.bf16.msra.mxu0 %v1037
      %1060 = vmatprep.subr.bf16.mxu0 0
      %1061 = vmatpush1.bf16.msra.mxu0 %v1038
      %1062 = vmatprep.subr.bf16.mxu0 0
      %1063 = vmatpush1.bf16.msra.mxu0 %v1039
      %1064 = vmatprep.subr.bf16.mxu0 0
      %1065 = vmatpush1.bf16.msra.mxu0 0
      %1066 = vmatprep.subr.bf16.mxu0 0
      %1067 = vmatpush1.bf16.msra.mxu0 0
      %1068 = vmatprep.subr.bf16.mxu0 0
      %1069 = vmatpush1.bf16.msra.mxu0 0
      %1070 = vmatprep.subr.bf16.mxu0 0
      %1071 = vmatpush1.bf16.msra.mxu0 0
      %1072 = vmatprep.subr.bf16.mxu0 0
      %1073 = vmatpush1.bf16.msra.mxu0 0
      %1074 = vmatprep.subr.bf16.mxu0 0
      %1075 = vmatpush1.bf16.msra.mxu0 0
      %1076 = vmatprep.subr.bf16.mxu0 0
      %1077 = vmatpush1.bf16.msra.mxu0 0
      %1078 = vmatprep.subr.bf16.mxu0 0
      %1079 = vmatpush1.bf16.msra.mxu0 0
      %1080 = vmatprep.mubr.bf16.mxu0 0
      %1081 = vmatmul.mubr.bf16.gmra.mrb[0].mxu0 %v865
      %v1082 = vpop.f32.mrb[0].mxu0
      %v1083 = vadd.f32 %v909, %v1082
      %v1084 = vpop.f32.mrb[0].mxu0
      %v1085 = vpop.f32.mrb[0].mxu0
      %v1086 = vpop.f32.mrb[0].mxu0
      %1087 = vdwg.mxu0
      %v1088 = vmul.f32 %v995, 0.125
      %v1089 = vmul.f32 %v1083, 0.125
      %v1090 = vpack.c.bf16 %v1088, %v1088
      %v1091 = vpack.c.bf16 %v1089, %v1089
      %v1092 = vld [vmem:[%s779] sm:$0xf]
      %v1093 = vld [vmem:[%s779 + $0x4] sm:$0xf]
      %v1094 = vld [vmem:[%s779 + $0x8] sm:$0xf]
      %v1095 = vld [vmem:[%s779 + $0xc] sm:$0xf]
      %v1096 = vld [vmem:[%s779 + $0x10] sm:$0xf]
      %v1097 = vld [vmem:[%s779 + $0x14] sm:$0xf]
      %v1098 = vld [vmem:[%s779 + $0x18] sm:$0xf]
      %v1099 = vld [vmem:[%s779 + $0x1c] sm:$0xf]
      %v1100 = vld [vmem:[%s779 + $0x20] sm:$0xf]
      %v1101 = vld [vmem:[%s779 + $0x24] sm:$0xf]
      %v1102 = vld [vmem:[%s779 + $0x28] sm:$0xf]
      %v1103 = vld [vmem:[%s779 + $0x2c] sm:$0xf]
      %v1104 = vld [vmem:[%s779 + $0x30] sm:$0xf]
      %v1105 = vld [vmem:[%s779 + $0x34] sm:$0xf]
      %v1106 = vld [vmem:[%s779 + $0x38] sm:$0xf]
      %v1107 = vld [vmem:[%s779 + $0x3c] sm:$0xf]
      %v1108 = vld [vmem:[%s779 + $0x40] sm:$0xf]
      %v1109 = vld [vmem:[%s779 + $0x44] sm:$0xf]
      %v1110 = vld [vmem:[%s779 + $0x48] sm:$0xf]
      %v1111 = vld [vmem:[%s779 + $0x4c] sm:$0xf]
      %v1112 = vld [vmem:[%s779 + $0x50] sm:$0xf]
      %v1113 = vld [vmem:[%s779 + $0x54] sm:$0xf]
      %v1114 = vld [vmem:[%s779 + $0x58] sm:$0xf]
      %v1115 = vld [vmem:[%s779 + $0x5c] sm:$0xf]
      %v1116 = vld [vmem:[%s779 + $0x60] sm:$0xf]
      %v1117 = vld [vmem:[%s779 + $0x64] sm:$0xf]
      %v1118 = vld [vmem:[%s779 + $0x68] sm:$0xf]
      %v1119 = vld [vmem:[%s779 + $0x6c] sm:$0xf]
      %v1120 = vld [vmem:[%s779 + $0x70] sm:$0xf]
      %v1121 = vld [vmem:[%s779 + $0x74] sm:$0xf]
      %v1122 = vld [vmem:[%s779 + $0x78] sm:$0xf]
      %v1123 = vld [vmem:[%s779 + $0x7c] sm:$0xf]
      %v1124 = vld [vmem:[%s783] sm:$0x1]
      %v1125 = vld [vmem:[%s783 + $0x1] sm:$0x1]
      %v1128 = vlaneseq
      %v1129 = vshrl.u32 %v1128, 7
      %v1130 = vsub.s32 0, %v1129
      %v1131 = vrot.slane %v1124, %v1130
      %v1132 = vlaneseq
      %v1133 = vshrl.u32 %v1132, 7
      %v1134 = vsub.s32 0, %v1133
      %v1135 = vrot.slane %v1125, %v1134
      %v1154 = vunpack.c.l.b16 %v1092
      %v1155 = vunpack.c.l.b16 %v1093
      %v1156 = vunpack.c.l.b16 %v1094
      %v1157 = vunpack.c.l.b16 %v1095
      %v1158 = vunpack.c.l.b16 %v1096
      %v1159 = vunpack.c.l.b16 %v1097
      %v1160 = vunpack.c.l.b16 %v1098
      %v1161 = vunpack.c.l.b16 %v1099
      %v1162 = vunpack.c.l.b16 %v1100
      %v1163 = vunpack.c.l.b16 %v1101
      %v1164 = vunpack.c.l.b16 %v1102
      %v1165 = vunpack.c.l.b16 %v1103
      %v1166 = vunpack.c.l.b16 %v1104
      %v1167 = vunpack.c.l.b16 %v1105
      %v1168 = vunpack.c.l.b16 %v1106
      %v1169 = vunpack.c.l.b16 %v1107
      %v1170 = vpack.c.b16 %v1155, %v1154
      %v1171 = vpack.c.b16 %v1157, %v1156
      %v1172 = vpack.c.b16 %v1159, %v1158
      %v1173 = vpack.c.b16 %v1161, %v1160
      %v1174 = vpack.c.b16 %v1163, %v1162
      %v1175 = vpack.c.b16 %v1165, %v1164
      %v1176 = vpack.c.b16 %v1167, %v1166
      %v1177 = vpack.c.b16 %v1169, %v1168
      %1186 = vmatprep.subr.bf16.mxu0 0
      %1187 = vmatpush1.bf16.msra.mxu0 %v1170
      %1188 = vmatprep.subr.bf16.mxu0 0
      %1189 = vmatpush1.bf16.msra.mxu0 %v1171
      %1190 = vmatprep.subr.bf16.mxu0 0
      %1191 = vmatpush1.bf16.msra.mxu0 %v1172
      %1192 = vmatprep.subr.bf16.mxu0 0
      %1193 = vmatpush1.bf16.msra.mxu0 %v1173
      %1194 = vmatprep.subr.bf16.mxu0 0
      %1195 = vmatpush1.bf16.msra.mxu0 %v1174
      %1196 = vmatprep.subr.bf16.mxu0 0
      %1197 = vmatpush1.bf16.msra.mxu0 %v1175
      %1198 = vmatprep.subr.bf16.mxu0 0
      %1199 = vmatpush1.bf16.msra.mxu0 %v1176
      %1200 = vmatprep.subr.bf16.mxu0 0
      %1201 = vmatpush1.bf16.msra.mxu0 %v1177
      %1202 = vmatprep.subr.bf16.mxu0 0
      %1203 = vmatpush1.bf16.msra.mxu0 0
      %1204 = vmatprep.subr.bf16.mxu0 0
      %1205 = vmatpush1.bf16.msra.mxu0 0
      %1206 = vmatprep.subr.bf16.mxu0 0
      %1207 = vmatpush1.bf16.msra.mxu0 0
      %1208 = vmatprep.subr.bf16.mxu0 0
      %1209 = vmatpush1.bf16.msra.mxu0 0
      %1210 = vmatprep.subr.bf16.mxu0 0
      %1211 = vmatpush1.bf16.msra.mxu0 0
      %1212 = vmatprep.subr.bf16.mxu0 0
      %1213 = vmatpush1.bf16.msra.mxu0 0
      %1214 = vmatprep.subr.bf16.mxu0 0
      %1215 = vmatpush1.bf16.msra.mxu0 0
      %1216 = vmatprep.subr.bf16.mxu0 0
      %1217 = vmatpush1.bf16.msra.mxu0 0
      %1218 = vmatprep.mubr.bf16.mxu0 0
      %1219 = vmatmul.mubr.bf16.gmra.mrb[0].mxu0 %v865
      %v1220 = vpop.f32.mrb[0].mxu0
      %v1221 = vadd.f32 %v1131, %v1220
      %v1222 = vpop.f32.mrb[0].mxu0
      %v1223 = vpop.f32.mrb[0].mxu0
      %v1224 = vpop.f32.mrb[0].mxu0
      %1225 = vdwg.mxu0
      %v1242 = vunpack.c.l.b16 %v1108
      %v1243 = vunpack.c.l.b16 %v1109
      %v1244 = vunpack.c.l.b16 %v1110
      %v1245 = vunpack.c.l.b16 %v1111
      %v1246 = vunpack.c.l.b16 %v1112
      %v1247 = vunpack.c.l.b16 %v1113
      %v1248 = vunpack.c.l.b16 %v1114
      %v1249 = vunpack.c.l.b16 %v1115
      %v1250 = vunpack.c.l.b16 %v1116
      %v1251 = vunpack.c.l.b16 %v1117
      %v1252 = vunpack.c.l.b16 %v1118
      %v1253 = vunpack.c.l.b16 %v1119
      %v1254 = vunpack.c.l.b16 %v1120
      %v1255 = vunpack.c.l.b16 %v1121
      %v1256 = vunpack.c.l.b16 %v1122
      %v1257 = vunpack.c.l.b16 %v1123
      %v1258 = vpack.c.b16 %v1243, %v1242
      %v1259 = vpack.c.b16 %v1245, %v1244
      %v1260 = vpack.c.b16 %v1247, %v1246
      %v1261 = vpack.c.b16 %v1249, %v1248
      %v1262 = vpack.c.b16 %v1251, %v1250
      %v1263 = vpack.c.b16 %v1253, %v1252
      %v1264 = vpack.c.b16 %v1255, %v1254
      %v1265 = vpack.c.b16 %v1257, %v1256
      %1274 = vmatprep.subr.bf16.mxu0 0
      %1275 = vmatpush1.bf16.msra.mxu0 %v1258
      %1276 = vmatprep.subr.bf16.mxu0 0
      %1277 = vmatpush1.bf16.msra.mxu0 %v1259
      %1278 = vmatprep.subr.bf16.mxu0 0
      %1279 = vmatpush1.bf16.msra.mxu0 %v1260
      %1280 = vmatprep.subr.bf16.mxu0 0
      %1281 = vmatpush1.bf16.msra.mxu0 %v1261
      %1282 = vmatprep.subr.bf16.mxu0 0
      %1283 = vmatpush1.bf16.msra.mxu0 %v1262
      %1284 = vmatprep.subr.bf16.mxu0 0
      %1285 = vmatpush1.bf16.msra.mxu0 %v1263
      %1286 = vmatprep.subr.bf16.mxu0 0
      %1287 = vmatpush1.bf16.msra.mxu0 %v1264
      %1288 = vmatprep.subr.bf16.mxu0 0
      %1289 = vmatpush1.bf16.msra.mxu0 %v1265
      %1290 = vmatprep.subr.bf16.mxu0 0
      %1291 = vmatpush1.bf16.msra.mxu0 0
      %1292 = vmatprep.subr.bf16.mxu0 0
      %1293 = vmatpush1.bf16.msra.mxu0 0
      %1294 = vmatprep.subr.bf16.mxu0 0
      %1295 = vmatpush1.bf16.msra.mxu0 0
      %1296 = vmatprep.subr.bf16.mxu0 0
      %1297 = vmatpush1.bf16.msra.mxu0 0
      %1298 = vmatprep.subr.bf16.mxu0 0
      %1299 = vmatpush1.bf16.msra.mxu0 0
      %1300 = vmatprep.subr.bf16.mxu0 0
      %1301 = vmatpush1.bf16.msra.mxu0 0
      %1302 = vmatprep.subr.bf16.mxu0 0
      %1303 = vmatpush1.bf16.msra.mxu0 0
      %1304 = vmatprep.subr.bf16.mxu0 0
      %1305 = vmatpush1.bf16.msra.mxu0 0
      %1306 = vmatprep.mubr.bf16.mxu0 0
      %1307 = vmatmul.mubr.bf16.gmra.mrb[0].mxu0 %v865
      %v1308 = vpop.f32.mrb[0].mxu0
      %v1309 = vadd.f32 %v1135, %v1308
      %v1310 = vpop.f32.mrb[0].mxu0
      %v1311 = vpop.f32.mrb[0].mxu0
      %v1312 = vpop.f32.mrb[0].mxu0
      %1313 = vdwg.mxu0
      %v1314 = vpack.c.bf16 %v1221, %v1221
      %v1315 = vpack.c.bf16 %v1309, %v1309
      %v1316 = vld [vmem:[%s788] sm:$0xf]
      %v1317 = vld [vmem:[%s788 + $0x4] sm:$0xf]
      %v1318 = vld [vmem:[%s788 + $0x8] sm:$0xf]
      %v1319 = vld [vmem:[%s788 + $0xc] sm:$0xf]
      %v1320 = vld [vmem:[%s788 + $0x10] sm:$0xf]
      %v1321 = vld [vmem:[%s788 + $0x14] sm:$0xf]
      %v1322 = vld [vmem:[%s788 + $0x18] sm:$0xf]
      %v1323 = vld [vmem:[%s788 + $0x1c] sm:$0xf]
      %v1324 = vld [vmem:[%s788 + $0x20] sm:$0xf]
      %v1325 = vld [vmem:[%s788 + $0x24] sm:$0xf]
      %v1326 = vld [vmem:[%s788 + $0x28] sm:$0xf]
      %v1327 = vld [vmem:[%s788 + $0x2c] sm:$0xf]
      %v1328 = vld [vmem:[%s788 + $0x30] sm:$0xf]
      %v1329 = vld [vmem:[%s788 + $0x34] sm:$0xf]
      %v1330 = vld [vmem:[%s788 + $0x38] sm:$0xf]
      %v1331 = vld [vmem:[%s788 + $0x3c] sm:$0xf]
      %v1332 = vld [vmem:[%s788 + $0x40] sm:$0xf]
      %v1333 = vld [vmem:[%s788 + $0x44] sm:$0xf]
      %v1334 = vld [vmem:[%s788 + $0x48] sm:$0xf]
      %v1335 = vld [vmem:[%s788 + $0x4c] sm:$0xf]
      %v1336 = vld [vmem:[%s788 + $0x50] sm:$0xf]
      %v1337 = vld [vmem:[%s788 + $0x54] sm:$0xf]
      %v1338 = vld [vmem:[%s788 + $0x58] sm:$0xf]
      %v1339 = vld [vmem:[%s788 + $0x5c] sm:$0xf]
      %v1340 = vld [vmem:[%s788 + $0x60] sm:$0xf]
      %v1341 = vld [vmem:[%s788 + $0x64] sm:$0xf]
      %v1342 = vld [vmem:[%s788 + $0x68] sm:$0xf]
      %v1343 = vld [vmem:[%s788 + $0x6c] sm:$0xf]
      %v1344 = vld [vmem:[%s788 + $0x70] sm:$0xf]
      %v1345 = vld [vmem:[%s788 + $0x74] sm:$0xf]
      %v1346 = vld [vmem:[%s788 + $0x78] sm:$0xf]
      %v1347 = vld [vmem:[%s788 + $0x7c] sm:$0xf]
      %v1348 = vld [vmem:[%s792] sm:$0x1]
      %v1349 = vld [vmem:[%s792 + $0x1] sm:$0x1]
      %v1352 = vlaneseq
      %v1353 = vshrl.u32 %v1352, 7
      %v1354 = vsub.s32 0, %v1353
      %v1355 = vrot.slane %v1348, %v1354
      %v1356 = vlaneseq
      %v1357 = vshrl.u32 %v1356, 7
      %v1358 = vsub.s32 0, %v1357
      %v1359 = vrot.slane %v1349, %v1358
      %v1378 = vunpack.c.l.b16 %v1316
      %v1379 = vunpack.c.l.b16 %v1317
      %v1380 = vunpack.c.l.b16 %v1318
      %v1381 = vunpack.c.l.b16 %v1319
      %v1382 = vunpack.c.l.b16 %v1320
      %v1383 = vunpack.c.l.b16 %v1321
      %v1384 = vunpack.c.l.b16 %v1322
      %v1385 = vunpack.c.l.b16 %v1323
      %v1386 = vunpack.c.l.b16 %v1324
      %v1387 = vunpack.c.l.b16 %v1325
      %v1388 = vunpack.c.l.b16 %v1326
      %v1389 = vunpack.c.l.b16 %v1327
      %v1390 = vunpack.c.l.b16 %v1328
      %v1391 = vunpack.c.l.b16 %v1329
      %v1392 = vunpack.c.l.b16 %v1330
      %v1393 = vunpack.c.l.b16 %v1331
      %v1394 = vpack.c.b16 %v1379, %v1378
      %v1395 = vpack.c.b16 %v1381, %v1380
      %v1396 = vpack.c.b16 %v1383, %v1382
      %v1397 = vpack.c.b16 %v1385, %v1384
      %v1398 = vpack.c.b16 %v1387, %v1386
      %v1399 = vpack.c.b16 %v1389, %v1388
      %v1400 = vpack.c.b16 %v1391, %v1390
      %v1401 = vpack.c.b16 %v1393, %v1392
      %1410 = vmatprep.subr.bf16.mxu0 0
      %1411 = vmatpush1.bf16.msra.mxu0 %v1394
      %1412 = vmatprep.subr.bf16.mxu0 0
      %1413 = vmatpush1.bf16.msra.mxu0 %v1395
      %1414 = vmatprep.subr.bf16.mxu0 0
      %1415 = vmatpush1.bf16.msra.mxu0 %v1396
      %1416 = vmatprep.subr.bf16.mxu0 0
      %1417 = vmatpush1.bf16.msra.mxu0 %v1397
      %1418 = vmatprep.subr.bf16.mxu0 0
      %1419 = vmatpush1.bf16.msra.mxu0 %v1398
      %1420 = vmatprep.subr.bf16.mxu0 0
      %1421 = vmatpush1.bf16.msra.mxu0 %v1399
      %1422 = vmatprep.subr.bf16.mxu0 0
      %1423 = vmatpush1.bf16.msra.mxu0 %v1400
      %1424 = vmatprep.subr.bf16.mxu0 0
      %1425 = vmatpush1.bf16.msra.mxu0 %v1401
      %1426 = vmatprep.subr.bf16.mxu0 0
      %1427 = vmatpush1.bf16.msra.mxu0 0
      %1428 = vmatprep.subr.bf16.mxu0 0
      %1429 = vmatpush1.bf16.msra.mxu0 0
      %1430 = vmatprep.subr.bf16.mxu0 0
      %1431 = vmatpush1.bf16.msra.mxu0 0
      %1432 = vmatprep.subr.bf16.mxu0 0
      %1433 = vmatpush1.bf16.msra.mxu0 0
      %1434 = vmatprep.subr.bf16.mxu0 0
      %1435 = vmatpush1.bf16.msra.mxu0 0
      %1436 = vmatprep.subr.bf16.mxu0 0
      %1437 = vmatpush1.bf16.msra.mxu0 0
      %1438 = vmatprep.subr.bf16.mxu0 0
      %1439 = vmatpush1.bf16.msra.mxu0 0
      %1440 = vmatprep.subr.bf16.mxu0 0
      %1441 = vmatpush1.bf16.msra.mxu0 0
      %1442 = vmatprep.mubr.bf16.mxu0 0
      %1443 = vmatmul.mubr.bf16.gmra.mrb[0].mxu0 %v865
      %v1444 = vpop.f32.mrb[0].mxu0
      %v1445 = vadd.f32 %v1355, %v1444
      %v1446 = vpop.f32.mrb[0].mxu0
      %v1447 = vpop.f32.mrb[0].mxu0
      %v1448 = vpop.f32.mrb[0].mxu0
      %1449 = vdwg.mxu0
      %v1466 = vunpack.c.l.b16 %v1332
      %v1467 = vunpack.c.l.b16 %v1333
      %v1468 = vunpack.c.l.b16 %v1334
      %v1469 = vunpack.c.l.b16 %v1335
      %v1470 = vunpack.c.l.b16 %v1336
      %v1471 = vunpack.c.l.b16 %v1337
      %v1472 = vunpack.c.l.b16 %v1338
      %v1473 = vunpack.c.l.b16 %v1339
      %v1474 = vunpack.c.l.b16 %v1340
      %v1475 = vunpack.c.l.b16 %v1341
      %v1476 = vunpack.c.l.b16 %v1342
      %v1477 = vunpack.c.l.b16 %v1343
      %v1478 = vunpack.c.l.b16 %v1344
      %v1479 = vunpack.c.l.b16 %v1345
      %v1480 = vunpack.c.l.b16 %v1346
      %v1481 = vunpack.c.l.b16 %v1347
      %v1482 = vpack.c.b16 %v1467, %v1466
      %v1483 = vpack.c.b16 %v1469, %v1468
      %v1484 = vpack.c.b16 %v1471, %v1470
      %v1485 = vpack.c.b16 %v1473, %v1472
      %v1486 = vpack.c.b16 %v1475, %v1474
      %v1487 = vpack.c.b16 %v1477, %v1476
      %v1488 = vpack.c.b16 %v1479, %v1478
      %v1489 = vpack.c.b16 %v1481, %v1480
      %1498 = vmatprep.subr.bf16.mxu0 0
      %1499 = vmatpush1.bf16.msra.mxu0 %v1482
      %1500 = vmatprep.subr.bf16.mxu0 0
      %1501 = vmatpush1.bf16.msra.mxu0 %v1483
      %1502 = vmatprep.subr.bf16.mxu0 0
      %1503 = vmatpush1.bf16.msra.mxu0 %v1484
      %1504 = vmatprep.subr.bf16.mxu0 0
      %1505 = vmatpush1.bf16.msra.mxu0 %v1485
      %1506 = vmatprep.subr.bf16.mxu0 0
      %1507 = vmatpush1.bf16.msra.mxu0 %v1486
      %1508 = vmatprep.subr.bf16.mxu0 0
      %1509 = vmatpush1.bf16.msra.mxu0 %v1487
      %1510 = vmatprep.subr.bf16.mxu0 0
      %1511 = vmatpush1.bf16.msra.mxu0 %v1488
      %1512 = vmatprep.subr.bf16.mxu0 0
      %1513 = vmatpush1.bf16.msra.mxu0 %v1489
      %1514 = vmatprep.subr.bf16.mxu0 0
      %1515 = vmatpush1.bf16.msra.mxu0 0
      %1516 = vmatprep.subr.bf16.mxu0 0
      %1517 = vmatpush1.bf16.msra.mxu0 0
      %1518 = vmatprep.subr.bf16.mxu0 0
      %1519 = vmatpush1.bf16.msra.mxu0 0
      %1520 = vmatprep.subr.bf16.mxu0 0
      %1521 = vmatpush1.bf16.msra.mxu0 0
      %1522 = vmatprep.subr.bf16.mxu0 0
      %1523 = vmatpush1.bf16.msra.mxu0 0
      %1524 = vmatprep.subr.bf16.mxu0 0
      %1525 = vmatpush1.bf16.msra.mxu0 0
      %1526 = vmatprep.subr.bf16.mxu0 0
      %1527 = vmatpush1.bf16.msra.mxu0 0
      %1528 = vmatprep.subr.bf16.mxu0 0
      %1529 = vmatpush1.bf16.msra.mxu0 0
      %1530 = vmatprep.mubr.bf16.mxu0 0
      %1531 = vmatmul.mubr.bf16.gmra.mrb[0].mxu0 %v865
      %v1532 = vpop.f32.mrb[0].mxu0
      %v1533 = vadd.f32 %v1359, %v1532
      %v1534 = vpop.f32.mrb[0].mxu0
      %v1535 = vpop.f32.mrb[0].mxu0
      %v1536 = vpop.f32.mrb[0].mxu0
      %1537 = vdwg.mxu0
      %v1538 = vpack.c.bf16 %v1445, %v1445
      %v1539 = vpack.c.bf16 %v1533, %v1533
      %vm1540 = vcmask 523264
      %v1542 = vsel %vm1540, %v1090, 0
      %v1545 = vsel %vm1540, %v1314, 0
      %1547 = vmatprep.subr.bf16.mxu0 0
      %1548 = vmatpush1.bf16.xpose.msra.mxu0 %v1545
      %1549 = vmatprep.subr.bf16.mxu0 0
      %1550 = vmatpush1.bf16.xpose.msra.mxu0 0
      %1551 = vmatprep.subr.bf16.mxu0 0
      %1552 = vmatpush1.bf16.xpose.msra.mxu0 0
      %1553 = vmatprep.subr.bf16.mxu0 0
      %1554 = vmatpush1.bf16.xpose.msra.mxu0 0
      %1555 = vmatprep.subr.bf16.mxu0 0
      %1556 = vmatpush1.bf16.xpose.msra.mxu0 0
      %1557 = vmatprep.subr.bf16.mxu0 0
      %1558 = vmatpush1.bf16.xpose.msra.mxu0 0
      %1559 = vmatprep.subr.bf16.mxu0 0
      %1560 = vmatpush1.bf16.xpose.msra.mxu0 0
      %1561 = vmatprep.subr.bf16.mxu0 0
      %1562 = vmatpush1.bf16.xpose.msra.mxu0 0
      %1563 = vmatprep.subr.bf16.mxu0 0
      %1564 = vmatpush1.bf16.xpose.msra.mxu0 0
      %1565 = vmatprep.subr.bf16.mxu0 0
      %1566 = vmatpush1.bf16.xpose.msra.mxu0 0
      %1567 = vmatprep.subr.bf16.mxu0 0
      %1568 = vmatpush1.bf16.xpose.msra.mxu0 0
      %1569 = vmatprep.subr.bf16.mxu0 0
      %1570 = vmatpush1.bf16.xpose.msra.mxu0 0
      %1571 = vmatprep.subr.bf16.mxu0 0
      %1572 = vmatpush1.bf16.xpose.msra.mxu0 0
      %1573 = vmatprep.subr.bf16.mxu0 0
      %1574 = vmatpush1.bf16.xpose.msra.mxu0 0
      %1575 = vmatprep.subr.bf16.mxu0 0
      %1576 = vmatpush1.bf16.xpose.msra.mxu0 0
      %1577 = vmatprep.subr.bf16.mxu0 0
      %1578 = vmatpush1.bf16.xpose.msra.mxu0 0
      %1579 = vmatprep.mubr.bf16.mxu0 0
      %1580 = vmatmul.mubr.bf16.gmra.mrb[0].mxu0 %v1542
      %v1581 = vpop.f32.mrb[0].mxu0
      %v1582 = vadd.f32 0.0, %v1581
      %v1583 = vpop.f32.mrb[0].mxu0
      %v1584 = vpop.f32.mrb[0].mxu0
      %v1585 = vpop.f32.mrb[0].mxu0
      %1586 = vdwg.mxu0
      %v1588 = vsel %vm1540, %v1091, 0
      %v1591 = vsel %vm1540, %v1315, 0
      %1593 = vmatprep.subr.bf16.mxu0 0
      %1594 = vmatpush1.bf16.xpose.msra.mxu0 %v1591
      %1595 = vmatprep.subr.bf16.mxu0 0
      %1596 = vmatpush1.bf16.xpose.msra.mxu0 0
      %1597 = vmatprep.subr.bf16.mxu0 0
      %1598 = vmatpush1.bf16.xpose.msra.mxu0 0
      %1599 = vmatprep.subr.bf16.mxu0 0
      %1600 = vmatpush1.bf16.xpose.msra.mxu0 0
      %1601 = vmatprep.subr.bf16.mxu0 0
      %1602 = vmatpush1.bf16.xpose.msra.mxu0 0
      %1603 = vmatprep.subr.bf16.mxu0 0
      %1604 = vmatpush1.bf16.xpose.msra.mxu0 0
      %1605 = vmatprep.subr.bf16.mxu0 0
      %1606 = vmatpush1.bf16.xpose.msra.mxu0 0
      %1607 = vmatprep.subr.bf16.mxu0 0
      %1608 = vmatpush1.bf16.xpose.msra.mxu0 0
      %1609 = vmatprep.subr.bf16.mxu0 0
      %1610 = vmatpush1.bf16.xpose.msra.mxu0 0
      %1611 = vmatprep.subr.bf16.mxu0 0
      %1612 = vmatpush1.bf16.xpose.msra.mxu0 0
      %1613 = vmatprep.subr.bf16.mxu0 0
      %1614 = vmatpush1.bf16.xpose.msra.mxu0 0
      %1615 = vmatprep.subr.bf16.mxu0 0
      %1616 = vmatpush1.bf16.xpose.msra.mxu0 0
      %1617 = vmatprep.subr.bf16.mxu0 0
      %1618 = vmatpush1.bf16.xpose.msra.mxu0 0
      %1619 = vmatprep.subr.bf16.mxu0 0
      %1620 = vmatpush1.bf16.xpose.msra.mxu0 0
      %1621 = vmatprep.subr.bf16.mxu0 0
      %1622 = vmatpush1.bf16.xpose.msra.mxu0 0
      %1623 = vmatprep.subr.bf16.mxu0 0
      %1624 = vmatpush1.bf16.xpose.msra.mxu0 0
      %1625 = vmatprep.mubr.bf16.mxu0 0
      %1626 = vmatmul.mubr.bf16.gmra.mrb[0].mxu0 %v1588
      %v1627 = vpop.f32.mrb[0].mxu0
      %v1628 = vadd.f32 0.0, %v1627
      %v1629 = vpop.f32.mrb[0].mxu0
      %v1630 = vpop.f32.mrb[0].mxu0
      %v1631 = vpop.f32.mrb[0].mxu0
      %1632 = vdwg.mxu0
      %v1633 = vlaneseq
      %v1634 = vand.u32 %v1633, 127
      %vm1635 = vcmp.lt.s32.totalorder %v1634, 5
      %v1636 = vsel %vm1635, 1, 0
      %vm1637 = vcmp.eq.s32.totalorder %v1636, 1
      %v1638 = vsel %vm1637, %v1582, -1e+30
      %v1639 = vsel %vm1637, %v1628, -1e+30
      %vm1640 = vcmask 64512
      %v1641 = vsel %vm1640, %v1638, -inf
      %1642 = vmax.xlane.f32.xlu0 %v1641
      %v1643 = vpop.xlane.xlu0 %1642
      %v1644 = vsel %vm1640, %v1639, -inf
      %1645 = vmax.xlane.f32.xlu0 %v1644
      %v1646 = vpop.xlane.xlu0 %1645
      %v1647 = vsub.f32 %v1638, %v1643
      %v1648 = vsub.f32 %v1639, %v1646
      %v1649 = vmul.f32 %v1647, 1.442695
      %v1650 = vpow.pop %v1649
      %v1651 = vmul.f32 %v1648, 1.442695
      %v1652 = vpow.pop %v1651
      %v1653 = vsel %vm1640, %v1650, 0.0
      %1654 = vadd.xlane.f32.xlu0 %v1653
      %v1655 = vpop.xlane.xlu0 %1654
      %v1656 = vsel %vm1640, %v1652, 0.0
      %1657 = vadd.xlane.f32.xlu0 %v1656
      %v1658 = vpop.xlane.xlu0 %1657
      %v1659 = vrcp.pop %v1655
      %v1660 = vrcp.pop %v1658
      %v1661 = vmul.f32 %v1650, %v1659
      %v1662 = vmul.f32 %v1652, %v1660
      %v1663 = vpack.c.bf16 %v1661, %v1661
      %v1664 = vpack.c.bf16 %v1662, %v1662
      %v1666 = vsel %vm1640, %v1663, 0
      %vm1668 = vcmask 1043456
      %v1670 = vsel %vm1668, %v1538, 0
      %1672 = vmatprep.subr.bf16.mxu0 0
      %1673 = vmatpush1.bf16.msra.mxu0 %v1670
      %1674 = vmatprep.subr.bf16.mxu0 0
      %1675 = vmatpush1.bf16.msra.mxu0 0
      %1676 = vmatprep.subr.bf16.mxu0 0
      %1677 = vmatpush1.bf16.msra.mxu0 0
      %1678 = vmatprep.subr.bf16.mxu0 0
      %1679 = vmatpush1.bf16.msra.mxu0 0
      %1680 = vmatprep.subr.bf16.mxu0 0
      %1681 = vmatpush1.bf16.msra.mxu0 0
      %1682 = vmatprep.subr.bf16.mxu0 0
      %1683 = vmatpush1.bf16.msra.mxu0 0
      %1684 = vmatprep.subr.bf16.mxu0 0
      %1685 = vmatpush1.bf16.msra.mxu0 0
      %1686 = vmatprep.subr.bf16.mxu0 0
      %1687 = vmatpush1.bf16.msra.mxu0 0
      %1688 = vmatprep.subr.bf16.mxu0 0
      %1689 = vmatpush1.bf16.msra.mxu0 0
      %1690 = vmatprep.subr.bf16.mxu0 0
      %1691 = vmatpush1.bf16.msra.mxu0 0
      %1692 = vmatprep.subr.bf16.mxu0 0
      %1693 = vmatpush1.bf16.msra.mxu0 0
      %1694 = vmatprep.subr.bf16.mxu0 0
      %1695 = vmatpush1.bf16.msra.mxu0 0
      %1696 = vmatprep.subr.bf16.mxu0 0
      %1697 = vmatpush1.bf16.msra.mxu0 0
      %1698 = vmatprep.subr.bf16.mxu0 0
      %1699 = vmatpush1.bf16.msra.mxu0 0
      %1700 = vmatprep.subr.bf16.mxu0 0
      %1701 = vmatpush1.bf16.msra.mxu0 0
      %1702 = vmatprep.subr.bf16.mxu0 0
      %1703 = vmatpush1.bf16.msra.mxu0 0
      %1704 = vmatprep.mubr.bf16.mxu0 0
      %1705 = vmatmul.mubr.bf16.gmra.mrb[0].mxu0 %v1666
      %v1706 = vpop.f32.mrb[0].mxu0
      %v1707 = vadd.f32 0.0, %v1706
      %v1708 = vpop.f32.mrb[0].mxu0
      %v1709 = vpop.f32.mrb[0].mxu0
      %v1710 = vpop.f32.mrb[0].mxu0
      %1711 = vdwg.mxu0
      %v1713 = vsel %vm1640, %v1664, 0
      %v1716 = vsel %vm1668, %v1539, 0
      %1718 = vmatprep.subr.bf16.mxu0 0
      %1719 = vmatpush1.bf16.msra.mxu0 %v1716
      %1720 = vmatprep.subr.bf16.mxu0 0
      %1721 = vmatpush1.bf16.msra.mxu0 0
      %1722 = vmatprep.subr.bf16.mxu0 0
      %1723 = vmatpush1.bf16.msra.mxu0 0
      %1724 = vmatprep.subr.bf16.mxu0 0
      %1725 = vmatpush1.bf16.msra.mxu0 0
      %1726 = vmatprep.subr.bf16.mxu0 0
      %1727 = vmatpush1.bf16.msra.mxu0 0
      %1728 = vmatprep.subr.bf16.mxu0 0
      %1729 = vmatpush1.bf16.msra.mxu0 0
      %1730 = vmatprep.subr.bf16.mxu0 0
      %1731 = vmatpush1.bf16.msra.mxu0 0
      %1732 = vmatprep.subr.bf16.mxu0 0
      %1733 = vmatpush1.bf16.msra.mxu0 0
      %1734 = vmatprep.subr.bf16.mxu0 0
      %1735 = vmatpush1.bf16.msra.mxu0 0
      %1736 = vmatprep.subr.bf16.mxu0 0
      %1737 = vmatpush1.bf16.msra.mxu0 0
      %1738 = vmatprep.subr.bf16.mxu0 0
      %1739 = vmatpush1.bf16.msra.mxu0 0
      %1740 = vmatprep.subr.bf16.mxu0 0
      %1741 = vmatpush1.bf16.msra.mxu0 0
      %1742 = vmatprep.subr.bf16.mxu0 0
      %1743 = vmatpush1.bf16.msra.mxu0 0
      %1744 = vmatprep.subr.bf16.mxu0 0
      %1745 = vmatpush1.bf16.msra.mxu0 0
      %1746 = vmatprep.subr.bf16.mxu0 0
      %1747 = vmatpush1.bf16.msra.mxu0 0
      %1748 = vmatprep.subr.bf16.mxu0 0
      %1749 = vmatpush1.bf16.msra.mxu0 0
      %1750 = vmatprep.mubr.bf16.mxu0 0
      %1751 = vmatmul.mubr.bf16.gmra.mrb[0].mxu0 %v1713
      %v1752 = vpop.f32.mrb[0].mxu0
      %v1753 = vadd.f32 0.0, %v1752
      %v1754 = vpop.f32.mrb[0].mxu0
      %v1755 = vpop.f32.mrb[0].mxu0
      %v1756 = vpop.f32.mrb[0].mxu0
      %1757 = vdwg.mxu0
      %v1758 = vpack.c.bf16 %v1707, %v1707
      %v1759 = vpack.c.bf16 %v1753, %v1753
      %1761 = vrot.lane.b32.xlu0 %v1759, 64
      %v1762 = vpop.permute.xlu0 %1761
      %v1765 = vsel %vm1540, %v1758, %v1762
      %v1767 = vld [vmem:[%s797] sm:$0xf]
      %v1768 = vld [vmem:[%s797 + $0x4] sm:$0xf]
      %v1769 = vld [vmem:[%s797 + $0x8] sm:$0xf]
      %v1770 = vld [vmem:[%s797 + $0xc] sm:$0xf]
      %v1771 = vld [vmem:[%s797 + $0x10] sm:$0xf]
      %v1772 = vld [vmem:[%s797 + $0x14] sm:$0xf]
      %v1773 = vld [vmem:[%s797 + $0x18] sm:$0xf]
      %v1774 = vld [vmem:[%s797 + $0x1c] sm:$0xf]
      %v1775 = vld [vmem:[%s797 + $0x20] sm:$0xf]
      %v1776 = vld [vmem:[%s797 + $0x24] sm:$0xf]
      %v1777 = vld [vmem:[%s797 + $0x28] sm:$0xf]
      %v1778 = vld [vmem:[%s797 + $0x2c] sm:$0xf]
      %v1779 = vld [vmem:[%s797 + $0x30] sm:$0xf]
      %v1780 = vld [vmem:[%s797 + $0x34] sm:$0xf]
      %v1781 = vld [vmem:[%s797 + $0x38] sm:$0xf]
      %v1782 = vld [vmem:[%s797 + $0x3c] sm:$0xf]
      %v1799 = vunpack.c.l.b16 %v1767
      %v1800 = vunpack.c.l.b16 %v1768
      %v1801 = vunpack.c.l.b16 %v1769
      %v1802 = vunpack.c.l.b16 %v1770
      %v1803 = vunpack.c.l.b16 %v1771
      %v1804 = vunpack.c.l.b16 %v1772
      %v1805 = vunpack.c.l.b16 %v1773
      %v1806 = vunpack.c.l.b16 %v1774
      %v1807 = vunpack.c.l.b16 %v1775
      %v1808 = vunpack.c.l.b16 %v1776
      %v1809 = vunpack.c.l.b16 %v1777
      %v1810 = vunpack.c.l.b16 %v1778
      %v1811 = vunpack.c.l.b16 %v1779
      %v1812 = vunpack.c.l.b16 %v1780
      %v1813 = vunpack.c.l.b16 %v1781
      %v1814 = vunpack.c.l.b16 %v1782
      %v1815 = vpack.c.b16 %v1800, %v1799
      %v1816 = vpack.c.b16 %v1802, %v1801
      %v1817 = vpack.c.b16 %v1804, %v1803
      %v1818 = vpack.c.b16 %v1806, %v1805
      %v1819 = vpack.c.b16 %v1808, %v1807
      %v1820 = vpack.c.b16 %v1810, %v1809
      %v1821 = vpack.c.b16 %v1812, %v1811
      %v1822 = vpack.c.b16 %v1814, %v1813
      %1831 = vmatprep.subr.bf16.mxu0 0
      %1832 = vmatpush1.bf16.msra.mxu0 %v1815
      %1833 = vmatprep.subr.bf16.mxu0 0
      %1834 = vmatpush1.bf16.msra.mxu0 %v1816
      %1835 = vmatprep.subr.bf16.mxu0 0
      %1836 = vmatpush1.bf16.msra.mxu0 %v1817
      %1837 = vmatprep.subr.bf16.mxu0 0
      %1838 = vmatpush1.bf16.msra.mxu0 %v1818
      %1839 = vmatprep.subr.bf16.mxu0 0
      %1840 = vmatpush1.bf16.msra.mxu0 %v1819
      %1841 = vmatprep.subr.bf16.mxu0 0
      %1842 = vmatpush1.bf16.msra.mxu0 %v1820
      %1843 = vmatprep.subr.bf16.mxu0 0
      %1844 = vmatpush1.bf16.msra.mxu0 %v1821
      %1845 = vmatprep.subr.bf16.mxu0 0
      %1846 = vmatpush1.bf16.msra.mxu0 %v1822
      %1847 = vmatprep.subr.bf16.mxu0 0
      %1848 = vmatpush1.bf16.msra.mxu0 0
      %1849 = vmatprep.subr.bf16.mxu0 0
      %1850 = vmatpush1.bf16.msra.mxu0 0
      %1851 = vmatprep.subr.bf16.mxu0 0
      %1852 = vmatpush1.bf16.msra.mxu0 0
      %1853 = vmatprep.subr.bf16.mxu0 0
      %1854 = vmatpush1.bf16.msra.mxu0 0
      %1855 = vmatprep.subr.bf16.mxu0 0
      %1856 = vmatpush1.bf16.msra.mxu0 0
      %1857 = vmatprep.subr.bf16.mxu0 0
      %1858 = vmatpush1.bf16.msra.mxu0 0
      %1859 = vmatprep.subr.bf16.mxu0 0
      %1860 = vmatpush1.bf16.msra.mxu0 0
      %1861 = vmatprep.subr.bf16.mxu0 0
      %1862 = vmatpush1.bf16.msra.mxu0 0
      %1863 = vmatprep.mubr.bf16.mxu0 0
      %1864 = vmatmul.mubr.bf16.gmra.mrb[0].mxu0 %v1765
      %v1865 = vpop.f32.mrb[0].mxu0
      %v1866 = vadd.f32 0.0, %v1865
      %v1867 = vpop.f32.mrb[0].mxu0
      %v1868 = vpop.f32.mrb[0].mxu0
      %v1869 = vpop.f32.mrb[0].mxu0
      %1870 = vdwg.mxu0
      %v1871 = vadd.f32 %v836, %v1866
      %v1872 = vld [vmem:[%s800] sm:$0x1]
      %v1874 = vlaneseq
      %v1875 = vshrl.u32 %v1874, 7
      %v1876 = vsub.s32 0, %v1875
      %v1877 = vrot.slane %v1872, %v1876
      %v1879 = vadd.f32 %v1871, %v1877
      %1880 = vadd.xlane.f32.xlu0 %v1879
      %v1881 = vpop.xlane.xlu0 %1880
      %v1882 = vmul.f32 %v1881, %v839
      %v1883 = vsub.f32 %v1879, %v1882
      %v1884 = vmul.f32 %v1883, %v1883
      %1885 = vadd.xlane.f32.xlu0 %v1884
      %v1886 = vpop.xlane.xlu0 %1885
      %v1887 = vmul.f32 %v1886, %v839
      %v1888 = vadd.f32 %v1887, 1e-06
      %v1889 = vrsqrt.pop %v1888
      %v1890 = vmul.f32 %v1883, %v1889
      %v1891 = vld [vmem:[%s803] sm:$0x1]
      %v1893 = vlaneseq
      %v1894 = vshrl.u32 %v1893, 7
      %v1895 = vsub.s32 0, %v1894
      %v1896 = vrot.slane %v1891, %v1895
      %v1898 = vmul.f32 %v1890, %v1896
      %v1899 = vld [vmem:[%s806] sm:$0x1]
      %v1901 = vlaneseq
      %v1902 = vshrl.u32 %v1901, 7
      %v1903 = vsub.s32 0, %v1902
      %v1904 = vrot.slane %v1899, %v1903
      %v1906 = vadd.f32 %v1898, %v1904
      %v1907 = vpack.c.bf16 %v1906, %v1906
      %v1908 = vld [vmem:[%s811] sm:$0xff]
      %v1909 = vld [vmem:[%s811 + $0x8] sm:$0xff]
      %v1910 = vld [vmem:[%s811 + $0x10] sm:$0xff]
      %v1911 = vld [vmem:[%s811 + $0x18] sm:$0xff]
      %v1912 = vld [vmem:[%s811 + $0x20] sm:$0xff]
      %v1913 = vld [vmem:[%s811 + $0x28] sm:$0xff]
      %v1914 = vld [vmem:[%s811 + $0x30] sm:$0xff]
      %v1915 = vld [vmem:[%s811 + $0x38] sm:$0xff]
      %v1916 = vld [vmem:[%s811 + $0x40] sm:$0xff]
      %v1917 = vld [vmem:[%s811 + $0x48] sm:$0xff]
      %v1918 = vld [vmem:[%s811 + $0x50] sm:$0xff]
      %v1919 = vld [vmem:[%s811 + $0x58] sm:$0xff]
      %v1920 = vld [vmem:[%s811 + $0x60] sm:$0xff]
      %v1921 = vld [vmem:[%s811 + $0x68] sm:$0xff]
      %v1922 = vld [vmem:[%s811 + $0x70] sm:$0xff]
      %v1923 = vld [vmem:[%s811 + $0x78] sm:$0xff]
      %v1924 = vld [vmem:[%s815] sm:$0x3]
      %v1926 = vlaneseq
      %v1927 = vshrl.u32 %v1926, 7
      %v1928 = vsub.s32 0, %v1927
      %v1929 = vrot.slane %v1924, %v1928
      %v1930 = vlaneseq
      %v1931 = vshrl.u32 %v1930, 7
      %v1932 = vsub.s32 1, %v1931
      %v1933 = vrot.slane %v1924, %v1932
      %v1952 = vunpack.c.l.b16 %v1908
      %v1953 = vunpack.c.h.b16 %v1908
      %v1954 = vunpack.c.l.b16 %v1909
      %v1955 = vunpack.c.h.b16 %v1909
      %v1956 = vunpack.c.l.b16 %v1910
      %v1957 = vunpack.c.h.b16 %v1910
      %v1958 = vunpack.c.l.b16 %v1911
      %v1959 = vunpack.c.h.b16 %v1911
      %v1960 = vunpack.c.l.b16 %v1912
      %v1961 = vunpack.c.h.b16 %v1912
      %v1962 = vunpack.c.l.b16 %v1913
      %v1963 = vunpack.c.h.b16 %v1913
      %v1964 = vunpack.c.l.b16 %v1914
      %v1965 = vunpack.c.h.b16 %v1914
      %v1966 = vunpack.c.l.b16 %v1915
      %v1967 = vunpack.c.h.b16 %v1915
      %v1968 = vunpack.c.l.b16 %v1916
      %v1969 = vunpack.c.h.b16 %v1916
      %v1970 = vunpack.c.l.b16 %v1917
      %v1971 = vunpack.c.h.b16 %v1917
      %v1972 = vunpack.c.l.b16 %v1918
      %v1973 = vunpack.c.h.b16 %v1918
      %v1974 = vunpack.c.l.b16 %v1919
      %v1975 = vunpack.c.h.b16 %v1919
      %v1976 = vunpack.c.l.b16 %v1920
      %v1977 = vunpack.c.h.b16 %v1920
      %v1978 = vunpack.c.l.b16 %v1921
      %v1979 = vunpack.c.h.b16 %v1921
      %v1980 = vunpack.c.l.b16 %v1922
      %v1981 = vunpack.c.h.b16 %v1922
      %v1982 = vunpack.c.l.b16 %v1923
      %v1983 = vunpack.c.h.b16 %v1923
      %v1984 = vpack.c.b16 %v1954, %v1952
      %v1985 = vpack.c.b16 %v1955, %v1953
      %v1986 = vpack.c.b16 %v1958, %v1956
      %v1987 = vpack.c.b16 %v1959, %v1957
      %v1988 = vpack.c.b16 %v1962, %v1960
      %v1989 = vpack.c.b16 %v1963, %v1961
      %v1990 = vpack.c.b16 %v1966, %v1964
      %v1991 = vpack.c.b16 %v1967, %v1965
      %v1992 = vpack.c.b16 %v1970, %v1968
      %v1993 = vpack.c.b16 %v1971, %v1969
      %v1994 = vpack.c.b16 %v1974, %v1972
      %v1995 = vpack.c.b16 %v1975, %v1973
      %v1996 = vpack.c.b16 %v1978, %v1976
      %v1997 = vpack.c.b16 %v1979, %v1977
      %v1998 = vpack.c.b16 %v1982, %v1980
      %v1999 = vpack.c.b16 %v1983, %v1981
      %2016 = vmatprep.subr.bf16.mxu0 %v1985
      %2017 = vmatpush1.bf16.msra.mxu0 %v1984
      %2018 = vmatprep.subr.bf16.mxu0 %v1987
      %2019 = vmatpush1.bf16.msra.mxu0 %v1986
      %2020 = vmatprep.subr.bf16.mxu0 %v1989
      %2021 = vmatpush1.bf16.msra.mxu0 %v1988
      %2022 = vmatprep.subr.bf16.mxu0 %v1991
      %2023 = vmatpush1.bf16.msra.mxu0 %v1990
      %2024 = vmatprep.subr.bf16.mxu0 %v1993
      %2025 = vmatpush1.bf16.msra.mxu0 %v1992
      %2026 = vmatprep.subr.bf16.mxu0 %v1995
      %2027 = vmatpush1.bf16.msra.mxu0 %v1994
      %2028 = vmatprep.subr.bf16.mxu0 %v1997
      %2029 = vmatpush1.bf16.msra.mxu0 %v1996
      %2030 = vmatprep.subr.bf16.mxu0 %v1999
      %2031 = vmatpush1.bf16.msra.mxu0 %v1998
      %2032 = vmatprep.subr.bf16.mxu0 0
      %2033 = vmatpush1.bf16.msra.mxu0 0
      %2034 = vmatprep.subr.bf16.mxu0 0
      %2035 = vmatpush1.bf16.msra.mxu0 0
      %2036 = vmatprep.subr.bf16.mxu0 0
      %2037 = vmatpush1.bf16.msra.mxu0 0
      %2038 = vmatprep.subr.bf16.mxu0 0
      %2039 = vmatpush1.bf16.msra.mxu0 0
      %2040 = vmatprep.subr.bf16.mxu0 0
      %2041 = vmatpush1.bf16.msra.mxu0 0
      %2042 = vmatprep.subr.bf16.mxu0 0
      %2043 = vmatpush1.bf16.msra.mxu0 0
      %2044 = vmatprep.subr.bf16.mxu0 0
      %2045 = vmatpush1.bf16.msra.mxu0 0
      %2046 = vmatprep.subr.bf16.mxu0 0
      %2047 = vmatpush1.bf16.msra.mxu0 0
      %2048 = vmatprep.mubr.bf16.mxu0 0
      %2049 = vmatmul.mubr.bf16.gmra.mrb[0].mxu0 %v1907
      %v2050 = vpop.f32.mrb[0].mxu0
      %v2051 = vadd.f32 %v1929, %v2050
      %v2052 = vpop.f32.mrb[0].mxu0
      %v2053 = vadd.f32 %v1933, %v2052
      %v2054 = vpop.f32.mrb[0].mxu0
      %v2055 = vpop.f32.mrb[0].mxu0
      %2056 = vdwg.mxu0
      %v2057 = vmul.f32 %v2051, 0.5
      %v2058 = vmul.f32 %v2053, 0.5
      %v2059 = vmul.f32 %v2051, 0.70710677
      %v2060 = vmul.f32 %v2053, 0.70710677
      %v2061 = verf.f32.pop %v2059
      %v2062 = verf.f32.pop %v2060
      %v2063 = vadd.f32 %v2061, 1.0
      %v2064 = vadd.f32 %v2062, 1.0
      %v2065 = vmul.f32 %v2057, %v2063
      %v2066 = vmul.f32 %v2058, %v2064
      %v2067 = vpack.c.bf16 %v2065, %v2065
      %v2068 = vpack.c.bf16 %v2066, %v2066
      %v2069 = vld [vmem:[%s820] sm:$0xf]
      %v2070 = vld [vmem:[%s820 + $0x4] sm:$0xf]
      %v2071 = vld [vmem:[%s820 + $0x8] sm:$0xf]
      %v2072 = vld [vmem:[%s820 + $0xc] sm:$0xf]
      %v2073 = vld [vmem:[%s820 + $0x10] sm:$0xf]
      %v2074 = vld [vmem:[%s820 + $0x14] sm:$0xf]
      %v2075 = vld [vmem:[%s820 + $0x18] sm:$0xf]
      %v2076 = vld [vmem:[%s820 + $0x1c] sm:$0xf]
      %v2077 = vld [vmem:[%s820 + $0x20] sm:$0xf]
      %v2078 = vld [vmem:[%s820 + $0x24] sm:$0xf]
      %v2079 = vld [vmem:[%s820 + $0x28] sm:$0xf]
      %v2080 = vld [vmem:[%s820 + $0x2c] sm:$0xf]
      %v2081 = vld [vmem:[%s820 + $0x30] sm:$0xf]
      %v2082 = vld [vmem:[%s820 + $0x34] sm:$0xf]
      %v2083 = vld [vmem:[%s820 + $0x38] sm:$0xf]
      %v2084 = vld [vmem:[%s820 + $0x3c] sm:$0xf]
      %v2085 = vld [vmem:[%s820 + $0x40] sm:$0xf]
      %v2086 = vld [vmem:[%s820 + $0x44] sm:$0xf]
      %v2087 = vld [vmem:[%s820 + $0x48] sm:$0xf]
      %v2088 = vld [vmem:[%s820 + $0x4c] sm:$0xf]
      %v2089 = vld [vmem:[%s820 + $0x50] sm:$0xf]
      %v2090 = vld [vmem:[%s820 + $0x54] sm:$0xf]
      %v2091 = vld [vmem:[%s820 + $0x58] sm:$0xf]
      %v2092 = vld [vmem:[%s820 + $0x5c] sm:$0xf]
      %v2093 = vld [vmem:[%s820 + $0x60] sm:$0xf]
      %v2094 = vld [vmem:[%s820 + $0x64] sm:$0xf]
      %v2095 = vld [vmem:[%s820 + $0x68] sm:$0xf]
      %v2096 = vld [vmem:[%s820 + $0x6c] sm:$0xf]
      %v2097 = vld [vmem:[%s820 + $0x70] sm:$0xf]
      %v2098 = vld [vmem:[%s820 + $0x74] sm:$0xf]
      %v2099 = vld [vmem:[%s820 + $0x78] sm:$0xf]
      %v2100 = vld [vmem:[%s820 + $0x7c] sm:$0xf]
      %v2133 = vunpack.c.l.b16 %v2069
      %v2134 = vunpack.c.l.b16 %v2070
      %v2135 = vunpack.c.l.b16 %v2071
      %v2136 = vunpack.c.l.b16 %v2072
      %v2137 = vunpack.c.l.b16 %v2073
      %v2138 = vunpack.c.l.b16 %v2074
      %v2139 = vunpack.c.l.b16 %v2075
      %v2140 = vunpack.c.l.b16 %v2076
      %v2141 = vunpack.c.l.b16 %v2077
      %v2142 = vunpack.c.l.b16 %v2078
      %v2143 = vunpack.c.l.b16 %v2079
      %v2144 = vunpack.c.l.b16 %v2080
      %v2145 = vunpack.c.l.b16 %v2081
      %v2146 = vunpack.c.l.b16 %v2082
      %v2147 = vunpack.c.l.b16 %v2083
      %v2148 = vunpack.c.l.b16 %v2084
      %v2149 = vunpack.c.l.b16 %v2085
      %v2150 = vunpack.c.l.b16 %v2086
      %v2151 = vunpack.c.l.b16 %v2087
      %v2152 = vunpack.c.l.b16 %v2088
      %v2153 = vunpack.c.l.b16 %v2089
      %v2154 = vunpack.c.l.b16 %v2090
      %v2155 = vunpack.c.l.b16 %v2091
      %v2156 = vunpack.c.l.b16 %v2092
      %v2157 = vunpack.c.l.b16 %v2093
      %v2158 = vunpack.c.l.b16 %v2094
      %v2159 = vunpack.c.l.b16 %v2095
      %v2160 = vunpack.c.l.b16 %v2096
      %v2161 = vunpack.c.l.b16 %v2097
      %v2162 = vunpack.c.l.b16 %v2098
      %v2163 = vunpack.c.l.b16 %v2099
      %v2164 = vunpack.c.l.b16 %v2100
      %v2165 = vpack.c.b16 %v2134, %v2133
      %v2166 = vpack.c.b16 %v2136, %v2135
      %v2167 = vpack.c.b16 %v2138, %v2137
      %v2168 = vpack.c.b16 %v2140, %v2139
      %v2169 = vpack.c.b16 %v2142, %v2141
      %v2170 = vpack.c.b16 %v2144, %v2143
      %v2171 = vpack.c.b16 %v2146, %v2145
      %v2172 = vpack.c.b16 %v2148, %v2147
      %v2173 = vpack.c.b16 %v2150, %v2149
      %v2174 = vpack.c.b16 %v2152, %v2151
      %v2175 = vpack.c.b16 %v2154, %v2153
      %v2176 = vpack.c.b16 %v2156, %v2155
      %v2177 = vpack.c.b16 %v2158, %v2157
      %v2178 = vpack.c.b16 %v2160, %v2159
      %v2179 = vpack.c.b16 %v2162, %v2161
      %v2180 = vpack.c.b16 %v2164, %v2163
      %2197 = vmatprep.subr.bf16.mxu0 0
      %2198 = vmatpush1.bf16.msra.mxu0 %v2165
      %2199 = vmatprep.subr.bf16.mxu0 0
      %2200 = vmatpush1.bf16.msra.mxu0 %v2166
      %2201 = vmatprep.subr.bf16.mxu0 0
      %2202 = vmatpush1.bf16.msra.mxu0 %v2167
      %2203 = vmatprep.subr.bf16.mxu0 0
      %2204 = vmatpush1.bf16.msra.mxu0 %v2168
      %2205 = vmatprep.subr.bf16.mxu0 0
      %2206 = vmatpush1.bf16.msra.mxu0 %v2169
      %2207 = vmatprep.subr.bf16.mxu0 0
      %2208 = vmatpush1.bf16.msra.mxu0 %v2170
      %2209 = vmatprep.subr.bf16.mxu0 0
      %2210 = vmatpush1.bf16.msra.mxu0 %v2171
      %2211 = vmatprep.subr.bf16.mxu0 0
      %2212 = vmatpush1.bf16.msra.mxu0 %v2172
      %2213 = vmatprep.subr.bf16.mxu0 0
      %2214 = vmatpush1.bf16.msra.mxu0 %v2173
      %2215 = vmatprep.subr.bf16.mxu0 0
      %2216 = vmatpush1.bf16.msra.mxu0 %v2174
      %2217 = vmatprep.subr.bf16.mxu0 0
      %2218 = vmatpush1.bf16.msra.mxu0 %v2175
      %2219 = vmatprep.subr.bf16.mxu0 0
      %2220 = vmatpush1.bf16.msra.mxu0 %v2176
      %2221 = vmatprep.subr.bf16.mxu0 0
      %2222 = vmatpush1.bf16.msra.mxu0 %v2177
      %2223 = vmatprep.subr.bf16.mxu0 0
      %2224 = vmatpush1.bf16.msra.mxu0 %v2178
      %2225 = vmatprep.subr.bf16.mxu0 0
      %2226 = vmatpush1.bf16.msra.mxu0 %v2179
      %2227 = vmatprep.subr.bf16.mxu0 0
      %2228 = vmatpush1.bf16.msra.mxu0 %v2180
      %2229 = vmatprep.mubr.bf16.mxu0 %v2068
      %2230 = vmatmul.mubr.bf16.gmra.mrb[0].mxu0 %v2067
      %v2231 = vpop.f32.mrb[0].mxu0
      %v2232 = vadd.f32 0.0, %v2231
      %v2233 = vpop.f32.mrb[0].mxu0
      %v2234 = vpop.f32.mrb[0].mxu0
      %v2235 = vpop.f32.mrb[0].mxu0
      %2236 = vdwg.mxu0
      %v2237 = vadd.f32 %v1879, %v2232
      %v2238 = vld [vmem:[%s823] sm:$0x1]
      %v2240 = vlaneseq
      %v2241 = vshrl.u32 %v2240, 7
      %v2242 = vsub.s32 0, %v2241
      %v2243 = vrot.slane %v2238, %v2242
      %v2245 = vadd.f32 %v2237, %v2243
      %2246 = vst [vmem:[#allocation2] sm:$0xff] %v2245
      %p2247 = scmp.eq.s32.totalorder %s33, 1
      // Predicated region
      $region93: #{vit_relu_forward.4} parent=87 // pred_check
        %p2248 = pneg %p2247
      $region94: #{vit_relu_forward.4} parent=87 // pred_check_branch
        %2250 = sbr.rel (%p2248) target = $region96
      $region95: #{vit_relu_forward.4} parent=87 // pred_region
        %v2251 = vpack.c.bf16 %v2245, %v2245
        %2252 = vst [vmem:[%s827] sm:$0xf] %v2251
      $region96: #{vit_relu_forward.4} parent=87 // pred_fallthru
        _
      %p2253 = scmp.lt.s32.totalorder %s32, 1
      %s2254 = scalar_select %p2253, %s32, 1
      %s2255 = smul.addr %s2254, 4
      %s2256 = scalar_lea.vmem %s17, %s2255
      // Predicated region
      $region97: #{vit_relu_forward.4} parent=87 // pred_check
        %p2257 = pneg %p500
      $region98: #{vit_relu_forward.4} parent=87 // pred_check_branch
        %2259 = sbr.rel (%p2257) target = $region100
      $region99: #{vit_relu_forward.4} parent=87 // pred_region
        _
      $region100: #{vit_relu_forward.4} parent=87 // pred_fallthru
        _
    $region88: #{vit_relu_forward.4} parent=5 // pred_fallthru
      _
    %p2260 = scmp.le.s32.totalorder 2, %s23
    // Predicated region
    $region101: #{vit_relu_forward.4} parent=5 // pred_check
      %p2261 = pneg %p2260
    $region102: #{vit_relu_forward.4} parent=5 // pred_check_branch
      %2263 = sbr.rel (%p2261) target = $region104
    $region103: #{vit_relu_forward.4} parent=5 // pred_region
      %s2264 = ssub.s32 %s23, 2
      // Predicated region
      $region105: #{vit_relu_forward.4} parent=103 // pred_check
        %p2265 = pneg %p506
      $region106: #{vit_relu_forward.4} parent=103 // pred_check_branch
        %2267 = sbr.rel (%p2265) target = $region108
      $region107: #{vit_relu_forward.4} parent=103 // pred_region
        %p2268 = scmp.lt.s32.totalorder %s34, 1
        %s2269 = scalar_select %p2268, %s34, 1
        %s2270 = smul.addr %s2269, 4
        %s2271 = scalar_lea.vmem %s17, %s2270
      $region108: #{vit_relu_forward.4} parent=103 // pred_fallthru
        _
    $region104: #{vit_relu_forward.4} parent=5 // pred_fallthru
      _
  $region6: #{vit_relu_forward.4} parent=0 // loop_footer
    %s27 = sadd.s32 1, %s23
  $region7: #{vit_relu_forward.4} parent=0 // loop_footer_branch
    %22 = sbr.rel target = $region3
  $region8: #{vit_relu_forward.4} parent=0 // loop_exit
    _

</llo_original>
